<compile_context>
chip_gen: v7x
topology: tpu7x:2x2x1
jax: 0.10.0
libtpu: 0.0.40
codegen_flags: <defaults>
</compile_context>

<pallas_src>
import functools

import numpy as np
import jax
import jax.numpy as jnp
from jax.experimental import pallas as pl
from jax.experimental.pallas import tpu as pltpu


def _spatial_attention_kernel(x_ref, mask_ref, w_ref, b_ref, o_ref,
                              *, C, H, W, K, PAD, TB):
    # x_ref:    (TB, C, H*W)   VMEM  lane-dense input view
    # mask_ref: (2*K, H*W)     VMEM  rows 0..K-1: row-validity masks (per kh)
    #                                rows K..2K-1: col-validity masks (per kw)
    # w_ref:    (2*K*K,)       SMEM  flattened conv weight (OIHW, O=1)
    # b_ref:    (1,)           SMEM  conv bias
    # o_ref:    (TB, H*W)      VMEM  lane-dense output block
    HW = H * W
    G = 8  # channel group size: sublane-aligned reads + in-vreg reduce

    # ---- fused channel max / mean: single pass over C, 8-channel groups ----
    n_full = C // G
    rem = C - n_full * G

    def group_stats(c0):
        chunk = x_ref[:, pl.ds(c0, G), :].astype(jnp.float32)   # (TB, G, HW)
        return jnp.max(chunk, axis=1), jnp.sum(chunk, axis=1)

    if n_full >= 1:
        max_map, sum_map = group_stats(0)
        if n_full <= 16:
            for g in range(1, n_full):
                m, s = group_stats(g * G)
                max_map = jnp.maximum(max_map, m)
                sum_map = sum_map + s
        else:
            def body(g, carry):
                m0, s0 = carry
                m, s = group_stats(pl.multiple_of(g * G, G))
                return jnp.maximum(m0, m), s0 + s
            max_map, sum_map = jax.lax.fori_loop(1, n_full, body,
                                                 (max_map, sum_map))
        if rem:
            tail = x_ref[:, n_full * G:C, :].astype(jnp.float32)
            max_map = jnp.maximum(max_map, jnp.max(tail, axis=1))
            sum_map = sum_map + jnp.sum(tail, axis=1)
    else:
        tail = x_ref[:, 0:C, :].astype(jnp.float32)              # (TB, C, HW)
        max_map = jnp.max(tail, axis=1)
        sum_map = jnp.sum(tail, axis=1)

    avg_map = sum_map * jnp.float32(1.0 / C)

    # ---- KxK "same" conv fully in flat space: lane rolls + masked FMAs -----
    # Tap (kh, kw), dh = kh-PAD, dw = kw-PAD:
    #   out[h*W + w] += weight * in[(h+dh)*W + (w+dw)]          (if in-bounds)
    # The shifted plane is a lane roll by -(dh*W + dw); out-of-bounds (and
    # wrapped) positions are killed by the precomputed 0/1 mask, into which
    # the scalar weight is folded so each plane-tap is one mul + one add.
    acc_m = jnp.zeros((TB, HW), jnp.float32)
    acc_a = jnp.zeros((TB, HW), jnp.float32)
    for kh in range(K):
        dh = kh - PAD
        rmask = mask_ref[kh:kh + 1, :]                           # (1, HW)
        for kw in range(K):
            dw = kw - PAD
            cmask = mask_ref[K + kw:K + kw + 1, :]               # (1, HW)
            mask = rmask * cmask
            coeff_m = mask * w_ref[0 * K * K + kh * K + kw]      # weight[0,0,kh,kw]
            coeff_a = mask * w_ref[1 * K * K + kh * K + kw]      # weight[0,1,kh,kw]
            shift = (-(dh * W + dw)) % HW                        # static roll amount
            if shift:
                rolled_m = pltpu.roll(max_map, shift=shift, axis=1)
                rolled_a = pltpu.roll(avg_map, shift=shift, axis=1)
            else:
                rolled_m, rolled_a = max_map, avg_map
            acc_m = acc_m + rolled_m * coeff_m
            acc_a = acc_a + rolled_a * coeff_a

    out = jax.nn.sigmoid(acc_m + acc_a + b_ref[0])
    o_ref[...] = out.astype(o_ref.dtype)                         # dense unmasked store


def _tpu_device_kind():
    try:
        d = jax.devices()[0]
        if d.platform != "tpu":
            return ""
        return (d.device_kind or "").lower()
    except Exception:
        return ""


def _pick_batch_tile(B, C, HW, in_itemsize, out_itemsize, kind):
    """Largest divisor of B whose per-step working set fits a chip-aware VMEM
    budget.  The B//2 cap (>= 2 grid steps for the parallel batch axis) is
    only applied on chips with two TensorCores; on single-TC v5e/v6e it would
    just double the ~0.35us per-step overhead."""
    two_tc = ("v7" in kind) or ("v4" in kind) or ("v5p" in kind)
    # Bytes per image: double-buffered input block + ~8 live f32 working maps
    # (max/avg/acc/rolled) + double-buffered output block.
    per_image = HW * (2 * C * in_itemsize + 8 * 4 + 2 * out_itemsize)
    budget = (20 if "v7" in kind else 24) * 1024 * 1024
    cap = max(1, budget // max(1, per_image))
    if two_tc and B > 1:
        cap = min(cap, max(1, B // 2))
    tb = 1
    for d in range(1, B + 1):
        if B % d == 0 and d <= cap:
            tb = d
    return tb


def spatial_attention_2d(x, weight, bias):
    """x: (B, C, H, W); weight: (1, 2, K, K); bias: (1,). Returns (B, 1, H, W)."""
    B, C, H, W = x.shape
    K = weight.shape[-1]
    pad = K // 2
    HW = H * W

    kind = _tpu_device_kind()
    TB = _pick_batch_tile(B, C, HW, x.dtype.itemsize, x.dtype.itemsize, kind)
    vmem_limit = (48 << 20) if "v7" in kind else (64 << 20)

    x_flat = x.reshape(B, C, HW)                        # free collapse of trailing dims
    w_flat = weight.reshape(-1).astype(jnp.float32)     # (2*K*K,)
    b_flat = bias.reshape(-1).astype(jnp.float32)       # (1,)

    # Compile-time 0/1 validity masks of the "same" zero padding, flat layout.
    hh = np.arange(HW, dtype=np.int64) // W
    ww = np.arange(HW, dtype=np.int64) % W
    masks_np = np.empty((2 * K, HW), dtype=np.float32)
    for t in range(K):
        d = t - pad
        masks_np[t] = ((hh + d >= 0) & (hh + d < H)).astype(np.float32)
        masks_np[K + t] = ((ww + d >= 0) & (ww + d < W)).astype(np.float32)
    masks = jnp.asarray(masks_np)

    kernel = functools.partial(_spatial_attention_kernel,
                               C=C, H=H, W=W, K=K, PAD=pad, TB=TB)

    cost = pl.CostEstimate(
        flops=int(2 * B * C * HW + 4 * K * K * B * HW),
        transcendentals=int(B * HW),
        bytes_accessed=int(B * C * HW * x.dtype.itemsize
                           + B * HW * x.dtype.itemsize
                           + masks.size * 4 + w_flat.size * 4 + 4),
    )

    out_flat = pl.pallas_call(
        kernel,
        out_shape=jax.ShapeDtypeStruct((B, HW), x.dtype),
        grid=(B // TB,),
        in_specs=[
            pl.BlockSpec((TB, C, HW), lambda b: (b, 0, 0)),
            pl.BlockSpec((2 * K, HW), lambda b: (0, 0)),   # constant block -> fetched once
            pl.BlockSpec(memory_space=pltpu.SMEM),         # conv weights (scalars)
            pl.BlockSpec(memory_space=pltpu.SMEM),         # conv bias (scalar)
        ],
        out_specs=pl.BlockSpec((TB, HW), lambda b: (b, 0)),
        compiler_params=pltpu.CompilerParams(
            dimension_semantics=("parallel",),
            vmem_limit_bytes=vmem_limit,
        ),
        cost_estimate=cost,
    )(x_flat, masks, w_flat, b_flat)

    return out_flat.reshape(B, 1, H, W)


def _reference(x, weight, bias):
    """Pure-JAX reference mirroring the PyTorch forward (unsqueeze=False)."""
    max_map = jnp.max(x, axis=1, keepdims=True)
    avg_map = jnp.mean(x, axis=1, keepdims=True)
    r = jnp.concatenate([max_map, avg_map], axis=1)
    pad = weight.shape[-1] // 2
    out = jax.lax.conv_general_dilated(
        r, weight, window_strides=(1, 1),
        padding=[(pad, pad), (pad, pad)],
        dimension_numbers=("NCHW", "OIHW", "NCHW"),
    )
    return jax.nn.sigmoid(out + bias.reshape(1, -1, 1, 1))


if __name__ == "__main__":
    key = jax.random.PRNGKey(0)
    k_x, k_w, k_b = jax.random.split(key, 3)

    B, C, H, W = 2, 4, 16, 16
    K = 7

    x = jax.random.normal(k_x, (B, C, H, W), dtype=jnp.float32)

    # Deterministic conv parameter init (PyTorch-style uniform, fan_in = 2*K*K).
    fan_in = 2 * K * K
    bound = 1.0 / (fan_in ** 0.5)
    weight = jax.random.uniform(k_w, (1, 2, K, K), jnp.float32, -bound, bound)
    bias = jax.random.uniform(k_b, (1,), jnp.float32, -bound, bound)

    out = jax.block_until_ready(spatial_attention_2d(x, weight, bias))

    ref = _reference(x, weight, bias)
    assert out.shape == (B, 1, H, W)
    assert jnp.allclose(out, ref, atol=1e-5, rtol=1e-5), "mismatch vs reference"

    print("KERNEL_OK")
</pallas_src>

<mosaic_0001>
module attributes {stable_mosaic.version = 11 : i64} {
  func.func @_spatial_attention_kernel(%arg0: i32, %arg1: memref<2x4x256xf32, #tpu.memory_space<vmem>>, %arg2: memref<14x256xf32, #tpu.memory_space<vmem>>, %arg3: memref<98xf32, #tpu.memory_space<smem>>, %arg4: memref<1xf32, #tpu.memory_space<smem>>, %arg5: memref<2x256xf32, #tpu.memory_space<vmem>>) attributes {dimension_semantics = [#tpu.dimension_semantics<parallel>], iteration_bounds = array<i64: 1>, scalar_prefetch = 0 : i64, scratch_operands = 0 : i64, tpu.core_type = #tpu.core_type<tc>, window_params = [{transform_indices = @transform_0, window_bounds = array<i64: 2, 4, 256>}, {pipeline_mode = #tpu.pipeline_mode<synchronous>, transform_indices = @transform_1, window_bounds = array<i64: 14, 256>}, {transform_indices = @transform_2, window_bounds = array<i64: 98>}, {transform_indices = @transform_3, window_bounds = array<i64: 1>}, {transform_indices = @transform_4, window_bounds = array<i64: 2, 256>}]} {
    %c0 = arith.constant 0 : index
    %c0_0 = arith.constant 0 : index
    %c0_1 = arith.constant 0 : index
    %0 = vector.load %arg1[%c0, %c0_0, %c0_1] : memref<2x4x256xf32, #tpu.memory_space<vmem>>, vector<2x4x256xf32>
    %cst = arith.constant dense<0xFF800000> : vector<2x256xf32>
    %1 = vector.multi_reduction <maximumf>, %0, %cst [1] : vector<2x4x256xf32> to vector<2x256xf32>
    %cst_2 = arith.constant dense<0.000000e+00> : vector<2x256xf32>
    %2 = vector.multi_reduction <add>, %0, %cst_2 [1] : vector<2x4x256xf32> to vector<2x256xf32>
    %cst_3 = arith.constant 2.500000e-01 : f32
    %3 = vector.broadcast %cst_3 : f32 to vector<2x256xf32>
    %4 = arith.mulf %2, %3 : vector<2x256xf32>
    %cst_4 = arith.constant 0.000000e+00 : f32
    %5 = vector.broadcast %cst_4 : f32 to vector<2x256xf32>
    %cst_5 = arith.constant 0.000000e+00 : f32
    %6 = vector.broadcast %cst_5 : f32 to vector<2x256xf32>
    %c0_6 = arith.constant 0 : index
    %c0_7 = arith.constant 0 : index
    %7 = vector.load %arg2[%c0_6, %c0_7] : memref<14x256xf32, #tpu.memory_space<vmem>>, vector<1x256xf32>
    %c7 = arith.constant 7 : index
    %c0_8 = arith.constant 0 : index
    %8 = vector.load %arg2[%c7, %c0_8] : memref<14x256xf32, #tpu.memory_space<vmem>>, vector<1x256xf32>
    %9 = arith.mulf %7, %8 : vector<1x256xf32>
    %c0_9 = arith.constant 0 : index
    %10 = memref.load %arg3[%c0_9] : memref<98xf32, #tpu.memory_space<smem>>
    %11 = vector.broadcast %10 : f32 to vector<1x256xf32>
    %12 = arith.mulf %9, %11 : vector<1x256xf32>
    %c49 = arith.constant 49 : index
    %13 = memref.load %arg3[%c49] : memref<98xf32, #tpu.memory_space<smem>>
    %14 = vector.broadcast %13 : f32 to vector<1x256xf32>
    %15 = arith.mulf %9, %14 : vector<1x256xf32>
    %c51_i32 = arith.constant 51 : i32
    %16 = tpu.dynamic_rotate %1 by %c51_i32 dim 1 : vector<2x256xf32>, i32 -> vector<2x256xf32>
    %c51_i32_10 = arith.constant 51 : i32
    %17 = tpu.dynamic_rotate %4 by %c51_i32_10 dim 1 : vector<2x256xf32>, i32 -> vector<2x256xf32>
    %18 = vector.broadcast %12 : vector<1x256xf32> to vector<2x256xf32>
    %19 = arith.mulf %16, %18 : vector<2x256xf32>
    %20 = arith.addf %5, %19 : vector<2x256xf32>
    %21 = vector.broadcast %15 : vector<1x256xf32> to vector<2x256xf32>
    %22 = arith.mulf %17, %21 : vector<2x256xf32>
    %23 = arith.addf %6, %22 : vector<2x256xf32>
    %c8 = arith.constant 8 : index
    %c0_11 = arith.constant 0 : index
    %24 = vector.load %arg2[%c8, %c0_11] : memref<14x256xf32, #tpu.memory_space<vmem>>, vector<1x256xf32>
    %25 = arith.mulf %7, %24 : vector<1x256xf32>
    %c1 = arith.constant 1 : index
    %26 = memref.load %arg3[%c1] : memref<98xf32, #tpu.memory_space<smem>>
    %27 = vector.broadcast %26 : f32 to vector<1x256xf32>
    %28 = arith.mulf %25, %27 : vector<1x256xf32>
    %c50 = arith.constant 50 : index
    %29 = memref.load %arg3[%c50] : memref<98xf32, #tpu.memory_space<smem>>
    %30 = vector.broadcast %29 : f32 to vector<1x256xf32>
    %31 = arith.mulf %25, %30 : vector<1x256xf32>
    %c50_i32 = arith.constant 50 : i32
    %32 = tpu.dynamic_rotate %1 by %c50_i32 dim 1 : vector<2x256xf32>, i32 -> vector<2x256xf32>
    %c50_i32_12 = arith.constant 50 : i32
    %33 = tpu.dynamic_rotate %4 by %c50_i32_12 dim 1 : vector<2x256xf32>, i32 -> vector<2x256xf32>
    %34 = vector.broadcast %28 : vector<1x256xf32> to vector<2x256xf32>
    %35 = arith.mulf %32, %34 : vector<2x256xf32>
    %36 = arith.addf %20, %35 : vector<2x256xf32>
    %37 = vector.broadcast %31 : vector<1x256xf32> to vector<2x256xf32>
    %38 = arith.mulf %33, %37 : vector<2x256xf32>
    %39 = arith.addf %23, %38 : vector<2x256xf32>
    %c9 = arith.constant 9 : index
    %c0_13 = arith.constant 0 : index
    %40 = vector.load %arg2[%c9, %c0_13] : memref<14x256xf32, #tpu.memory_space<vmem>>, vector<1x256xf32>
    %41 = arith.mulf %7, %40 : vector<1x256xf32>
    %c2 = arith.constant 2 : index
    %42 = memref.load %arg3[%c2] : memref<98xf32, #tpu.memory_space<smem>>
    %43 = vector.broadcast %42 : f32 to vector<1x256xf32>
    %44 = arith.mulf %41, %43 : vector<1x256xf32>
    %c51 = arith.constant 51 : index
    %45 = memref.load %arg3[%c51] : memref<98xf32, #tpu.memory_space<smem>>
    %46 = vector.broadcast %45 : f32 to vector<1x256xf32>
    %47 = arith.mulf %41, %46 : vector<1x256xf32>
    %c49_i32 = arith.constant 49 : i32
    %48 = tpu.dynamic_rotate %1 by %c49_i32 dim 1 : vector<2x256xf32>, i32 -> vector<2x256xf32>
    %c49_i32_14 = arith.constant 49 : i32
    %49 = tpu.dynamic_rotate %4 by %c49_i32_14 dim 1 : vector<2x256xf32>, i32 -> vector<2x256xf32>
    %50 = vector.broadcast %44 : vector<1x256xf32> to vector<2x256xf32>
    %51 = arith.mulf %48, %50 : vector<2x256xf32>
    %52 = arith.addf %36, %51 : vector<2x256xf32>
    %53 = vector.broadcast %47 : vector<1x256xf32> to vector<2x256xf32>
    %54 = arith.mulf %49, %53 : vector<2x256xf32>
    %55 = arith.addf %39, %54 : vector<2x256xf32>
    %c10 = arith.constant 10 : index
    %c0_15 = arith.constant 0 : index
    %56 = vector.load %arg2[%c10, %c0_15] : memref<14x256xf32, #tpu.memory_space<vmem>>, vector<1x256xf32>
    %57 = arith.mulf %7, %56 : vector<1x256xf32>
    %c3 = arith.constant 3 : index
    %58 = memref.load %arg3[%c3] : memref<98xf32, #tpu.memory_space<smem>>
    %59 = vector.broadcast %58 : f32 to vector<1x256xf32>
    %60 = arith.mulf %57, %59 : vector<1x256xf32>
    %c52 = arith.constant 52 : index
    %61 = memref.load %arg3[%c52] : memref<98xf32, #tpu.memory_space<smem>>
    %62 = vector.broadcast %61 : f32 to vector<1x256xf32>
    %63 = arith.mulf %57, %62 : vector<1x256xf32>
    %c48_i32 = arith.constant 48 : i32
    %64 = tpu.dynamic_rotate %1 by %c48_i32 dim 1 : vector<2x256xf32>, i32 -> vector<2x256xf32>
    %c48_i32_16 = arith.constant 48 : i32
    %65 = tpu.dynamic_rotate %4 by %c48_i32_16 dim 1 : vector<2x256xf32>, i32 -> vector<2x256xf32>
    %66 = vector.broadcast %60 : vector<1x256xf32> to vector<2x256xf32>
    %67 = arith.mulf %64, %66 : vector<2x256xf32>
    %68 = arith.addf %52, %67 : vector<2x256xf32>
    %69 = vector.broadcast %63 : vector<1x256xf32> to vector<2x256xf32>
    %70 = arith.mulf %65, %69 : vector<2x256xf32>
    %71 = arith.addf %55, %70 : vector<2x256xf32>
    %c11 = arith.constant 11 : index
    %c0_17 = arith.constant 0 : index
    %72 = vector.load %arg2[%c11, %c0_17] : memref<14x256xf32, #tpu.memory_space<vmem>>, vector<1x256xf32>
    %73 = arith.mulf %7, %72 : vector<1x256xf32>
    %c4 = arith.constant 4 : index
    %74 = memref.load %arg3[%c4] : memref<98xf32, #tpu.memory_space<smem>>
    %75 = vector.broadcast %74 : f32 to vector<1x256xf32>
    %76 = arith.mulf %73, %75 : vector<1x256xf32>
    %c53 = arith.constant 53 : index
    %77 = memref.load %arg3[%c53] : memref<98xf32, #tpu.memory_space<smem>>
    %78 = vector.broadcast %77 : f32 to vector<1x256xf32>
    %79 = arith.mulf %73, %78 : vector<1x256xf32>
    %c47_i32 = arith.constant 47 : i32
    %80 = tpu.dynamic_rotate %1 by %c47_i32 dim 1 : vector<2x256xf32>, i32 -> vector<2x256xf32>
    %c47_i32_18 = arith.constant 47 : i32
    %81 = tpu.dynamic_rotate %4 by %c47_i32_18 dim 1 : vector<2x256xf32>, i32 -> vector<2x256xf32>
    %82 = vector.broadcast %76 : vector<1x256xf32> to vector<2x256xf32>
    %83 = arith.mulf %80, %82 : vector<2x256xf32>
    %84 = arith.addf %68, %83 : vector<2x256xf32>
    %85 = vector.broadcast %79 : vector<1x256xf32> to vector<2x256xf32>
    %86 = arith.mulf %81, %85 : vector<2x256xf32>
    %87 = arith.addf %71, %86 : vector<2x256xf32>
    %c12 = arith.constant 12 : index
    %c0_19 = arith.constant 0 : index
    %88 = vector.load %arg2[%c12, %c0_19] : memref<14x256xf32, #tpu.memory_space<vmem>>, vector<1x256xf32>
    %89 = arith.mulf %7, %88 : vector<1x256xf32>
    %c5 = arith.constant 5 : index
    %90 = memref.load %arg3[%c5] : memref<98xf32, #tpu.memory_space<smem>>
    %91 = vector.broadcast %90 : f32 to vector<1x256xf32>
    %92 = arith.mulf %89, %91 : vector<1x256xf32>
    %c54 = arith.constant 54 : index
    %93 = memref.load %arg3[%c54] : memref<98xf32, #tpu.memory_space<smem>>
    %94 = vector.broadcast %93 : f32 to vector<1x256xf32>
    %95 = arith.mulf %89, %94 : vector<1x256xf32>
    %c46_i32 = arith.constant 46 : i32
    %96 = tpu.dynamic_rotate %1 by %c46_i32 dim 1 : vector<2x256xf32>, i32 -> vector<2x256xf32>
    %c46_i32_20 = arith.constant 46 : i32
    %97 = tpu.dynamic_rotate %4 by %c46_i32_20 dim 1 : vector<2x256xf32>, i32 -> vector<2x256xf32>
    %98 = vector.broadcast %92 : vector<1x256xf32> to vector<2x256xf32>
    %99 = arith.mulf %96, %98 : vector<2x256xf32>
    %100 = arith.addf %84, %99 : vector<2x256xf32>
    %101 = vector.broadcast %95 : vector<1x256xf32> to vector<2x256xf32>
    %102 = arith.mulf %97, %101 : vector<2x256xf32>
    %103 = arith.addf %87, %102 : vector<2x256xf32>
    %c13 = arith.constant 13 : index
    %c0_21 = arith.constant 0 : index
    %104 = vector.load %arg2[%c13, %c0_21] : memref<14x256xf32, #tpu.memory_space<vmem>>, vector<1x256xf32>
    %105 = arith.mulf %7, %104 : vector<1x256xf32>
    %c6 = arith.constant 6 : index
    %106 = memref.load %arg3[%c6] : memref<98xf32, #tpu.memory_space<smem>>
    %107 = vector.broadcast %106 : f32 to vector<1x256xf32>
    %108 = arith.mulf %105, %107 : vector<1x256xf32>
    %c55 = arith.constant 55 : index
    %109 = memref.load %arg3[%c55] : memref<98xf32, #tpu.memory_space<smem>>
    %110 = vector.broadcast %109 : f32 to vector<1x256xf32>
    %111 = arith.mulf %105, %110 : vector<1x256xf32>
    %c45_i32 = arith.constant 45 : i32
    %112 = tpu.dynamic_rotate %1 by %c45_i32 dim 1 : vector<2x256xf32>, i32 -> vector<2x256xf32>
    %c45_i32_22 = arith.constant 45 : i32
    %113 = tpu.dynamic_rotate %4 by %c45_i32_22 dim 1 : vector<2x256xf32>, i32 -> vector<2x256xf32>
    %114 = vector.broadcast %108 : vector<1x256xf32> to vector<2x256xf32>
    %115 = arith.mulf %112, %114 : vector<2x256xf32>
    %116 = arith.addf %100, %115 : vector<2x256xf32>
    %117 = vector.broadcast %111 : vector<1x256xf32> to vector<2x256xf32>
    %118 = arith.mulf %113, %117 : vector<2x256xf32>
    %119 = arith.addf %103, %118 : vector<2x256xf32>
    %c1_23 = arith.constant 1 : index
    %c0_24 = arith.constant 0 : index
    %120 = vector.load %arg2[%c1_23, %c0_24] : memref<14x256xf32, #tpu.memory_space<vmem>>, vector<1x256xf32>
    %c7_25 = arith.constant 7 : index
    %c0_26 = arith.constant 0 : index
    %121 = vector.load %arg2[%c7_25, %c0_26] : memref<14x256xf32, #tpu.memory_space<vmem>>, vector<1x256xf32>
    %122 = arith.mulf %120, %121 : vector<1x256xf32>
    %c7_27 = arith.constant 7 : index
    %123 = memref.load %arg3[%c7_27] : memref<98xf32, #tpu.memory_space<smem>>
    %124 = vector.broadcast %123 : f32 to vector<1x256xf32>
    %125 = arith.mulf %122, %124 : vector<1x256xf32>
    %c56 = arith.constant 56 : index
    %126 = memref.load %arg3[%c56] : memref<98xf32, #tpu.memory_space<smem>>
    %127 = vector.broadcast %126 : f32 to vector<1x256xf32>
    %128 = arith.mulf %122, %127 : vector<1x256xf32>
    %c35_i32 = arith.constant 35 : i32
    %129 = tpu.dynamic_rotate %1 by %c35_i32 dim 1 : vector<2x256xf32>, i32 -> vector<2x256xf32>
    %c35_i32_28 = arith.constant 35 : i32
    %130 = tpu.dynamic_rotate %4 by %c35_i32_28 dim 1 : vector<2x256xf32>, i32 -> vector<2x256xf32>
    %131 = vector.broadcast %125 : vector<1x256xf32> to vector<2x256xf32>
    %132 = arith.mulf %129, %131 : vector<2x256xf32>
    %133 = arith.addf %116, %132 : vector<2x256xf32>
    %134 = vector.broadcast %128 : vector<1x256xf32> to vector<2x256xf32>
    %135 = arith.mulf %130, %134 : vector<2x256xf32>
    %136 = arith.addf %119, %135 : vector<2x256xf32>
    %c8_29 = arith.constant 8 : index
    %c0_30 = arith.constant 0 : index
    %137 = vector.load %arg2[%c8_29, %c0_30] : memref<14x256xf32, #tpu.memory_space<vmem>>, vector<1x256xf32>
    %138 = arith.mulf %120, %137 : vector<1x256xf32>
    %c8_31 = arith.constant 8 : index
    %139 = memref.load %arg3[%c8_31] : memref<98xf32, #tpu.memory_space<smem>>
    %140 = vector.broadcast %139 : f32 to vector<1x256xf32>
    %141 = arith.mulf %138, %140 : vector<1x256xf32>
    %c57 = arith.constant 57 : index
    %142 = memref.load %arg3[%c57] : memref<98xf32, #tpu.memory_space<smem>>
    %143 = vector.broadcast %142 : f32 to vector<1x256xf32>
    %144 = arith.mulf %138, %143 : vector<1x256xf32>
    %c34_i32 = arith.constant 34 : i32
    %145 = tpu.dynamic_rotate %1 by %c34_i32 dim 1 : vector<2x256xf32>, i32 -> vector<2x256xf32>
    %c34_i32_32 = arith.constant 34 : i32
    %146 = tpu.dynamic_rotate %4 by %c34_i32_32 dim 1 : vector<2x256xf32>, i32 -> vector<2x256xf32>
    %147 = vector.broadcast %141 : vector<1x256xf32> to vector<2x256xf32>
    %148 = arith.mulf %145, %147 : vector<2x256xf32>
    %149 = arith.addf %133, %148 : vector<2x256xf32>
    %150 = vector.broadcast %144 : vector<1x256xf32> to vector<2x256xf32>
    %151 = arith.mulf %146, %150 : vector<2x256xf32>
    %152 = arith.addf %136, %151 : vector<2x256xf32>
    %c9_33 = arith.constant 9 : index
    %c0_34 = arith.constant 0 : index
    %153 = vector.load %arg2[%c9_33, %c0_34] : memref<14x256xf32, #tpu.memory_space<vmem>>, vector<1x256xf32>
    %154 = arith.mulf %120, %153 : vector<1x256xf32>
    %c9_35 = arith.constant 9 : index
    %155 = memref.load %arg3[%c9_35] : memref<98xf32, #tpu.memory_space<smem>>
    %156 = vector.broadcast %155 : f32 to vector<1x256xf32>
    %157 = arith.mulf %154, %156 : vector<1x256xf32>
    %c58 = arith.constant 58 : index
    %158 = memref.load %arg3[%c58] : memref<98xf32, #tpu.memory_space<smem>>
    %159 = vector.broadcast %158 : f32 to vector<1x256xf32>
    %160 = arith.mulf %154, %159 : vector<1x256xf32>
    %c33_i32 = arith.constant 33 : i32
    %161 = tpu.dynamic_rotate %1 by %c33_i32 dim 1 : vector<2x256xf32>, i32 -> vector<2x256xf32>
    %c33_i32_36 = arith.constant 33 : i32
    %162 = tpu.dynamic_rotate %4 by %c33_i32_36 dim 1 : vector<2x256xf32>, i32 -> vector<2x256xf32>
    %163 = vector.broadcast %157 : vector<1x256xf32> to vector<2x256xf32>
    %164 = arith.mulf %161, %163 : vector<2x256xf32>
    %165 = arith.addf %149, %164 : vector<2x256xf32>
    %166 = vector.broadcast %160 : vector<1x256xf32> to vector<2x256xf32>
    %167 = arith.mulf %162, %166 : vector<2x256xf32>
    %168 = arith.addf %152, %167 : vector<2x256xf32>
    %c10_37 = arith.constant 10 : index
    %c0_38 = arith.constant 0 : index
    %169 = vector.load %arg2[%c10_37, %c0_38] : memref<14x256xf32, #tpu.memory_space<vmem>>, vector<1x256xf32>
    %170 = arith.mulf %120, %169 : vector<1x256xf32>
    %c10_39 = arith.constant 10 : index
    %171 = memref.load %arg3[%c10_39] : memref<98xf32, #tpu.memory_space<smem>>
    %172 = vector.broadcast %171 : f32 to vector<1x256xf32>
    %173 = arith.mulf %170, %172 : vector<1x256xf32>
    %c59 = arith.constant 59 : index
    %174 = memref.load %arg3[%c59] : memref<98xf32, #tpu.memory_space<smem>>
    %175 = vector.broadcast %174 : f32 to vector<1x256xf32>
    %176 = arith.mulf %170, %175 : vector<1x256xf32>
    %c32_i32 = arith.constant 32 : i32
    %177 = tpu.dynamic_rotate %1 by %c32_i32 dim 1 : vector<2x256xf32>, i32 -> vector<2x256xf32>
    %c32_i32_40 = arith.constant 32 : i32
    %178 = tpu.dynamic_rotate %4 by %c32_i32_40 dim 1 : vector<2x256xf32>, i32 -> vector<2x256xf32>
    %179 = vector.broadcast %173 : vector<1x256xf32> to vector<2x256xf32>
    %180 = arith.mulf %177, %179 : vector<2x256xf32>
    %181 = arith.addf %165, %180 : vector<2x256xf32>
    %182 = vector.broadcast %176 : vector<1x256xf32> to vector<2x256xf32>
    %183 = arith.mulf %178, %182 : vector<2x256xf32>
    %184 = arith.addf %168, %183 : vector<2x256xf32>
    %c11_41 = arith.constant 11 : index
    %c0_42 = arith.constant 0 : index
    %185 = vector.load %arg2[%c11_41, %c0_42] : memref<14x256xf32, #tpu.memory_space<vmem>>, vector<1x256xf32>
    %186 = arith.mulf %120, %185 : vector<1x256xf32>
    %c11_43 = arith.constant 11 : index
    %187 = memref.load %arg3[%c11_43] : memref<98xf32, #tpu.memory_space<smem>>
    %188 = vector.broadcast %187 : f32 to vector<1x256xf32>
    %189 = arith.mulf %186, %188 : vector<1x256xf32>
    %c60 = arith.constant 60 : index
    %190 = memref.load %arg3[%c60] : memref<98xf32, #tpu.memory_space<smem>>
    %191 = vector.broadcast %190 : f32 to vector<1x256xf32>
    %192 = arith.mulf %186, %191 : vector<1x256xf32>
    %c31_i32 = arith.constant 31 : i32
    %193 = tpu.dynamic_rotate %1 by %c31_i32 dim 1 : vector<2x256xf32>, i32 -> vector<2x256xf32>
    %c31_i32_44 = arith.constant 31 : i32
    %194 = tpu.dynamic_rotate %4 by %c31_i32_44 dim 1 : vector<2x256xf32>, i32 -> vector<2x256xf32>
    %195 = vector.broadcast %189 : vector<1x256xf32> to vector<2x256xf32>
    %196 = arith.mulf %193, %195 : vector<2x256xf32>
    %197 = arith.addf %181, %196 : vector<2x256xf32>
    %198 = vector.broadcast %192 : vector<1x256xf32> to vector<2x256xf32>
    %199 = arith.mulf %194, %198 : vector<2x256xf32>
    %200 = arith.addf %184, %199 : vector<2x256xf32>
    %c12_45 = arith.constant 12 : index
    %c0_46 = arith.constant 0 : index
    %201 = vector.load %arg2[%c12_45, %c0_46] : memref<14x256xf32, #tpu.memory_space<vmem>>, vector<1x256xf32>
    %202 = arith.mulf %120, %201 : vector<1x256xf32>
    %c12_47 = arith.constant 12 : index
    %203 = memref.load %arg3[%c12_47] : memref<98xf32, #tpu.memory_space<smem>>
    %204 = vector.broadcast %203 : f32 to vector<1x256xf32>
    %205 = arith.mulf %202, %204 : vector<1x256xf32>
    %c61 = arith.constant 61 : index
    %206 = memref.load %arg3[%c61] : memref<98xf32, #tpu.memory_space<smem>>
    %207 = vector.broadcast %206 : f32 to vector<1x256xf32>
    %208 = arith.mulf %202, %207 : vector<1x256xf32>
    %c30_i32 = arith.constant 30 : i32
    %209 = tpu.dynamic_rotate %1 by %c30_i32 dim 1 : vector<2x256xf32>, i32 -> vector<2x256xf32>
    %c30_i32_48 = arith.constant 30 : i32
    %210 = tpu.dynamic_rotate %4 by %c30_i32_48 dim 1 : vector<2x256xf32>, i32 -> vector<2x256xf32>
    %211 = vector.broadcast %205 : vector<1x256xf32> to vector<2x256xf32>
    %212 = arith.mulf %209, %211 : vector<2x256xf32>
    %213 = arith.addf %197, %212 : vector<2x256xf32>
    %214 = vector.broadcast %208 : vector<1x256xf32> to vector<2x256xf32>
    %215 = arith.mulf %210, %214 : vector<2x256xf32>
    %216 = arith.addf %200, %215 : vector<2x256xf32>
    %c13_49 = arith.constant 13 : index
    %c0_50 = arith.constant 0 : index
    %217 = vector.load %arg2[%c13_49, %c0_50] : memref<14x256xf32, #tpu.memory_space<vmem>>, vector<1x256xf32>
    %218 = arith.mulf %120, %217 : vector<1x256xf32>
    %c13_51 = arith.constant 13 : index
    %219 = memref.load %arg3[%c13_51] : memref<98xf32, #tpu.memory_space<smem>>
    %220 = vector.broadcast %219 : f32 to vector<1x256xf32>
    %221 = arith.mulf %218, %220 : vector<1x256xf32>
    %c62 = arith.constant 62 : index
    %222 = memref.load %arg3[%c62] : memref<98xf32, #tpu.memory_space<smem>>
    %223 = vector.broadcast %222 : f32 to vector<1x256xf32>
    %224 = arith.mulf %218, %223 : vector<1x256xf32>
    %c29_i32 = arith.constant 29 : i32
    %225 = tpu.dynamic_rotate %1 by %c29_i32 dim 1 : vector<2x256xf32>, i32 -> vector<2x256xf32>
    %c29_i32_52 = arith.constant 29 : i32
    %226 = tpu.dynamic_rotate %4 by %c29_i32_52 dim 1 : vector<2x256xf32>, i32 -> vector<2x256xf32>
    %227 = vector.broadcast %221 : vector<1x256xf32> to vector<2x256xf32>
    %228 = arith.mulf %225, %227 : vector<2x256xf32>
    %229 = arith.addf %213, %228 : vector<2x256xf32>
    %230 = vector.broadcast %224 : vector<1x256xf32> to vector<2x256xf32>
    %231 = arith.mulf %226, %230 : vector<2x256xf32>
    %232 = arith.addf %216, %231 : vector<2x256xf32>
    %c2_53 = arith.constant 2 : index
    %c0_54 = arith.constant 0 : index
    %233 = vector.load %arg2[%c2_53, %c0_54] : memref<14x256xf32, #tpu.memory_space<vmem>>, vector<1x256xf32>
    %c7_55 = arith.constant 7 : index
    %c0_56 = arith.constant 0 : index
    %234 = vector.load %arg2[%c7_55, %c0_56] : memref<14x256xf32, #tpu.memory_space<vmem>>, vector<1x256xf32>
    %235 = arith.mulf %233, %234 : vector<1x256xf32>
    %c14 = arith.constant 14 : index
    %236 = memref.load %arg3[%c14] : memref<98xf32, #tpu.memory_space<smem>>
    %237 = vector.broadcast %236 : f32 to vector<1x256xf32>
    %238 = arith.mulf %235, %237 : vector<1x256xf32>
    %c63 = arith.constant 63 : index
    %239 = memref.load %arg3[%c63] : memref<98xf32, #tpu.memory_space<smem>>
    %240 = vector.broadcast %239 : f32 to vector<1x256xf32>
    %241 = arith.mulf %235, %240 : vector<1x256xf32>
    %c19_i32 = arith.constant 19 : i32
    %242 = tpu.dynamic_rotate %1 by %c19_i32 dim 1 : vector<2x256xf32>, i32 -> vector<2x256xf32>
    %c19_i32_57 = arith.constant 19 : i32
    %243 = tpu.dynamic_rotate %4 by %c19_i32_57 dim 1 : vector<2x256xf32>, i32 -> vector<2x256xf32>
    %244 = vector.broadcast %238 : vector<1x256xf32> to vector<2x256xf32>
    %245 = arith.mulf %242, %244 : vector<2x256xf32>
    %246 = arith.addf %229, %245 : vector<2x256xf32>
    %247 = vector.broadcast %241 : vector<1x256xf32> to vector<2x256xf32>
    %248 = arith.mulf %243, %247 : vector<2x256xf32>
    %249 = arith.addf %232, %248 : vector<2x256xf32>
    %c8_58 = arith.constant 8 : index
    %c0_59 = arith.constant 0 : index
    %250 = vector.load %arg2[%c8_58, %c0_59] : memref<14x256xf32, #tpu.memory_space<vmem>>, vector<1x256xf32>
    %251 = arith.mulf %233, %250 : vector<1x256xf32>
    %c15 = arith.constant 15 : index
    %252 = memref.load %arg3[%c15] : memref<98xf32, #tpu.memory_space<smem>>
    %253 = vector.broadcast %252 : f32 to vector<1x256xf32>
    %254 = arith.mulf %251, %253 : vector<1x256xf32>
    %c64 = arith.constant 64 : index
    %255 = memref.load %arg3[%c64] : memref<98xf32, #tpu.memory_space<smem>>
    %256 = vector.broadcast %255 : f32 to vector<1x256xf32>
    %257 = arith.mulf %251, %256 : vector<1x256xf32>
    %c18_i32 = arith.constant 18 : i32
    %258 = tpu.dynamic_rotate %1 by %c18_i32 dim 1 : vector<2x256xf32>, i32 -> vector<2x256xf32>
    %c18_i32_60 = arith.constant 18 : i32
    %259 = tpu.dynamic_rotate %4 by %c18_i32_60 dim 1 : vector<2x256xf32>, i32 -> vector<2x256xf32>
    %260 = vector.broadcast %254 : vector<1x256xf32> to vector<2x256xf32>
    %261 = arith.mulf %258, %260 : vector<2x256xf32>
    %262 = arith.addf %246, %261 : vector<2x256xf32>
    %263 = vector.broadcast %257 : vector<1x256xf32> to vector<2x256xf32>
    %264 = arith.mulf %259, %263 : vector<2x256xf32>
    %265 = arith.addf %249, %264 : vector<2x256xf32>
    %c9_61 = arith.constant 9 : index
    %c0_62 = arith.constant 0 : index
    %266 = vector.load %arg2[%c9_61, %c0_62] : memref<14x256xf32, #tpu.memory_space<vmem>>, vector<1x256xf32>
    %267 = arith.mulf %233, %266 : vector<1x256xf32>
    %c16 = arith.constant 16 : index
    %268 = memref.load %arg3[%c16] : memref<98xf32, #tpu.memory_space<smem>>
    %269 = vector.broadcast %268 : f32 to vector<1x256xf32>
    %270 = arith.mulf %267, %269 : vector<1x256xf32>
    %c65 = arith.constant 65 : index
    %271 = memref.load %arg3[%c65] : memref<98xf32, #tpu.memory_space<smem>>
    %272 = vector.broadcast %271 : f32 to vector<1x256xf32>
    %273 = arith.mulf %267, %272 : vector<1x256xf32>
    %c17_i32 = arith.constant 17 : i32
    %274 = tpu.dynamic_rotate %1 by %c17_i32 dim 1 : vector<2x256xf32>, i32 -> vector<2x256xf32>
    %c17_i32_63 = arith.constant 17 : i32
    %275 = tpu.dynamic_rotate %4 by %c17_i32_63 dim 1 : vector<2x256xf32>, i32 -> vector<2x256xf32>
    %276 = vector.broadcast %270 : vector<1x256xf32> to vector<2x256xf32>
    %277 = arith.mulf %274, %276 : vector<2x256xf32>
    %278 = arith.addf %262, %277 : vector<2x256xf32>
    %279 = vector.broadcast %273 : vector<1x256xf32> to vector<2x256xf32>
    %280 = arith.mulf %275, %279 : vector<2x256xf32>
    %281 = arith.addf %265, %280 : vector<2x256xf32>
    %c10_64 = arith.constant 10 : index
    %c0_65 = arith.constant 0 : index
    %282 = vector.load %arg2[%c10_64, %c0_65] : memref<14x256xf32, #tpu.memory_space<vmem>>, vector<1x256xf32>
    %283 = arith.mulf %233, %282 : vector<1x256xf32>
    %c17 = arith.constant 17 : index
    %284 = memref.load %arg3[%c17] : memref<98xf32, #tpu.memory_space<smem>>
    %285 = vector.broadcast %284 : f32 to vector<1x256xf32>
    %286 = arith.mulf %283, %285 : vector<1x256xf32>
    %c66 = arith.constant 66 : index
    %287 = memref.load %arg3[%c66] : memref<98xf32, #tpu.memory_space<smem>>
    %288 = vector.broadcast %287 : f32 to vector<1x256xf32>
    %289 = arith.mulf %283, %288 : vector<1x256xf32>
    %c16_i32 = arith.constant 16 : i32
    %290 = tpu.dynamic_rotate %1 by %c16_i32 dim 1 : vector<2x256xf32>, i32 -> vector<2x256xf32>
    %c16_i32_66 = arith.constant 16 : i32
    %291 = tpu.dynamic_rotate %4 by %c16_i32_66 dim 1 : vector<2x256xf32>, i32 -> vector<2x256xf32>
    %292 = vector.broadcast %286 : vector<1x256xf32> to vector<2x256xf32>
    %293 = arith.mulf %290, %292 : vector<2x256xf32>
    %294 = arith.addf %278, %293 : vector<2x256xf32>
    %295 = vector.broadcast %289 : vector<1x256xf32> to vector<2x256xf32>
    %296 = arith.mulf %291, %295 : vector<2x256xf32>
    %297 = arith.addf %281, %296 : vector<2x256xf32>
    %c11_67 = arith.constant 11 : index
    %c0_68 = arith.constant 0 : index
    %298 = vector.load %arg2[%c11_67, %c0_68] : memref<14x256xf32, #tpu.memory_space<vmem>>, vector<1x256xf32>
    %299 = arith.mulf %233, %298 : vector<1x256xf32>
    %c18 = arith.constant 18 : index
    %300 = memref.load %arg3[%c18] : memref<98xf32, #tpu.memory_space<smem>>
    %301 = vector.broadcast %300 : f32 to vector<1x256xf32>
    %302 = arith.mulf %299, %301 : vector<1x256xf32>
    %c67 = arith.constant 67 : index
    %303 = memref.load %arg3[%c67] : memref<98xf32, #tpu.memory_space<smem>>
    %304 = vector.broadcast %303 : f32 to vector<1x256xf32>
    %305 = arith.mulf %299, %304 : vector<1x256xf32>
    %c15_i32 = arith.constant 15 : i32
    %306 = tpu.dynamic_rotate %1 by %c15_i32 dim 1 : vector<2x256xf32>, i32 -> vector<2x256xf32>
    %c15_i32_69 = arith.constant 15 : i32
    %307 = tpu.dynamic_rotate %4 by %c15_i32_69 dim 1 : vector<2x256xf32>, i32 -> vector<2x256xf32>
    %308 = vector.broadcast %302 : vector<1x256xf32> to vector<2x256xf32>
    %309 = arith.mulf %306, %308 : vector<2x256xf32>
    %310 = arith.addf %294, %309 : vector<2x256xf32>
    %311 = vector.broadcast %305 : vector<1x256xf32> to vector<2x256xf32>
    %312 = arith.mulf %307, %311 : vector<2x256xf32>
    %313 = arith.addf %297, %312 : vector<2x256xf32>
    %c12_70 = arith.constant 12 : index
    %c0_71 = arith.constant 0 : index
    %314 = vector.load %arg2[%c12_70, %c0_71] : memref<14x256xf32, #tpu.memory_space<vmem>>, vector<1x256xf32>
    %315 = arith.mulf %233, %314 : vector<1x256xf32>
    %c19 = arith.constant 19 : index
    %316 = memref.load %arg3[%c19] : memref<98xf32, #tpu.memory_space<smem>>
    %317 = vector.broadcast %316 : f32 to vector<1x256xf32>
    %318 = arith.mulf %315, %317 : vector<1x256xf32>
    %c68 = arith.constant 68 : index
    %319 = memref.load %arg3[%c68] : memref<98xf32, #tpu.memory_space<smem>>
    %320 = vector.broadcast %319 : f32 to vector<1x256xf32>
    %321 = arith.mulf %315, %320 : vector<1x256xf32>
    %c14_i32 = arith.constant 14 : i32
    %322 = tpu.dynamic_rotate %1 by %c14_i32 dim 1 : vector<2x256xf32>, i32 -> vector<2x256xf32>
    %c14_i32_72 = arith.constant 14 : i32
    %323 = tpu.dynamic_rotate %4 by %c14_i32_72 dim 1 : vector<2x256xf32>, i32 -> vector<2x256xf32>
    %324 = vector.broadcast %318 : vector<1x256xf32> to vector<2x256xf32>
    %325 = arith.mulf %322, %324 : vector<2x256xf32>
    %326 = arith.addf %310, %325 : vector<2x256xf32>
    %327 = vector.broadcast %321 : vector<1x256xf32> to vector<2x256xf32>
    %328 = arith.mulf %323, %327 : vector<2x256xf32>
    %329 = arith.addf %313, %328 : vector<2x256xf32>
    %c13_73 = arith.constant 13 : index
    %c0_74 = arith.constant 0 : index
    %330 = vector.load %arg2[%c13_73, %c0_74] : memref<14x256xf32, #tpu.memory_space<vmem>>, vector<1x256xf32>
    %331 = arith.mulf %233, %330 : vector<1x256xf32>
    %c20 = arith.constant 20 : index
    %332 = memref.load %arg3[%c20] : memref<98xf32, #tpu.memory_space<smem>>
    %333 = vector.broadcast %332 : f32 to vector<1x256xf32>
    %334 = arith.mulf %331, %333 : vector<1x256xf32>
    %c69 = arith.constant 69 : index
    %335 = memref.load %arg3[%c69] : memref<98xf32, #tpu.memory_space<smem>>
    %336 = vector.broadcast %335 : f32 to vector<1x256xf32>
    %337 = arith.mulf %331, %336 : vector<1x256xf32>
    %c13_i32 = arith.constant 13 : i32
    %338 = tpu.dynamic_rotate %1 by %c13_i32 dim 1 : vector<2x256xf32>, i32 -> vector<2x256xf32>
    %c13_i32_75 = arith.constant 13 : i32
    %339 = tpu.dynamic_rotate %4 by %c13_i32_75 dim 1 : vector<2x256xf32>, i32 -> vector<2x256xf32>
    %340 = vector.broadcast %334 : vector<1x256xf32> to vector<2x256xf32>
    %341 = arith.mulf %338, %340 : vector<2x256xf32>
    %342 = arith.addf %326, %341 : vector<2x256xf32>
    %343 = vector.broadcast %337 : vector<1x256xf32> to vector<2x256xf32>
    %344 = arith.mulf %339, %343 : vector<2x256xf32>
    %345 = arith.addf %329, %344 : vector<2x256xf32>
    %c3_76 = arith.constant 3 : index
    %c0_77 = arith.constant 0 : index
    %346 = vector.load %arg2[%c3_76, %c0_77] : memref<14x256xf32, #tpu.memory_space<vmem>>, vector<1x256xf32>
    %c7_78 = arith.constant 7 : index
    %c0_79 = arith.constant 0 : index
    %347 = vector.load %arg2[%c7_78, %c0_79] : memref<14x256xf32, #tpu.memory_space<vmem>>, vector<1x256xf32>
    %348 = arith.mulf %346, %347 : vector<1x256xf32>
    %c21 = arith.constant 21 : index
    %349 = memref.load %arg3[%c21] : memref<98xf32, #tpu.memory_space<smem>>
    %350 = vector.broadcast %349 : f32 to vector<1x256xf32>
    %351 = arith.mulf %348, %350 : vector<1x256xf32>
    %c70 = arith.constant 70 : index
    %352 = memref.load %arg3[%c70] : memref<98xf32, #tpu.memory_space<smem>>
    %353 = vector.broadcast %352 : f32 to vector<1x256xf32>
    %354 = arith.mulf %348, %353 : vector<1x256xf32>
    %c3_i32 = arith.constant 3 : i32
    %355 = tpu.dynamic_rotate %1 by %c3_i32 dim 1 : vector<2x256xf32>, i32 -> vector<2x256xf32>
    %c3_i32_80 = arith.constant 3 : i32
    %356 = tpu.dynamic_rotate %4 by %c3_i32_80 dim 1 : vector<2x256xf32>, i32 -> vector<2x256xf32>
    %357 = vector.broadcast %351 : vector<1x256xf32> to vector<2x256xf32>
    %358 = arith.mulf %355, %357 : vector<2x256xf32>
    %359 = arith.addf %342, %358 : vector<2x256xf32>
    %360 = vector.broadcast %354 : vector<1x256xf32> to vector<2x256xf32>
    %361 = arith.mulf %356, %360 : vector<2x256xf32>
    %362 = arith.addf %345, %361 : vector<2x256xf32>
    %c8_81 = arith.constant 8 : index
    %c0_82 = arith.constant 0 : index
    %363 = vector.load %arg2[%c8_81, %c0_82] : memref<14x256xf32, #tpu.memory_space<vmem>>, vector<1x256xf32>
    %364 = arith.mulf %346, %363 : vector<1x256xf32>
    %c22 = arith.constant 22 : index
    %365 = memref.load %arg3[%c22] : memref<98xf32, #tpu.memory_space<smem>>
    %366 = vector.broadcast %365 : f32 to vector<1x256xf32>
    %367 = arith.mulf %364, %366 : vector<1x256xf32>
    %c71 = arith.constant 71 : index
    %368 = memref.load %arg3[%c71] : memref<98xf32, #tpu.memory_space<smem>>
    %369 = vector.broadcast %368 : f32 to vector<1x256xf32>
    %370 = arith.mulf %364, %369 : vector<1x256xf32>
    %c2_i32 = arith.constant 2 : i32
    %371 = tpu.dynamic_rotate %1 by %c2_i32 dim 1 : vector<2x256xf32>, i32 -> vector<2x256xf32>
    %c2_i32_83 = arith.constant 2 : i32
    %372 = tpu.dynamic_rotate %4 by %c2_i32_83 dim 1 : vector<2x256xf32>, i32 -> vector<2x256xf32>
    %373 = vector.broadcast %367 : vector<1x256xf32> to vector<2x256xf32>
    %374 = arith.mulf %371, %373 : vector<2x256xf32>
    %375 = arith.addf %359, %374 : vector<2x256xf32>
    %376 = vector.broadcast %370 : vector<1x256xf32> to vector<2x256xf32>
    %377 = arith.mulf %372, %376 : vector<2x256xf32>
    %378 = arith.addf %362, %377 : vector<2x256xf32>
    %c9_84 = arith.constant 9 : index
    %c0_85 = arith.constant 0 : index
    %379 = vector.load %arg2[%c9_84, %c0_85] : memref<14x256xf32, #tpu.memory_space<vmem>>, vector<1x256xf32>
    %380 = arith.mulf %346, %379 : vector<1x256xf32>
    %c23 = arith.constant 23 : index
    %381 = memref.load %arg3[%c23] : memref<98xf32, #tpu.memory_space<smem>>
    %382 = vector.broadcast %381 : f32 to vector<1x256xf32>
    %383 = arith.mulf %380, %382 : vector<1x256xf32>
    %c72 = arith.constant 72 : index
    %384 = memref.load %arg3[%c72] : memref<98xf32, #tpu.memory_space<smem>>
    %385 = vector.broadcast %384 : f32 to vector<1x256xf32>
    %386 = arith.mulf %380, %385 : vector<1x256xf32>
    %c1_i32 = arith.constant 1 : i32
    %387 = tpu.dynamic_rotate %1 by %c1_i32 dim 1 : vector<2x256xf32>, i32 -> vector<2x256xf32>
    %c1_i32_86 = arith.constant 1 : i32
    %388 = tpu.dynamic_rotate %4 by %c1_i32_86 dim 1 : vector<2x256xf32>, i32 -> vector<2x256xf32>
    %389 = vector.broadcast %383 : vector<1x256xf32> to vector<2x256xf32>
    %390 = arith.mulf %387, %389 : vector<2x256xf32>
    %391 = arith.addf %375, %390 : vector<2x256xf32>
    %392 = vector.broadcast %386 : vector<1x256xf32> to vector<2x256xf32>
    %393 = arith.mulf %388, %392 : vector<2x256xf32>
    %394 = arith.addf %378, %393 : vector<2x256xf32>
    %c10_87 = arith.constant 10 : index
    %c0_88 = arith.constant 0 : index
    %395 = vector.load %arg2[%c10_87, %c0_88] : memref<14x256xf32, #tpu.memory_space<vmem>>, vector<1x256xf32>
    %396 = arith.mulf %346, %395 : vector<1x256xf32>
    %c24 = arith.constant 24 : index
    %397 = memref.load %arg3[%c24] : memref<98xf32, #tpu.memory_space<smem>>
    %398 = vector.broadcast %397 : f32 to vector<1x256xf32>
    %399 = arith.mulf %396, %398 : vector<1x256xf32>
    %c73 = arith.constant 73 : index
    %400 = memref.load %arg3[%c73] : memref<98xf32, #tpu.memory_space<smem>>
    %401 = vector.broadcast %400 : f32 to vector<1x256xf32>
    %402 = arith.mulf %396, %401 : vector<1x256xf32>
    %403 = vector.broadcast %399 : vector<1x256xf32> to vector<2x256xf32>
    %404 = arith.mulf %1, %403 : vector<2x256xf32>
    %405 = arith.addf %391, %404 : vector<2x256xf32>
    %406 = vector.broadcast %402 : vector<1x256xf32> to vector<2x256xf32>
    %407 = arith.mulf %4, %406 : vector<2x256xf32>
    %408 = arith.addf %394, %407 : vector<2x256xf32>
    %c11_89 = arith.constant 11 : index
    %c0_90 = arith.constant 0 : index
    %409 = vector.load %arg2[%c11_89, %c0_90] : memref<14x256xf32, #tpu.memory_space<vmem>>, vector<1x256xf32>
    %410 = arith.mulf %346, %409 : vector<1x256xf32>
    %c25 = arith.constant 25 : index
    %411 = memref.load %arg3[%c25] : memref<98xf32, #tpu.memory_space<smem>>
    %412 = vector.broadcast %411 : f32 to vector<1x256xf32>
    %413 = arith.mulf %410, %412 : vector<1x256xf32>
    %c74 = arith.constant 74 : index
    %414 = memref.load %arg3[%c74] : memref<98xf32, #tpu.memory_space<smem>>
    %415 = vector.broadcast %414 : f32 to vector<1x256xf32>
    %416 = arith.mulf %410, %415 : vector<1x256xf32>
    %c255_i32 = arith.constant 255 : i32
    %417 = tpu.dynamic_rotate %1 by %c255_i32 dim 1 : vector<2x256xf32>, i32 -> vector<2x256xf32>
    %c255_i32_91 = arith.constant 255 : i32
    %418 = tpu.dynamic_rotate %4 by %c255_i32_91 dim 1 : vector<2x256xf32>, i32 -> vector<2x256xf32>
    %419 = vector.broadcast %413 : vector<1x256xf32> to vector<2x256xf32>
    %420 = arith.mulf %417, %419 : vector<2x256xf32>
    %421 = arith.addf %405, %420 : vector<2x256xf32>
    %422 = vector.broadcast %416 : vector<1x256xf32> to vector<2x256xf32>
    %423 = arith.mulf %418, %422 : vector<2x256xf32>
    %424 = arith.addf %408, %423 : vector<2x256xf32>
    %c12_92 = arith.constant 12 : index
    %c0_93 = arith.constant 0 : index
    %425 = vector.load %arg2[%c12_92, %c0_93] : memref<14x256xf32, #tpu.memory_space<vmem>>, vector<1x256xf32>
    %426 = arith.mulf %346, %425 : vector<1x256xf32>
    %c26 = arith.constant 26 : index
    %427 = memref.load %arg3[%c26] : memref<98xf32, #tpu.memory_space<smem>>
    %428 = vector.broadcast %427 : f32 to vector<1x256xf32>
    %429 = arith.mulf %426, %428 : vector<1x256xf32>
    %c75 = arith.constant 75 : index
    %430 = memref.load %arg3[%c75] : memref<98xf32, #tpu.memory_space<smem>>
    %431 = vector.broadcast %430 : f32 to vector<1x256xf32>
    %432 = arith.mulf %426, %431 : vector<1x256xf32>
    %c254_i32 = arith.constant 254 : i32
    %433 = tpu.dynamic_rotate %1 by %c254_i32 dim 1 : vector<2x256xf32>, i32 -> vector<2x256xf32>
    %c254_i32_94 = arith.constant 254 : i32
    %434 = tpu.dynamic_rotate %4 by %c254_i32_94 dim 1 : vector<2x256xf32>, i32 -> vector<2x256xf32>
    %435 = vector.broadcast %429 : vector<1x256xf32> to vector<2x256xf32>
    %436 = arith.mulf %433, %435 : vector<2x256xf32>
    %437 = arith.addf %421, %436 : vector<2x256xf32>
    %438 = vector.broadcast %432 : vector<1x256xf32> to vector<2x256xf32>
    %439 = arith.mulf %434, %438 : vector<2x256xf32>
    %440 = arith.addf %424, %439 : vector<2x256xf32>
    %c13_95 = arith.constant 13 : index
    %c0_96 = arith.constant 0 : index
    %441 = vector.load %arg2[%c13_95, %c0_96] : memref<14x256xf32, #tpu.memory_space<vmem>>, vector<1x256xf32>
    %442 = arith.mulf %346, %441 : vector<1x256xf32>
    %c27 = arith.constant 27 : index
    %443 = memref.load %arg3[%c27] : memref<98xf32, #tpu.memory_space<smem>>
    %444 = vector.broadcast %443 : f32 to vector<1x256xf32>
    %445 = arith.mulf %442, %444 : vector<1x256xf32>
    %c76 = arith.constant 76 : index
    %446 = memref.load %arg3[%c76] : memref<98xf32, #tpu.memory_space<smem>>
    %447 = vector.broadcast %446 : f32 to vector<1x256xf32>
    %448 = arith.mulf %442, %447 : vector<1x256xf32>
    %c253_i32 = arith.constant 253 : i32
    %449 = tpu.dynamic_rotate %1 by %c253_i32 dim 1 : vector<2x256xf32>, i32 -> vector<2x256xf32>
    %c253_i32_97 = arith.constant 253 : i32
    %450 = tpu.dynamic_rotate %4 by %c253_i32_97 dim 1 : vector<2x256xf32>, i32 -> vector<2x256xf32>
    %451 = vector.broadcast %445 : vector<1x256xf32> to vector<2x256xf32>
    %452 = arith.mulf %449, %451 : vector<2x256xf32>
    %453 = arith.addf %437, %452 : vector<2x256xf32>
    %454 = vector.broadcast %448 : vector<1x256xf32> to vector<2x256xf32>
    %455 = arith.mulf %450, %454 : vector<2x256xf32>
    %456 = arith.addf %440, %455 : vector<2x256xf32>
    %c4_98 = arith.constant 4 : index
    %c0_99 = arith.constant 0 : index
    %457 = vector.load %arg2[%c4_98, %c0_99] : memref<14x256xf32, #tpu.memory_space<vmem>>, vector<1x256xf32>
    %c7_100 = arith.constant 7 : index
    %c0_101 = arith.constant 0 : index
    %458 = vector.load %arg2[%c7_100, %c0_101] : memref<14x256xf32, #tpu.memory_space<vmem>>, vector<1x256xf32>
    %459 = arith.mulf %457, %458 : vector<1x256xf32>
    %c28 = arith.constant 28 : index
    %460 = memref.load %arg3[%c28] : memref<98xf32, #tpu.memory_space<smem>>
    %461 = vector.broadcast %460 : f32 to vector<1x256xf32>
    %462 = arith.mulf %459, %461 : vector<1x256xf32>
    %c77 = arith.constant 77 : index
    %463 = memref.load %arg3[%c77] : memref<98xf32, #tpu.memory_space<smem>>
    %464 = vector.broadcast %463 : f32 to vector<1x256xf32>
    %465 = arith.mulf %459, %464 : vector<1x256xf32>
    %c243_i32 = arith.constant 243 : i32
    %466 = tpu.dynamic_rotate %1 by %c243_i32 dim 1 : vector<2x256xf32>, i32 -> vector<2x256xf32>
    %c243_i32_102 = arith.constant 243 : i32
    %467 = tpu.dynamic_rotate %4 by %c243_i32_102 dim 1 : vector<2x256xf32>, i32 -> vector<2x256xf32>
    %468 = vector.broadcast %462 : vector<1x256xf32> to vector<2x256xf32>
    %469 = arith.mulf %466, %468 : vector<2x256xf32>
    %470 = arith.addf %453, %469 : vector<2x256xf32>
    %471 = vector.broadcast %465 : vector<1x256xf32> to vector<2x256xf32>
    %472 = arith.mulf %467, %471 : vector<2x256xf32>
    %473 = arith.addf %456, %472 : vector<2x256xf32>
    %c8_103 = arith.constant 8 : index
    %c0_104 = arith.constant 0 : index
    %474 = vector.load %arg2[%c8_103, %c0_104] : memref<14x256xf32, #tpu.memory_space<vmem>>, vector<1x256xf32>
    %475 = arith.mulf %457, %474 : vector<1x256xf32>
    %c29 = arith.constant 29 : index
    %476 = memref.load %arg3[%c29] : memref<98xf32, #tpu.memory_space<smem>>
    %477 = vector.broadcast %476 : f32 to vector<1x256xf32>
    %478 = arith.mulf %475, %477 : vector<1x256xf32>
    %c78 = arith.constant 78 : index
    %479 = memref.load %arg3[%c78] : memref<98xf32, #tpu.memory_space<smem>>
    %480 = vector.broadcast %479 : f32 to vector<1x256xf32>
    %481 = arith.mulf %475, %480 : vector<1x256xf32>
    %c242_i32 = arith.constant 242 : i32
    %482 = tpu.dynamic_rotate %1 by %c242_i32 dim 1 : vector<2x256xf32>, i32 -> vector<2x256xf32>
    %c242_i32_105 = arith.constant 242 : i32
    %483 = tpu.dynamic_rotate %4 by %c242_i32_105 dim 1 : vector<2x256xf32>, i32 -> vector<2x256xf32>
    %484 = vector.broadcast %478 : vector<1x256xf32> to vector<2x256xf32>
    %485 = arith.mulf %482, %484 : vector<2x256xf32>
    %486 = arith.addf %470, %485 : vector<2x256xf32>
    %487 = vector.broadcast %481 : vector<1x256xf32> to vector<2x256xf32>
    %488 = arith.mulf %483, %487 : vector<2x256xf32>
    %489 = arith.addf %473, %488 : vector<2x256xf32>
    %c9_106 = arith.constant 9 : index
    %c0_107 = arith.constant 0 : index
    %490 = vector.load %arg2[%c9_106, %c0_107] : memref<14x256xf32, #tpu.memory_space<vmem>>, vector<1x256xf32>
    %491 = arith.mulf %457, %490 : vector<1x256xf32>
    %c30 = arith.constant 30 : index
    %492 = memref.load %arg3[%c30] : memref<98xf32, #tpu.memory_space<smem>>
    %493 = vector.broadcast %492 : f32 to vector<1x256xf32>
    %494 = arith.mulf %491, %493 : vector<1x256xf32>
    %c79 = arith.constant 79 : index
    %495 = memref.load %arg3[%c79] : memref<98xf32, #tpu.memory_space<smem>>
    %496 = vector.broadcast %495 : f32 to vector<1x256xf32>
    %497 = arith.mulf %491, %496 : vector<1x256xf32>
    %c241_i32 = arith.constant 241 : i32
    %498 = tpu.dynamic_rotate %1 by %c241_i32 dim 1 : vector<2x256xf32>, i32 -> vector<2x256xf32>
    %c241_i32_108 = arith.constant 241 : i32
    %499 = tpu.dynamic_rotate %4 by %c241_i32_108 dim 1 : vector<2x256xf32>, i32 -> vector<2x256xf32>
    %500 = vector.broadcast %494 : vector<1x256xf32> to vector<2x256xf32>
    %501 = arith.mulf %498, %500 : vector<2x256xf32>
    %502 = arith.addf %486, %501 : vector<2x256xf32>
    %503 = vector.broadcast %497 : vector<1x256xf32> to vector<2x256xf32>
    %504 = arith.mulf %499, %503 : vector<2x256xf32>
    %505 = arith.addf %489, %504 : vector<2x256xf32>
    %c10_109 = arith.constant 10 : index
    %c0_110 = arith.constant 0 : index
    %506 = vector.load %arg2[%c10_109, %c0_110] : memref<14x256xf32, #tpu.memory_space<vmem>>, vector<1x256xf32>
    %507 = arith.mulf %457, %506 : vector<1x256xf32>
    %c31 = arith.constant 31 : index
    %508 = memref.load %arg3[%c31] : memref<98xf32, #tpu.memory_space<smem>>
    %509 = vector.broadcast %508 : f32 to vector<1x256xf32>
    %510 = arith.mulf %507, %509 : vector<1x256xf32>
    %c80 = arith.constant 80 : index
    %511 = memref.load %arg3[%c80] : memref<98xf32, #tpu.memory_space<smem>>
    %512 = vector.broadcast %511 : f32 to vector<1x256xf32>
    %513 = arith.mulf %507, %512 : vector<1x256xf32>
    %c240_i32 = arith.constant 240 : i32
    %514 = tpu.dynamic_rotate %1 by %c240_i32 dim 1 : vector<2x256xf32>, i32 -> vector<2x256xf32>
    %c240_i32_111 = arith.constant 240 : i32
    %515 = tpu.dynamic_rotate %4 by %c240_i32_111 dim 1 : vector<2x256xf32>, i32 -> vector<2x256xf32>
    %516 = vector.broadcast %510 : vector<1x256xf32> to vector<2x256xf32>
    %517 = arith.mulf %514, %516 : vector<2x256xf32>
    %518 = arith.addf %502, %517 : vector<2x256xf32>
    %519 = vector.broadcast %513 : vector<1x256xf32> to vector<2x256xf32>
    %520 = arith.mulf %515, %519 : vector<2x256xf32>
    %521 = arith.addf %505, %520 : vector<2x256xf32>
    %c11_112 = arith.constant 11 : index
    %c0_113 = arith.constant 0 : index
    %522 = vector.load %arg2[%c11_112, %c0_113] : memref<14x256xf32, #tpu.memory_space<vmem>>, vector<1x256xf32>
    %523 = arith.mulf %457, %522 : vector<1x256xf32>
    %c32 = arith.constant 32 : index
    %524 = memref.load %arg3[%c32] : memref<98xf32, #tpu.memory_space<smem>>
    %525 = vector.broadcast %524 : f32 to vector<1x256xf32>
    %526 = arith.mulf %523, %525 : vector<1x256xf32>
    %c81 = arith.constant 81 : index
    %527 = memref.load %arg3[%c81] : memref<98xf32, #tpu.memory_space<smem>>
    %528 = vector.broadcast %527 : f32 to vector<1x256xf32>
    %529 = arith.mulf %523, %528 : vector<1x256xf32>
    %c239_i32 = arith.constant 239 : i32
    %530 = tpu.dynamic_rotate %1 by %c239_i32 dim 1 : vector<2x256xf32>, i32 -> vector<2x256xf32>
    %c239_i32_114 = arith.constant 239 : i32
    %531 = tpu.dynamic_rotate %4 by %c239_i32_114 dim 1 : vector<2x256xf32>, i32 -> vector<2x256xf32>
    %532 = vector.broadcast %526 : vector<1x256xf32> to vector<2x256xf32>
    %533 = arith.mulf %530, %532 : vector<2x256xf32>
    %534 = arith.addf %518, %533 : vector<2x256xf32>
    %535 = vector.broadcast %529 : vector<1x256xf32> to vector<2x256xf32>
    %536 = arith.mulf %531, %535 : vector<2x256xf32>
    %537 = arith.addf %521, %536 : vector<2x256xf32>
    %c12_115 = arith.constant 12 : index
    %c0_116 = arith.constant 0 : index
    %538 = vector.load %arg2[%c12_115, %c0_116] : memref<14x256xf32, #tpu.memory_space<vmem>>, vector<1x256xf32>
    %539 = arith.mulf %457, %538 : vector<1x256xf32>
    %c33 = arith.constant 33 : index
    %540 = memref.load %arg3[%c33] : memref<98xf32, #tpu.memory_space<smem>>
    %541 = vector.broadcast %540 : f32 to vector<1x256xf32>
    %542 = arith.mulf %539, %541 : vector<1x256xf32>
    %c82 = arith.constant 82 : index
    %543 = memref.load %arg3[%c82] : memref<98xf32, #tpu.memory_space<smem>>
    %544 = vector.broadcast %543 : f32 to vector<1x256xf32>
    %545 = arith.mulf %539, %544 : vector<1x256xf32>
    %c238_i32 = arith.constant 238 : i32
    %546 = tpu.dynamic_rotate %1 by %c238_i32 dim 1 : vector<2x256xf32>, i32 -> vector<2x256xf32>
    %c238_i32_117 = arith.constant 238 : i32
    %547 = tpu.dynamic_rotate %4 by %c238_i32_117 dim 1 : vector<2x256xf32>, i32 -> vector<2x256xf32>
    %548 = vector.broadcast %542 : vector<1x256xf32> to vector<2x256xf32>
    %549 = arith.mulf %546, %548 : vector<2x256xf32>
    %550 = arith.addf %534, %549 : vector<2x256xf32>
    %551 = vector.broadcast %545 : vector<1x256xf32> to vector<2x256xf32>
    %552 = arith.mulf %547, %551 : vector<2x256xf32>
    %553 = arith.addf %537, %552 : vector<2x256xf32>
    %c13_118 = arith.constant 13 : index
    %c0_119 = arith.constant 0 : index
    %554 = vector.load %arg2[%c13_118, %c0_119] : memref<14x256xf32, #tpu.memory_space<vmem>>, vector<1x256xf32>
    %555 = arith.mulf %457, %554 : vector<1x256xf32>
    %c34 = arith.constant 34 : index
    %556 = memref.load %arg3[%c34] : memref<98xf32, #tpu.memory_space<smem>>
    %557 = vector.broadcast %556 : f32 to vector<1x256xf32>
    %558 = arith.mulf %555, %557 : vector<1x256xf32>
    %c83 = arith.constant 83 : index
    %559 = memref.load %arg3[%c83] : memref<98xf32, #tpu.memory_space<smem>>
    %560 = vector.broadcast %559 : f32 to vector<1x256xf32>
    %561 = arith.mulf %555, %560 : vector<1x256xf32>
    %c237_i32 = arith.constant 237 : i32
    %562 = tpu.dynamic_rotate %1 by %c237_i32 dim 1 : vector<2x256xf32>, i32 -> vector<2x256xf32>
    %c237_i32_120 = arith.constant 237 : i32
    %563 = tpu.dynamic_rotate %4 by %c237_i32_120 dim 1 : vector<2x256xf32>, i32 -> vector<2x256xf32>
    %564 = vector.broadcast %558 : vector<1x256xf32> to vector<2x256xf32>
    %565 = arith.mulf %562, %564 : vector<2x256xf32>
    %566 = arith.addf %550, %565 : vector<2x256xf32>
    %567 = vector.broadcast %561 : vector<1x256xf32> to vector<2x256xf32>
    %568 = arith.mulf %563, %567 : vector<2x256xf32>
    %569 = arith.addf %553, %568 : vector<2x256xf32>
    %c5_121 = arith.constant 5 : index
    %c0_122 = arith.constant 0 : index
    %570 = vector.load %arg2[%c5_121, %c0_122] : memref<14x256xf32, #tpu.memory_space<vmem>>, vector<1x256xf32>
    %c7_123 = arith.constant 7 : index
    %c0_124 = arith.constant 0 : index
    %571 = vector.load %arg2[%c7_123, %c0_124] : memref<14x256xf32, #tpu.memory_space<vmem>>, vector<1x256xf32>
    %572 = arith.mulf %570, %571 : vector<1x256xf32>
    %c35 = arith.constant 35 : index
    %573 = memref.load %arg3[%c35] : memref<98xf32, #tpu.memory_space<smem>>
    %574 = vector.broadcast %573 : f32 to vector<1x256xf32>
    %575 = arith.mulf %572, %574 : vector<1x256xf32>
    %c84 = arith.constant 84 : index
    %576 = memref.load %arg3[%c84] : memref<98xf32, #tpu.memory_space<smem>>
    %577 = vector.broadcast %576 : f32 to vector<1x256xf32>
    %578 = arith.mulf %572, %577 : vector<1x256xf32>
    %c227_i32 = arith.constant 227 : i32
    %579 = tpu.dynamic_rotate %1 by %c227_i32 dim 1 : vector<2x256xf32>, i32 -> vector<2x256xf32>
    %c227_i32_125 = arith.constant 227 : i32
    %580 = tpu.dynamic_rotate %4 by %c227_i32_125 dim 1 : vector<2x256xf32>, i32 -> vector<2x256xf32>
    %581 = vector.broadcast %575 : vector<1x256xf32> to vector<2x256xf32>
    %582 = arith.mulf %579, %581 : vector<2x256xf32>
    %583 = arith.addf %566, %582 : vector<2x256xf32>
    %584 = vector.broadcast %578 : vector<1x256xf32> to vector<2x256xf32>
    %585 = arith.mulf %580, %584 : vector<2x256xf32>
    %586 = arith.addf %569, %585 : vector<2x256xf32>
    %c8_126 = arith.constant 8 : index
    %c0_127 = arith.constant 0 : index
    %587 = vector.load %arg2[%c8_126, %c0_127] : memref<14x256xf32, #tpu.memory_space<vmem>>, vector<1x256xf32>
    %588 = arith.mulf %570, %587 : vector<1x256xf32>
    %c36 = arith.constant 36 : index
    %589 = memref.load %arg3[%c36] : memref<98xf32, #tpu.memory_space<smem>>
    %590 = vector.broadcast %589 : f32 to vector<1x256xf32>
    %591 = arith.mulf %588, %590 : vector<1x256xf32>
    %c85 = arith.constant 85 : index
    %592 = memref.load %arg3[%c85] : memref<98xf32, #tpu.memory_space<smem>>
    %593 = vector.broadcast %592 : f32 to vector<1x256xf32>
    %594 = arith.mulf %588, %593 : vector<1x256xf32>
    %c226_i32 = arith.constant 226 : i32
    %595 = tpu.dynamic_rotate %1 by %c226_i32 dim 1 : vector<2x256xf32>, i32 -> vector<2x256xf32>
    %c226_i32_128 = arith.constant 226 : i32
    %596 = tpu.dynamic_rotate %4 by %c226_i32_128 dim 1 : vector<2x256xf32>, i32 -> vector<2x256xf32>
    %597 = vector.broadcast %591 : vector<1x256xf32> to vector<2x256xf32>
    %598 = arith.mulf %595, %597 : vector<2x256xf32>
    %599 = arith.addf %583, %598 : vector<2x256xf32>
    %600 = vector.broadcast %594 : vector<1x256xf32> to vector<2x256xf32>
    %601 = arith.mulf %596, %600 : vector<2x256xf32>
    %602 = arith.addf %586, %601 : vector<2x256xf32>
    %c9_129 = arith.constant 9 : index
    %c0_130 = arith.constant 0 : index
    %603 = vector.load %arg2[%c9_129, %c0_130] : memref<14x256xf32, #tpu.memory_space<vmem>>, vector<1x256xf32>
    %604 = arith.mulf %570, %603 : vector<1x256xf32>
    %c37 = arith.constant 37 : index
    %605 = memref.load %arg3[%c37] : memref<98xf32, #tpu.memory_space<smem>>
    %606 = vector.broadcast %605 : f32 to vector<1x256xf32>
    %607 = arith.mulf %604, %606 : vector<1x256xf32>
    %c86 = arith.constant 86 : index
    %608 = memref.load %arg3[%c86] : memref<98xf32, #tpu.memory_space<smem>>
    %609 = vector.broadcast %608 : f32 to vector<1x256xf32>
    %610 = arith.mulf %604, %609 : vector<1x256xf32>
    %c225_i32 = arith.constant 225 : i32
    %611 = tpu.dynamic_rotate %1 by %c225_i32 dim 1 : vector<2x256xf32>, i32 -> vector<2x256xf32>
    %c225_i32_131 = arith.constant 225 : i32
    %612 = tpu.dynamic_rotate %4 by %c225_i32_131 dim 1 : vector<2x256xf32>, i32 -> vector<2x256xf32>
    %613 = vector.broadcast %607 : vector<1x256xf32> to vector<2x256xf32>
    %614 = arith.mulf %611, %613 : vector<2x256xf32>
    %615 = arith.addf %599, %614 : vector<2x256xf32>
    %616 = vector.broadcast %610 : vector<1x256xf32> to vector<2x256xf32>
    %617 = arith.mulf %612, %616 : vector<2x256xf32>
    %618 = arith.addf %602, %617 : vector<2x256xf32>
    %c10_132 = arith.constant 10 : index
    %c0_133 = arith.constant 0 : index
    %619 = vector.load %arg2[%c10_132, %c0_133] : memref<14x256xf32, #tpu.memory_space<vmem>>, vector<1x256xf32>
    %620 = arith.mulf %570, %619 : vector<1x256xf32>
    %c38 = arith.constant 38 : index
    %621 = memref.load %arg3[%c38] : memref<98xf32, #tpu.memory_space<smem>>
    %622 = vector.broadcast %621 : f32 to vector<1x256xf32>
    %623 = arith.mulf %620, %622 : vector<1x256xf32>
    %c87 = arith.constant 87 : index
    %624 = memref.load %arg3[%c87] : memref<98xf32, #tpu.memory_space<smem>>
    %625 = vector.broadcast %624 : f32 to vector<1x256xf32>
    %626 = arith.mulf %620, %625 : vector<1x256xf32>
    %c224_i32 = arith.constant 224 : i32
    %627 = tpu.dynamic_rotate %1 by %c224_i32 dim 1 : vector<2x256xf32>, i32 -> vector<2x256xf32>
    %c224_i32_134 = arith.constant 224 : i32
    %628 = tpu.dynamic_rotate %4 by %c224_i32_134 dim 1 : vector<2x256xf32>, i32 -> vector<2x256xf32>
    %629 = vector.broadcast %623 : vector<1x256xf32> to vector<2x256xf32>
    %630 = arith.mulf %627, %629 : vector<2x256xf32>
    %631 = arith.addf %615, %630 : vector<2x256xf32>
    %632 = vector.broadcast %626 : vector<1x256xf32> to vector<2x256xf32>
    %633 = arith.mulf %628, %632 : vector<2x256xf32>
    %634 = arith.addf %618, %633 : vector<2x256xf32>
    %c11_135 = arith.constant 11 : index
    %c0_136 = arith.constant 0 : index
    %635 = vector.load %arg2[%c11_135, %c0_136] : memref<14x256xf32, #tpu.memory_space<vmem>>, vector<1x256xf32>
    %636 = arith.mulf %570, %635 : vector<1x256xf32>
    %c39 = arith.constant 39 : index
    %637 = memref.load %arg3[%c39] : memref<98xf32, #tpu.memory_space<smem>>
    %638 = vector.broadcast %637 : f32 to vector<1x256xf32>
    %639 = arith.mulf %636, %638 : vector<1x256xf32>
    %c88 = arith.constant 88 : index
    %640 = memref.load %arg3[%c88] : memref<98xf32, #tpu.memory_space<smem>>
    %641 = vector.broadcast %640 : f32 to vector<1x256xf32>
    %642 = arith.mulf %636, %641 : vector<1x256xf32>
    %c223_i32 = arith.constant 223 : i32
    %643 = tpu.dynamic_rotate %1 by %c223_i32 dim 1 : vector<2x256xf32>, i32 -> vector<2x256xf32>
    %c223_i32_137 = arith.constant 223 : i32
    %644 = tpu.dynamic_rotate %4 by %c223_i32_137 dim 1 : vector<2x256xf32>, i32 -> vector<2x256xf32>
    %645 = vector.broadcast %639 : vector<1x256xf32> to vector<2x256xf32>
    %646 = arith.mulf %643, %645 : vector<2x256xf32>
    %647 = arith.addf %631, %646 : vector<2x256xf32>
    %648 = vector.broadcast %642 : vector<1x256xf32> to vector<2x256xf32>
    %649 = arith.mulf %644, %648 : vector<2x256xf32>
    %650 = arith.addf %634, %649 : vector<2x256xf32>
    %c12_138 = arith.constant 12 : index
    %c0_139 = arith.constant 0 : index
    %651 = vector.load %arg2[%c12_138, %c0_139] : memref<14x256xf32, #tpu.memory_space<vmem>>, vector<1x256xf32>
    %652 = arith.mulf %570, %651 : vector<1x256xf32>
    %c40 = arith.constant 40 : index
    %653 = memref.load %arg3[%c40] : memref<98xf32, #tpu.memory_space<smem>>
    %654 = vector.broadcast %653 : f32 to vector<1x256xf32>
    %655 = arith.mulf %652, %654 : vector<1x256xf32>
    %c89 = arith.constant 89 : index
    %656 = memref.load %arg3[%c89] : memref<98xf32, #tpu.memory_space<smem>>
    %657 = vector.broadcast %656 : f32 to vector<1x256xf32>
    %658 = arith.mulf %652, %657 : vector<1x256xf32>
    %c222_i32 = arith.constant 222 : i32
    %659 = tpu.dynamic_rotate %1 by %c222_i32 dim 1 : vector<2x256xf32>, i32 -> vector<2x256xf32>
    %c222_i32_140 = arith.constant 222 : i32
    %660 = tpu.dynamic_rotate %4 by %c222_i32_140 dim 1 : vector<2x256xf32>, i32 -> vector<2x256xf32>
    %661 = vector.broadcast %655 : vector<1x256xf32> to vector<2x256xf32>
    %662 = arith.mulf %659, %661 : vector<2x256xf32>
    %663 = arith.addf %647, %662 : vector<2x256xf32>
    %664 = vector.broadcast %658 : vector<1x256xf32> to vector<2x256xf32>
    %665 = arith.mulf %660, %664 : vector<2x256xf32>
    %666 = arith.addf %650, %665 : vector<2x256xf32>
    %c13_141 = arith.constant 13 : index
    %c0_142 = arith.constant 0 : index
    %667 = vector.load %arg2[%c13_141, %c0_142] : memref<14x256xf32, #tpu.memory_space<vmem>>, vector<1x256xf32>
    %668 = arith.mulf %570, %667 : vector<1x256xf32>
    %c41 = arith.constant 41 : index
    %669 = memref.load %arg3[%c41] : memref<98xf32, #tpu.memory_space<smem>>
    %670 = vector.broadcast %669 : f32 to vector<1x256xf32>
    %671 = arith.mulf %668, %670 : vector<1x256xf32>
    %c90 = arith.constant 90 : index
    %672 = memref.load %arg3[%c90] : memref<98xf32, #tpu.memory_space<smem>>
    %673 = vector.broadcast %672 : f32 to vector<1x256xf32>
    %674 = arith.mulf %668, %673 : vector<1x256xf32>
    %c221_i32 = arith.constant 221 : i32
    %675 = tpu.dynamic_rotate %1 by %c221_i32 dim 1 : vector<2x256xf32>, i32 -> vector<2x256xf32>
    %c221_i32_143 = arith.constant 221 : i32
    %676 = tpu.dynamic_rotate %4 by %c221_i32_143 dim 1 : vector<2x256xf32>, i32 -> vector<2x256xf32>
    %677 = vector.broadcast %671 : vector<1x256xf32> to vector<2x256xf32>
    %678 = arith.mulf %675, %677 : vector<2x256xf32>
    %679 = arith.addf %663, %678 : vector<2x256xf32>
    %680 = vector.broadcast %674 : vector<1x256xf32> to vector<2x256xf32>
    %681 = arith.mulf %676, %680 : vector<2x256xf32>
    %682 = arith.addf %666, %681 : vector<2x256xf32>
    %c6_144 = arith.constant 6 : index
    %c0_145 = arith.constant 0 : index
    %683 = vector.load %arg2[%c6_144, %c0_145] : memref<14x256xf32, #tpu.memory_space<vmem>>, vector<1x256xf32>
    %c7_146 = arith.constant 7 : index
    %c0_147 = arith.constant 0 : index
    %684 = vector.load %arg2[%c7_146, %c0_147] : memref<14x256xf32, #tpu.memory_space<vmem>>, vector<1x256xf32>
    %685 = arith.mulf %683, %684 : vector<1x256xf32>
    %c42 = arith.constant 42 : index
    %686 = memref.load %arg3[%c42] : memref<98xf32, #tpu.memory_space<smem>>
    %687 = vector.broadcast %686 : f32 to vector<1x256xf32>
    %688 = arith.mulf %685, %687 : vector<1x256xf32>
    %c91 = arith.constant 91 : index
    %689 = memref.load %arg3[%c91] : memref<98xf32, #tpu.memory_space<smem>>
    %690 = vector.broadcast %689 : f32 to vector<1x256xf32>
    %691 = arith.mulf %685, %690 : vector<1x256xf32>
    %c211_i32 = arith.constant 211 : i32
    %692 = tpu.dynamic_rotate %1 by %c211_i32 dim 1 : vector<2x256xf32>, i32 -> vector<2x256xf32>
    %c211_i32_148 = arith.constant 211 : i32
    %693 = tpu.dynamic_rotate %4 by %c211_i32_148 dim 1 : vector<2x256xf32>, i32 -> vector<2x256xf32>
    %694 = vector.broadcast %688 : vector<1x256xf32> to vector<2x256xf32>
    %695 = arith.mulf %692, %694 : vector<2x256xf32>
    %696 = arith.addf %679, %695 : vector<2x256xf32>
    %697 = vector.broadcast %691 : vector<1x256xf32> to vector<2x256xf32>
    %698 = arith.mulf %693, %697 : vector<2x256xf32>
    %699 = arith.addf %682, %698 : vector<2x256xf32>
    %c8_149 = arith.constant 8 : index
    %c0_150 = arith.constant 0 : index
    %700 = vector.load %arg2[%c8_149, %c0_150] : memref<14x256xf32, #tpu.memory_space<vmem>>, vector<1x256xf32>
    %701 = arith.mulf %683, %700 : vector<1x256xf32>
    %c43 = arith.constant 43 : index
    %702 = memref.load %arg3[%c43] : memref<98xf32, #tpu.memory_space<smem>>
    %703 = vector.broadcast %702 : f32 to vector<1x256xf32>
    %704 = arith.mulf %701, %703 : vector<1x256xf32>
    %c92 = arith.constant 92 : index
    %705 = memref.load %arg3[%c92] : memref<98xf32, #tpu.memory_space<smem>>
    %706 = vector.broadcast %705 : f32 to vector<1x256xf32>
    %707 = arith.mulf %701, %706 : vector<1x256xf32>
    %c210_i32 = arith.constant 210 : i32
    %708 = tpu.dynamic_rotate %1 by %c210_i32 dim 1 : vector<2x256xf32>, i32 -> vector<2x256xf32>
    %c210_i32_151 = arith.constant 210 : i32
    %709 = tpu.dynamic_rotate %4 by %c210_i32_151 dim 1 : vector<2x256xf32>, i32 -> vector<2x256xf32>
    %710 = vector.broadcast %704 : vector<1x256xf32> to vector<2x256xf32>
    %711 = arith.mulf %708, %710 : vector<2x256xf32>
    %712 = arith.addf %696, %711 : vector<2x256xf32>
    %713 = vector.broadcast %707 : vector<1x256xf32> to vector<2x256xf32>
    %714 = arith.mulf %709, %713 : vector<2x256xf32>
    %715 = arith.addf %699, %714 : vector<2x256xf32>
    %c9_152 = arith.constant 9 : index
    %c0_153 = arith.constant 0 : index
    %716 = vector.load %arg2[%c9_152, %c0_153] : memref<14x256xf32, #tpu.memory_space<vmem>>, vector<1x256xf32>
    %717 = arith.mulf %683, %716 : vector<1x256xf32>
    %c44 = arith.constant 44 : index
    %718 = memref.load %arg3[%c44] : memref<98xf32, #tpu.memory_space<smem>>
    %719 = vector.broadcast %718 : f32 to vector<1x256xf32>
    %720 = arith.mulf %717, %719 : vector<1x256xf32>
    %c93 = arith.constant 93 : index
    %721 = memref.load %arg3[%c93] : memref<98xf32, #tpu.memory_space<smem>>
    %722 = vector.broadcast %721 : f32 to vector<1x256xf32>
    %723 = arith.mulf %717, %722 : vector<1x256xf32>
    %c209_i32 = arith.constant 209 : i32
    %724 = tpu.dynamic_rotate %1 by %c209_i32 dim 1 : vector<2x256xf32>, i32 -> vector<2x256xf32>
    %c209_i32_154 = arith.constant 209 : i32
    %725 = tpu.dynamic_rotate %4 by %c209_i32_154 dim 1 : vector<2x256xf32>, i32 -> vector<2x256xf32>
    %726 = vector.broadcast %720 : vector<1x256xf32> to vector<2x256xf32>
    %727 = arith.mulf %724, %726 : vector<2x256xf32>
    %728 = arith.addf %712, %727 : vector<2x256xf32>
    %729 = vector.broadcast %723 : vector<1x256xf32> to vector<2x256xf32>
    %730 = arith.mulf %725, %729 : vector<2x256xf32>
    %731 = arith.addf %715, %730 : vector<2x256xf32>
    %c10_155 = arith.constant 10 : index
    %c0_156 = arith.constant 0 : index
    %732 = vector.load %arg2[%c10_155, %c0_156] : memref<14x256xf32, #tpu.memory_space<vmem>>, vector<1x256xf32>
    %733 = arith.mulf %683, %732 : vector<1x256xf32>
    %c45 = arith.constant 45 : index
    %734 = memref.load %arg3[%c45] : memref<98xf32, #tpu.memory_space<smem>>
    %735 = vector.broadcast %734 : f32 to vector<1x256xf32>
    %736 = arith.mulf %733, %735 : vector<1x256xf32>
    %c94 = arith.constant 94 : index
    %737 = memref.load %arg3[%c94] : memref<98xf32, #tpu.memory_space<smem>>
    %738 = vector.broadcast %737 : f32 to vector<1x256xf32>
    %739 = arith.mulf %733, %738 : vector<1x256xf32>
    %c208_i32 = arith.constant 208 : i32
    %740 = tpu.dynamic_rotate %1 by %c208_i32 dim 1 : vector<2x256xf32>, i32 -> vector<2x256xf32>
    %c208_i32_157 = arith.constant 208 : i32
    %741 = tpu.dynamic_rotate %4 by %c208_i32_157 dim 1 : vector<2x256xf32>, i32 -> vector<2x256xf32>
    %742 = vector.broadcast %736 : vector<1x256xf32> to vector<2x256xf32>
    %743 = arith.mulf %740, %742 : vector<2x256xf32>
    %744 = arith.addf %728, %743 : vector<2x256xf32>
    %745 = vector.broadcast %739 : vector<1x256xf32> to vector<2x256xf32>
    %746 = arith.mulf %741, %745 : vector<2x256xf32>
    %747 = arith.addf %731, %746 : vector<2x256xf32>
    %c11_158 = arith.constant 11 : index
    %c0_159 = arith.constant 0 : index
    %748 = vector.load %arg2[%c11_158, %c0_159] : memref<14x256xf32, #tpu.memory_space<vmem>>, vector<1x256xf32>
    %749 = arith.mulf %683, %748 : vector<1x256xf32>
    %c46 = arith.constant 46 : index
    %750 = memref.load %arg3[%c46] : memref<98xf32, #tpu.memory_space<smem>>
    %751 = vector.broadcast %750 : f32 to vector<1x256xf32>
    %752 = arith.mulf %749, %751 : vector<1x256xf32>
    %c95 = arith.constant 95 : index
    %753 = memref.load %arg3[%c95] : memref<98xf32, #tpu.memory_space<smem>>
    %754 = vector.broadcast %753 : f32 to vector<1x256xf32>
    %755 = arith.mulf %749, %754 : vector<1x256xf32>
    %c207_i32 = arith.constant 207 : i32
    %756 = tpu.dynamic_rotate %1 by %c207_i32 dim 1 : vector<2x256xf32>, i32 -> vector<2x256xf32>
    %c207_i32_160 = arith.constant 207 : i32
    %757 = tpu.dynamic_rotate %4 by %c207_i32_160 dim 1 : vector<2x256xf32>, i32 -> vector<2x256xf32>
    %758 = vector.broadcast %752 : vector<1x256xf32> to vector<2x256xf32>
    %759 = arith.mulf %756, %758 : vector<2x256xf32>
    %760 = arith.addf %744, %759 : vector<2x256xf32>
    %761 = vector.broadcast %755 : vector<1x256xf32> to vector<2x256xf32>
    %762 = arith.mulf %757, %761 : vector<2x256xf32>
    %763 = arith.addf %747, %762 : vector<2x256xf32>
    %c12_161 = arith.constant 12 : index
    %c0_162 = arith.constant 0 : index
    %764 = vector.load %arg2[%c12_161, %c0_162] : memref<14x256xf32, #tpu.memory_space<vmem>>, vector<1x256xf32>
    %765 = arith.mulf %683, %764 : vector<1x256xf32>
    %c47 = arith.constant 47 : index
    %766 = memref.load %arg3[%c47] : memref<98xf32, #tpu.memory_space<smem>>
    %767 = vector.broadcast %766 : f32 to vector<1x256xf32>
    %768 = arith.mulf %765, %767 : vector<1x256xf32>
    %c96 = arith.constant 96 : index
    %769 = memref.load %arg3[%c96] : memref<98xf32, #tpu.memory_space<smem>>
    %770 = vector.broadcast %769 : f32 to vector<1x256xf32>
    %771 = arith.mulf %765, %770 : vector<1x256xf32>
    %c206_i32 = arith.constant 206 : i32
    %772 = tpu.dynamic_rotate %1 by %c206_i32 dim 1 : vector<2x256xf32>, i32 -> vector<2x256xf32>
    %c206_i32_163 = arith.constant 206 : i32
    %773 = tpu.dynamic_rotate %4 by %c206_i32_163 dim 1 : vector<2x256xf32>, i32 -> vector<2x256xf32>
    %774 = vector.broadcast %768 : vector<1x256xf32> to vector<2x256xf32>
    %775 = arith.mulf %772, %774 : vector<2x256xf32>
    %776 = arith.addf %760, %775 : vector<2x256xf32>
    %777 = vector.broadcast %771 : vector<1x256xf32> to vector<2x256xf32>
    %778 = arith.mulf %773, %777 : vector<2x256xf32>
    %779 = arith.addf %763, %778 : vector<2x256xf32>
    %c13_164 = arith.constant 13 : index
    %c0_165 = arith.constant 0 : index
    %780 = vector.load %arg2[%c13_164, %c0_165] : memref<14x256xf32, #tpu.memory_space<vmem>>, vector<1x256xf32>
    %781 = arith.mulf %683, %780 : vector<1x256xf32>
    %c48 = arith.constant 48 : index
    %782 = memref.load %arg3[%c48] : memref<98xf32, #tpu.memory_space<smem>>
    %783 = vector.broadcast %782 : f32 to vector<1x256xf32>
    %784 = arith.mulf %781, %783 : vector<1x256xf32>
    %c97 = arith.constant 97 : index
    %785 = memref.load %arg3[%c97] : memref<98xf32, #tpu.memory_space<smem>>
    %786 = vector.broadcast %785 : f32 to vector<1x256xf32>
    %787 = arith.mulf %781, %786 : vector<1x256xf32>
    %c205_i32 = arith.constant 205 : i32
    %788 = tpu.dynamic_rotate %1 by %c205_i32 dim 1 : vector<2x256xf32>, i32 -> vector<2x256xf32>
    %c205_i32_166 = arith.constant 205 : i32
    %789 = tpu.dynamic_rotate %4 by %c205_i32_166 dim 1 : vector<2x256xf32>, i32 -> vector<2x256xf32>
    %790 = vector.broadcast %784 : vector<1x256xf32> to vector<2x256xf32>
    %791 = arith.mulf %788, %790 : vector<2x256xf32>
    %792 = arith.addf %776, %791 : vector<2x256xf32>
    %793 = vector.broadcast %787 : vector<1x256xf32> to vector<2x256xf32>
    %794 = arith.mulf %789, %793 : vector<2x256xf32>
    %795 = arith.addf %779, %794 : vector<2x256xf32>
    %796 = arith.addf %792, %795 : vector<2x256xf32>
    %c0_167 = arith.constant 0 : index
    %797 = memref.load %arg4[%c0_167] : memref<1xf32, #tpu.memory_space<smem>>
    %798 = vector.broadcast %797 : f32 to vector<2x256xf32>
    %799 = arith.addf %796, %798 : vector<2x256xf32>
    %800 = arith.negf %799 : vector<2x256xf32>
    %801 = math.exp %800 : vector<2x256xf32>
    %cst_168 = arith.constant 1.000000e+00 : f32
    %802 = vector.broadcast %cst_168 : f32 to vector<2x256xf32>
    %803 = arith.addf %802, %801 : vector<2x256xf32>
    %804 = arith.divf %802, %803 : vector<2x256xf32>
    %c0_169 = arith.constant 0 : index
    %c0_170 = arith.constant 0 : index
    %805 = vector.load %arg5[%c0_169, %c0_170] : memref<2x256xf32, #tpu.memory_space<vmem>>, vector<2x256xf32>
    tpu.vector_store %arg5[%c0_169, %c0_170], %804 {strides = array<i32>} : memref<2x256xf32, #tpu.memory_space<vmem>>, vector<2x256xf32>,
    return
  }
  func.func @transform_0(%arg0: i32) -> (i32, i32, i32) {
    %c0_i32 = arith.constant 0 : i32
    %c0_i32_0 = arith.constant 0 : i32
    %c0_i32_1 = arith.constant 0 : i32
    return %arg0, %c0_i32, %c0_i32_0 : i32, i32, i32
  }
  func.func @transform_1(%arg0: i32) -> (i32, i32) {
    %c0_i32 = arith.constant 0 : i32
    %c0_i32_0 = arith.constant 0 : i32
    %c0_i32_1 = arith.constant 0 : i32
    return %c0_i32, %c0_i32_0 : i32, i32
  }
  func.func @transform_2(%arg0: i32) -> i32 {
    %c0_i32 = arith.constant 0 : i32
    %c0_i32_0 = arith.constant 0 : i32
    return %c0_i32 : i32
  }
  func.func @transform_3(%arg0: i32) -> i32 {
    %c0_i32 = arith.constant 0 : i32
    %c0_i32_0 = arith.constant 0 : i32
    return %c0_i32 : i32
  }
  func.func @transform_4(%arg0: i32) -> (i32, i32) {
    %c0_i32 = arith.constant 0 : i32
    %c0_i32_0 = arith.constant 0 : i32
    return %arg0, %c0_i32 : i32, i32
  }
}

</mosaic_0001>

<llo_original>
// kernel: tpu_custom_call.1
$region0: #{tpu_custom_call.1}
  #allocation0 [shape = 'u32[]', space=smem, size = 0x4, offset = 0x4, fixed_abs, tag = 'smem constant byte address 0x4 - core index']
  #allocation1 [shape = 'u32[144,128]{1,0:T(1,128)}', space=vmem, size = 0x12000, scoped, tag = 'internal scratch']
  #allocation2 [shape = 'f32[1]{0:T(128)S(6)}', space=smem, size = 0x200, scoped, tag = 'scoped memory for tpu_custom_call.1']
  %s0 = inlined_call_operand.hbm [shape: f32[2,4,256], index: 0, kind: input, shape index: {}]
  %s1 = inlined_call_operand.hbm [shape: f32[14,256], index: 1, kind: input, shape index: {}]
  %s2 = inlined_call_operand.hbm [shape: f32[98], index: 2, kind: input, shape index: {}]
  %s3 = inlined_call_operand.<no memory space> [shape: f32[1], index: 3, kind: input, shape index: {}]
  %s4 = inlined_call_operand.hbm [shape: f32[2,256], index: 4, kind: output, shape index: {}]
  %s5 = sld [smem:[#allocation0]]
  $region38: #{tpu_custom_call.1} parent=0
    _
  %s7 = ssub.s32 1, %s5
  %s8 = scalar_select 0, %s7, %s5
  %9 = sst [smem:[#allocation2]] %s3
  $region1: #{tpu_custom_call.1} parent=0
    #allocation3 [shape = 'u8[8192]{0}', space=vmem, size = 0x2000, scoped, tag = 'input window, operand 0, single buffered']
    #allocation4 [shape = 's32[1]{0}', space=sflag, size = 0x4, scoped, tag = 'scoped memory for tpu_custom_call.1']
    #allocation5 [shape = 's32[1]{0}', space=sflag, size = 0x4, scoped, tag = 'scoped memory for tpu_custom_call.1']
    #allocation6 [shape = 's32[1]{0}', space=sflag, size = 0x4, scoped, tag = 'scoped memory for tpu_custom_call.1']
    #allocation7 [shape = 'u8[16384]{0}', space=vmem, size = 0x4000, scoped, tag = 'input window, operand 1, single buffered']
    #allocation8 [shape = 's32[1]{0}', space=sflag, size = 0x4, scoped, tag = 'scoped memory for tpu_custom_call.1']
    #allocation9 [shape = 'u8[512]{0}', space=smem, size = 0x200, scoped, tag = 'input window, operand 2, single buffered']
    #allocation10 [shape = 'u8[2048]{0}', space=vmem, size = 0x800, scoped, tag = 'output window, operand 0, single buffered']
    %10 = vsyncpa [#allocation4], 0
    %11 = vsyncpa [#allocation8], 0
    %12 = vsyncpa [#allocation6], 0
    %13 = vsyncpa [#allocation5], 0
    // Predicated region
    $region2: #{tpu_custom_call.1} parent=1 // pred_check
      _
    $region3: #{tpu_custom_call.1} parent=1 // pred_check_branch
      %15 = sbr.rel (0) target = $region5
    $region4: #{tpu_custom_call.1} parent=1 // pred_region
      %s17 = ssub.s32 256, 256
      %18 = vsyncadd [#allocation4], %s17
      %s19 = sshll.u32 [#allocation3], 4
      %s20 = int_to_ptr.vmem [resolvable:$true] %s19
      %25 = dma.hbm_to_vmem [thread:$0]  %s0, 256, %s20, [#allocation4], 128, 128, 8
    $region5: #{tpu_custom_call.1} parent=1 // pred_fallthru
      _
    // Predicated region
    $region6: #{tpu_custom_call.1} parent=1 // pred_check
      _
    $region7: #{tpu_custom_call.1} parent=1 // pred_check_branch
      %27 = sbr.rel (0) target = $region9
    $region8: #{tpu_custom_call.1} parent=1 // pred_region
      %s29 = ssub.s32 512, 512
      %30 = vsyncadd [#allocation8], %s29
      %s31 = sshll.u32 [#allocation7], 4
      %s32 = int_to_ptr.vmem [resolvable:$true] %s31
      %37 = dma.hbm_to_vmem [thread:$0]  %s1, 512, %s32, [#allocation8], 256, 256, 16
    $region9: #{tpu_custom_call.1} parent=1 // pred_fallthru
      _
    // Predicated region
    $region10: #{tpu_custom_call.1} parent=1 // pred_check
      _
    $region11: #{tpu_custom_call.1} parent=1 // pred_check_branch
      %39 = sbr.rel (0) target = $region13
    $region12: #{tpu_custom_call.1} parent=1 // pred_region
      %s41 = ssub.s32 16, 16
      %42 = vsyncadd [#allocation6], %s41
      %45 = dma.hbm_to_smem %s2, 16, [#allocation9], [#allocation6]
    $region13: #{tpu_custom_call.1} parent=1 // pred_fallthru
      _
    // Predicated region
    $region14: #{tpu_custom_call.1} parent=1 // pred_check
      _
    $region15: #{tpu_custom_call.1} parent=1 // pred_check_branch
      %47 = sbr.rel (0) target = $region17
    $region16: #{tpu_custom_call.1} parent=1 // pred_region
      _
    $region17: #{tpu_custom_call.1} parent=1 // pred_fallthru
      _
    // Predicated region
    $region18: #{tpu_custom_call.1} parent=1 // pred_check
      _
    $region19: #{tpu_custom_call.1} parent=1 // pred_check_branch
      %49 = sbr.rel (0) target = $region21
    $region20: #{tpu_custom_call.1} parent=1 // pred_region
      %50 = dma.done [#allocation4], 256
    $region21: #{tpu_custom_call.1} parent=1 // pred_fallthru
      _
    // Predicated region
    $region22: #{tpu_custom_call.1} parent=1 // pred_check
      _
    $region23: #{tpu_custom_call.1} parent=1 // pred_check_branch
      %52 = sbr.rel (0) target = $region25
    $region24: #{tpu_custom_call.1} parent=1 // pred_region
      %53 = dma.done [#allocation8], 512
    $region25: #{tpu_custom_call.1} parent=1 // pred_fallthru
      _
    // Predicated region
    $region26: #{tpu_custom_call.1} parent=1 // pred_check
      _
    $region27: #{tpu_custom_call.1} parent=1 // pred_check_branch
      %55 = sbr.rel (0) target = $region29
    $region28: #{tpu_custom_call.1} parent=1 // pred_region
      %56 = dma.done [#allocation6], 16
    $region29: #{tpu_custom_call.1} parent=1 // pred_fallthru
      _
    %57 = sfence
    %v58 = vld [vmem:[#allocation3] sm:$0xff]
    %v59 = vld [vmem:[#allocation3 + $0x8] sm:$0xff]
    %v62 = vcombine.high %v58, %v58
    %v63 = vcombine.high %v59, %v59
    %vm66 = vcmask 1043456
    %v67 = vsel %vm66, %v58, -inf
    %v68 = vrot.slane %v67, 4
    %v69 = vmax.f32 %v67, %v68
    %v70 = vrot.slane %v69, 2
    %v71 = vmax.f32 %v69, %v70
    %v72 = vrot.slane %v71, 1
    %v73 = vmax.f32 %v71, %v72
    %v74 = vsel %vm66, %v62, -inf
    %v75 = vrot.slane %v74, 4
    %v76 = vmax.f32 %v74, %v75
    %v77 = vrot.slane %v76, 2
    %v78 = vmax.f32 %v76, %v77
    %v79 = vrot.slane %v78, 1
    %v80 = vmax.f32 %v78, %v79
    %v81 = vsel %vm66, %v59, -inf
    %v82 = vrot.slane %v81, 4
    %v83 = vmax.f32 %v81, %v82
    %v84 = vrot.slane %v83, 2
    %v85 = vmax.f32 %v83, %v84
    %v86 = vrot.slane %v85, 1
    %v87 = vmax.f32 %v85, %v86
    %v88 = vsel %vm66, %v63, -inf
    %v89 = vrot.slane %v88, 4
    %v90 = vmax.f32 %v88, %v89
    %v91 = vrot.slane %v90, 2
    %v92 = vmax.f32 %v90, %v91
    %v93 = vrot.slane %v92, 1
    %v94 = vmax.f32 %v92, %v93
    %v95 = vsel %vm66, %v58, 0.0
    %v96 = vrot.slane %v95, 4
    %v97 = vadd.f32 %v95, %v96
    %v98 = vrot.slane %v97, 2
    %v99 = vadd.f32 %v97, %v98
    %v100 = vrot.slane %v99, 1
    %v101 = vadd.f32 %v99, %v100
    %v102 = vsel %vm66, %v62, 0.0
    %v103 = vrot.slane %v102, 4
    %v104 = vadd.f32 %v102, %v103
    %v105 = vrot.slane %v104, 2
    %v106 = vadd.f32 %v104, %v105
    %v107 = vrot.slane %v106, 1
    %v108 = vadd.f32 %v106, %v107
    %v109 = vsel %vm66, %v59, 0.0
    %v110 = vrot.slane %v109, 4
    %v111 = vadd.f32 %v109, %v110
    %v112 = vrot.slane %v111, 2
    %v113 = vadd.f32 %v111, %v112
    %v114 = vrot.slane %v113, 1
    %v115 = vadd.f32 %v113, %v114
    %v116 = vsel %vm66, %v63, 0.0
    %v117 = vrot.slane %v116, 4
    %v118 = vadd.f32 %v116, %v117
    %v119 = vrot.slane %v118, 2
    %v120 = vadd.f32 %v118, %v119
    %v121 = vrot.slane %v120, 1
    %v122 = vadd.f32 %v120, %v121
    %v123 = vmul.f32 %v101, 0.25
    %v124 = vmul.f32 %v108, 0.25
    %v125 = vmul.f32 %v115, 0.25
    %v126 = vmul.f32 %v122, 0.25
    %v127 = vld [vmem:[#allocation7] ss:$8 sm:$0x3]
    %s128 = scalar_lea.vmem [#allocation7], 7
    %v129 = vld [vmem:[%s128] ss:$8 sm:$0x3]
    %v130 = vmul.f32 %v127, %v129
    %s131 = sld [smem:[#allocation9]]
    %v132 = vstv %s131
    %v133 = vmul.f32 %v130, %v132
    %s134 = sld [smem:[#allocation9 + $0x31]]
    %v135 = vstv %s134
    %v136 = vmul.f32 %v130, %v135
    %vm141 = vcmask 1041409
    %v142 = vsel %vm141, %v87, %v73
    %v143 = vsel %vm141, %v94, %v80
    %146 = vrot.lane.b32.xlu0 %v142, 51
    %v147 = vpop.permute.xlu0 %146
    %148 = vrot.lane.b32.xlu0 %v143, 51
    %v149 = vpop.permute.xlu0 %148
    %v150 = vlaneseq
    %v151 = vand.u32 %v150, 127
    %vm152 = vcmp.lt.s32.totalorder %v151, 51
    %v153 = vsel %vm152, %v147, %v149
    %v154 = vsel %vm152, %v149, %v147
    %v159 = vsel %vm141, %v125, %v123
    %v160 = vsel %vm141, %v126, %v124
    %163 = vrot.lane.b32.xlu0 %v159, 51
    %v164 = vpop.permute.xlu0 %163
    %165 = vrot.lane.b32.xlu0 %v160, 51
    %v166 = vpop.permute.xlu0 %165
    %v167 = vsel %vm152, %v164, %v166
    %v168 = vsel %vm152, %v166, %v164
    %v170 = vlaneseq
    %v171 = vshrl.u32 %v170, 7
    %v172 = vsub.s32 0, %v171
    %v173 = vrot.slane %v133, %v172
    %v174 = vlaneseq
    %v175 = vshrl.u32 %v174, 7
    %v176 = vsub.s32 1, %v175
    %v177 = vrot.slane %v133, %v176
    %v180 = vmul.f32 %v154, %v173
    %v181 = vmul.f32 %v153, %v177
    %v182 = vadd.f32 %v180, 0.0
    %v183 = vadd.f32 %v181, 0.0
    %v185 = vlaneseq
    %v186 = vshrl.u32 %v185, 7
    %v187 = vsub.s32 0, %v186
    %v188 = vrot.slane %v136, %v187
    %v189 = vlaneseq
    %v190 = vshrl.u32 %v189, 7
    %v191 = vsub.s32 1, %v190
    %v192 = vrot.slane %v136, %v191
    %v195 = vmul.f32 %v168, %v188
    %v196 = vmul.f32 %v167, %v192
    %v197 = vadd.f32 %v195, 0.0
    %v198 = vadd.f32 %v196, 0.0
    %s199 = scalar_lea.vmem [#allocation7], 16
    %v200 = vld [vmem:[%s199] ss:$8 sm:$0x3]
    %v201 = vmul.f32 %v127, %v200
    %s202 = sld [smem:[#allocation9 + $0x1]]
    %v203 = vstv %s202
    %v204 = vmul.f32 %v201, %v203
    %s205 = sld [smem:[#allocation9 + $0x32]]
    %v206 = vstv %s205
    %v207 = vmul.f32 %v201, %v206
    %208 = vrot.lane.b32.xlu0 %v142, 50
    %v209 = vpop.permute.xlu0 %208
    %210 = vrot.lane.b32.xlu0 %v143, 50
    %v211 = vpop.permute.xlu0 %210
    %vm212 = vcmp.lt.s32.totalorder %v151, 50
    %v213 = vsel %vm212, %v209, %v211
    %v214 = vsel %vm212, %v211, %v209
    %215 = vrot.lane.b32.xlu0 %v159, 50
    %v216 = vpop.permute.xlu0 %215
    %217 = vrot.lane.b32.xlu0 %v160, 50
    %v218 = vpop.permute.xlu0 %217
    %v219 = vsel %vm212, %v216, %v218
    %v220 = vsel %vm212, %v218, %v216
    %v222 = vlaneseq
    %v223 = vshrl.u32 %v222, 7
    %v224 = vsub.s32 0, %v223
    %v225 = vrot.slane %v204, %v224
    %v226 = vlaneseq
    %v227 = vshrl.u32 %v226, 7
    %v228 = vsub.s32 1, %v227
    %v229 = vrot.slane %v204, %v228
    %v232 = vmul.f32 %v214, %v225
    %v233 = vmul.f32 %v213, %v229
    %v234 = vadd.f32 %v182, %v232
    %v235 = vadd.f32 %v183, %v233
    %v237 = vlaneseq
    %v238 = vshrl.u32 %v237, 7
    %v239 = vsub.s32 0, %v238
    %v240 = vrot.slane %v207, %v239
    %v241 = vlaneseq
    %v242 = vshrl.u32 %v241, 7
    %v243 = vsub.s32 1, %v242
    %v244 = vrot.slane %v207, %v243
    %v247 = vmul.f32 %v220, %v240
    %v248 = vmul.f32 %v219, %v244
    %v249 = vadd.f32 %v197, %v247
    %v250 = vadd.f32 %v198, %v248
    %s251 = scalar_lea.vmem [#allocation7], 17
    %v252 = vld [vmem:[%s251] ss:$8 sm:$0x3]
    %v253 = vmul.f32 %v127, %v252
    %s254 = sld [smem:[#allocation9 + $0x2]]
    %v255 = vstv %s254
    %v256 = vmul.f32 %v253, %v255
    %s257 = sld [smem:[#allocation9 + $0x33]]
    %v258 = vstv %s257
    %v259 = vmul.f32 %v253, %v258
    %260 = vrot.lane.b32.xlu0 %v142, 49
    %v261 = vpop.permute.xlu0 %260
    %262 = vrot.lane.b32.xlu0 %v143, 49
    %v263 = vpop.permute.xlu0 %262
    %vm264 = vcmp.lt.s32.totalorder %v151, 49
    %v265 = vsel %vm264, %v261, %v263
    %v266 = vsel %vm264, %v263, %v261
    %267 = vrot.lane.b32.xlu0 %v159, 49
    %v268 = vpop.permute.xlu0 %267
    %269 = vrot.lane.b32.xlu0 %v160, 49
    %v270 = vpop.permute.xlu0 %269
    %v271 = vsel %vm264, %v268, %v270
    %v272 = vsel %vm264, %v270, %v268
    %v274 = vlaneseq
    %v275 = vshrl.u32 %v274, 7
    %v276 = vsub.s32 0, %v275
    %v277 = vrot.slane %v256, %v276
    %v278 = vlaneseq
    %v279 = vshrl.u32 %v278, 7
    %v280 = vsub.s32 1, %v279
    %v281 = vrot.slane %v256, %v280
    %v284 = vmul.f32 %v266, %v277
    %v285 = vmul.f32 %v265, %v281
    %v286 = vadd.f32 %v234, %v284
    %v287 = vadd.f32 %v235, %v285
    %v289 = vlaneseq
    %v290 = vshrl.u32 %v289, 7
    %v291 = vsub.s32 0, %v290
    %v292 = vrot.slane %v259, %v291
    %v293 = vlaneseq
    %v294 = vshrl.u32 %v293, 7
    %v295 = vsub.s32 1, %v294
    %v296 = vrot.slane %v259, %v295
    %v299 = vmul.f32 %v272, %v292
    %v300 = vmul.f32 %v271, %v296
    %v301 = vadd.f32 %v249, %v299
    %v302 = vadd.f32 %v250, %v300
    %s303 = scalar_lea.vmem [#allocation7], 18
    %v304 = vld [vmem:[%s303] ss:$8 sm:$0x3]
    %v305 = vmul.f32 %v127, %v304
    %s306 = sld [smem:[#allocation9 + $0x3]]
    %v307 = vstv %s306
    %v308 = vmul.f32 %v305, %v307
    %s309 = sld [smem:[#allocation9 + $0x34]]
    %v310 = vstv %s309
    %v311 = vmul.f32 %v305, %v310
    %312 = vrot.lane.b32.xlu0 %v142, 48
    %v313 = vpop.permute.xlu0 %312
    %314 = vrot.lane.b32.xlu0 %v143, 48
    %v315 = vpop.permute.xlu0 %314
    %vm316 = vcmp.lt.s32.totalorder %v151, 48
    %v317 = vsel %vm316, %v313, %v315
    %v318 = vsel %vm316, %v315, %v313
    %319 = vrot.lane.b32.xlu0 %v159, 48
    %v320 = vpop.permute.xlu0 %319
    %321 = vrot.lane.b32.xlu0 %v160, 48
    %v322 = vpop.permute.xlu0 %321
    %v323 = vsel %vm316, %v320, %v322
    %v324 = vsel %vm316, %v322, %v320
    %v326 = vlaneseq
    %v327 = vshrl.u32 %v326, 7
    %v328 = vsub.s32 0, %v327
    %v329 = vrot.slane %v308, %v328
    %v330 = vlaneseq
    %v331 = vshrl.u32 %v330, 7
    %v332 = vsub.s32 1, %v331
    %v333 = vrot.slane %v308, %v332
    %v336 = vmul.f32 %v318, %v329
    %v337 = vmul.f32 %v317, %v333
    %v338 = vadd.f32 %v286, %v336
    %v339 = vadd.f32 %v287, %v337
    %v341 = vlaneseq
    %v342 = vshrl.u32 %v341, 7
    %v343 = vsub.s32 0, %v342
    %v344 = vrot.slane %v311, %v343
    %v345 = vlaneseq
    %v346 = vshrl.u32 %v345, 7
    %v347 = vsub.s32 1, %v346
    %v348 = vrot.slane %v311, %v347
    %v351 = vmul.f32 %v324, %v344
    %v352 = vmul.f32 %v323, %v348
    %v353 = vadd.f32 %v301, %v351
    %v354 = vadd.f32 %v302, %v352
    %s355 = scalar_lea.vmem [#allocation7], 19
    %v356 = vld [vmem:[%s355] ss:$8 sm:$0x3]
    %v357 = vmul.f32 %v127, %v356
    %s358 = sld [smem:[#allocation9 + $0x4]]
    %v359 = vstv %s358
    %v360 = vmul.f32 %v357, %v359
    %s361 = sld [smem:[#allocation9 + $0x35]]
    %v362 = vstv %s361
    %v363 = vmul.f32 %v357, %v362
    %364 = vrot.lane.b32.xlu0 %v142, 47
    %v365 = vpop.permute.xlu0 %364
    %366 = vrot.lane.b32.xlu0 %v143, 47
    %v367 = vpop.permute.xlu0 %366
    %vm368 = vcmp.lt.s32.totalorder %v151, 47
    %v369 = vsel %vm368, %v365, %v367
    %v370 = vsel %vm368, %v367, %v365
    %371 = vrot.lane.b32.xlu0 %v159, 47
    %v372 = vpop.permute.xlu0 %371
    %373 = vrot.lane.b32.xlu0 %v160, 47
    %v374 = vpop.permute.xlu0 %373
    %v375 = vsel %vm368, %v372, %v374
    %v376 = vsel %vm368, %v374, %v372
    %v378 = vlaneseq
    %v379 = vshrl.u32 %v378, 7
    %v380 = vsub.s32 0, %v379
    %v381 = vrot.slane %v360, %v380
    %v382 = vlaneseq
    %v383 = vshrl.u32 %v382, 7
    %v384 = vsub.s32 1, %v383
    %v385 = vrot.slane %v360, %v384
    %v388 = vmul.f32 %v370, %v381
    %v389 = vmul.f32 %v369, %v385
    %v390 = vadd.f32 %v338, %v388
    %v391 = vadd.f32 %v339, %v389
    %v393 = vlaneseq
    %v394 = vshrl.u32 %v393, 7
    %v395 = vsub.s32 0, %v394
    %v396 = vrot.slane %v363, %v395
    %v397 = vlaneseq
    %v398 = vshrl.u32 %v397, 7
    %v399 = vsub.s32 1, %v398
    %v400 = vrot.slane %v363, %v399
    %v403 = vmul.f32 %v376, %v396
    %v404 = vmul.f32 %v375, %v400
    %v405 = vadd.f32 %v353, %v403
    %v406 = vadd.f32 %v354, %v404
    %s407 = scalar_lea.vmem [#allocation7], 20
    %v408 = vld [vmem:[%s407] ss:$8 sm:$0x3]
    %v409 = vmul.f32 %v127, %v408
    %s410 = sld [smem:[#allocation9 + $0x5]]
    %v411 = vstv %s410
    %v412 = vmul.f32 %v409, %v411
    %s413 = sld [smem:[#allocation9 + $0x36]]
    %v414 = vstv %s413
    %v415 = vmul.f32 %v409, %v414
    %416 = vrot.lane.b32.xlu0 %v142, 46
    %v417 = vpop.permute.xlu0 %416
    %418 = vrot.lane.b32.xlu0 %v143, 46
    %v419 = vpop.permute.xlu0 %418
    %vm420 = vcmp.lt.s32.totalorder %v151, 46
    %v421 = vsel %vm420, %v417, %v419
    %v422 = vsel %vm420, %v419, %v417
    %423 = vrot.lane.b32.xlu0 %v159, 46
    %v424 = vpop.permute.xlu0 %423
    %425 = vrot.lane.b32.xlu0 %v160, 46
    %v426 = vpop.permute.xlu0 %425
    %v427 = vsel %vm420, %v424, %v426
    %v428 = vsel %vm420, %v426, %v424
    %v430 = vlaneseq
    %v431 = vshrl.u32 %v430, 7
    %v432 = vsub.s32 0, %v431
    %v433 = vrot.slane %v412, %v432
    %v434 = vlaneseq
    %v435 = vshrl.u32 %v434, 7
    %v436 = vsub.s32 1, %v435
    %v437 = vrot.slane %v412, %v436
    %v440 = vmul.f32 %v422, %v433
    %v441 = vmul.f32 %v421, %v437
    %v442 = vadd.f32 %v390, %v440
    %v443 = vadd.f32 %v391, %v441
    %v445 = vlaneseq
    %v446 = vshrl.u32 %v445, 7
    %v447 = vsub.s32 0, %v446
    %v448 = vrot.slane %v415, %v447
    %v449 = vlaneseq
    %v450 = vshrl.u32 %v449, 7
    %v451 = vsub.s32 1, %v450
    %v452 = vrot.slane %v415, %v451
    %v455 = vmul.f32 %v428, %v448
    %v456 = vmul.f32 %v427, %v452
    %v457 = vadd.f32 %v405, %v455
    %v458 = vadd.f32 %v406, %v456
    %s459 = scalar_lea.vmem [#allocation7], 21
    %v460 = vld [vmem:[%s459] ss:$8 sm:$0x3]
    %v461 = vmul.f32 %v127, %v460
    %s462 = sld [smem:[#allocation9 + $0x6]]
    %v463 = vstv %s462
    %v464 = vmul.f32 %v461, %v463
    %s465 = sld [smem:[#allocation9 + $0x37]]
    %v466 = vstv %s465
    %v467 = vmul.f32 %v461, %v466
    %468 = vrot.lane.b32.xlu0 %v142, 45
    %v469 = vpop.permute.xlu0 %468
    %470 = vrot.lane.b32.xlu0 %v143, 45
    %v471 = vpop.permute.xlu0 %470
    %vm472 = vcmp.lt.s32.totalorder %v151, 45
    %v473 = vsel %vm472, %v469, %v471
    %v474 = vsel %vm472, %v471, %v469
    %475 = vrot.lane.b32.xlu0 %v159, 45
    %v476 = vpop.permute.xlu0 %475
    %477 = vrot.lane.b32.xlu0 %v160, 45
    %v478 = vpop.permute.xlu0 %477
    %v479 = vsel %vm472, %v476, %v478
    %v480 = vsel %vm472, %v478, %v476
    %v482 = vlaneseq
    %v483 = vshrl.u32 %v482, 7
    %v484 = vsub.s32 0, %v483
    %v485 = vrot.slane %v464, %v484
    %v486 = vlaneseq
    %v487 = vshrl.u32 %v486, 7
    %v488 = vsub.s32 1, %v487
    %v489 = vrot.slane %v464, %v488
    %v492 = vmul.f32 %v474, %v485
    %v493 = vmul.f32 %v473, %v489
    %v494 = vadd.f32 %v442, %v492
    %v495 = vadd.f32 %v443, %v493
    %v497 = vlaneseq
    %v498 = vshrl.u32 %v497, 7
    %v499 = vsub.s32 0, %v498
    %v500 = vrot.slane %v467, %v499
    %v501 = vlaneseq
    %v502 = vshrl.u32 %v501, 7
    %v503 = vsub.s32 1, %v502
    %v504 = vrot.slane %v467, %v503
    %v507 = vmul.f32 %v480, %v500
    %v508 = vmul.f32 %v479, %v504
    %v509 = vadd.f32 %v457, %v507
    %v510 = vadd.f32 %v458, %v508
    %s511 = scalar_lea.vmem [#allocation7], 1
    %v512 = vld [vmem:[%s511] ss:$8 sm:$0x3]
    %v513 = vmul.f32 %v512, %v129
    %s514 = sld [smem:[#allocation9 + $0x7]]
    %v515 = vstv %s514
    %v516 = vmul.f32 %v513, %v515
    %s517 = sld [smem:[#allocation9 + $0x38]]
    %v518 = vstv %s517
    %v519 = vmul.f32 %v513, %v518
    %520 = vrot.lane.b32.xlu0 %v142, 35
    %v521 = vpop.permute.xlu0 %520
    %522 = vrot.lane.b32.xlu0 %v143, 35
    %v523 = vpop.permute.xlu0 %522
    %vm524 = vcmp.lt.s32.totalorder %v151, 35
    %v525 = vsel %vm524, %v521, %v523
    %v526 = vsel %vm524, %v523, %v521
    %527 = vrot.lane.b32.xlu0 %v159, 35
    %v528 = vpop.permute.xlu0 %527
    %529 = vrot.lane.b32.xlu0 %v160, 35
    %v530 = vpop.permute.xlu0 %529
    %v531 = vsel %vm524, %v528, %v530
    %v532 = vsel %vm524, %v530, %v528
    %v534 = vlaneseq
    %v535 = vshrl.u32 %v534, 7
    %v536 = vsub.s32 0, %v535
    %v537 = vrot.slane %v516, %v536
    %v538 = vlaneseq
    %v539 = vshrl.u32 %v538, 7
    %v540 = vsub.s32 1, %v539
    %v541 = vrot.slane %v516, %v540
    %v544 = vmul.f32 %v526, %v537
    %v545 = vmul.f32 %v525, %v541
    %v546 = vadd.f32 %v494, %v544
    %v547 = vadd.f32 %v495, %v545
    %v549 = vlaneseq
    %v550 = vshrl.u32 %v549, 7
    %v551 = vsub.s32 0, %v550
    %v552 = vrot.slane %v519, %v551
    %v553 = vlaneseq
    %v554 = vshrl.u32 %v553, 7
    %v555 = vsub.s32 1, %v554
    %v556 = vrot.slane %v519, %v555
    %v559 = vmul.f32 %v532, %v552
    %v560 = vmul.f32 %v531, %v556
    %v561 = vadd.f32 %v509, %v559
    %v562 = vadd.f32 %v510, %v560
    %v563 = vmul.f32 %v512, %v200
    %s564 = sld [smem:[#allocation9 + $0x8]]
    %v565 = vstv %s564
    %v566 = vmul.f32 %v563, %v565
    %s567 = sld [smem:[#allocation9 + $0x39]]
    %v568 = vstv %s567
    %v569 = vmul.f32 %v563, %v568
    %570 = vrot.lane.b32.xlu0 %v142, 34
    %v571 = vpop.permute.xlu0 %570
    %572 = vrot.lane.b32.xlu0 %v143, 34
    %v573 = vpop.permute.xlu0 %572
    %vm574 = vcmp.lt.s32.totalorder %v151, 34
    %v575 = vsel %vm574, %v571, %v573
    %v576 = vsel %vm574, %v573, %v571
    %577 = vrot.lane.b32.xlu0 %v159, 34
    %v578 = vpop.permute.xlu0 %577
    %579 = vrot.lane.b32.xlu0 %v160, 34
    %v580 = vpop.permute.xlu0 %579
    %v581 = vsel %vm574, %v578, %v580
    %v582 = vsel %vm574, %v580, %v578
    %v584 = vlaneseq
    %v585 = vshrl.u32 %v584, 7
    %v586 = vsub.s32 0, %v585
    %v587 = vrot.slane %v566, %v586
    %v588 = vlaneseq
    %v589 = vshrl.u32 %v588, 7
    %v590 = vsub.s32 1, %v589
    %v591 = vrot.slane %v566, %v590
    %v594 = vmul.f32 %v576, %v587
    %v595 = vmul.f32 %v575, %v591
    %v596 = vadd.f32 %v546, %v594
    %v597 = vadd.f32 %v547, %v595
    %v599 = vlaneseq
    %v600 = vshrl.u32 %v599, 7
    %v601 = vsub.s32 0, %v600
    %v602 = vrot.slane %v569, %v601
    %v603 = vlaneseq
    %v604 = vshrl.u32 %v603, 7
    %v605 = vsub.s32 1, %v604
    %v606 = vrot.slane %v569, %v605
    %v609 = vmul.f32 %v582, %v602
    %v610 = vmul.f32 %v581, %v606
    %v611 = vadd.f32 %v561, %v609
    %v612 = vadd.f32 %v562, %v610
    %v613 = vmul.f32 %v512, %v252
    %s614 = sld [smem:[#allocation9 + $0x9]]
    %v615 = vstv %s614
    %v616 = vmul.f32 %v613, %v615
    %s617 = sld [smem:[#allocation9 + $0x3a]]
    %v618 = vstv %s617
    %v619 = vmul.f32 %v613, %v618
    %620 = vrot.lane.b32.xlu0 %v142, 33
    %v621 = vpop.permute.xlu0 %620
    %622 = vrot.lane.b32.xlu0 %v143, 33
    %v623 = vpop.permute.xlu0 %622
    %vm624 = vcmp.lt.s32.totalorder %v151, 33
    %v625 = vsel %vm624, %v621, %v623
    %v626 = vsel %vm624, %v623, %v621
    %627 = vrot.lane.b32.xlu0 %v159, 33
    %v628 = vpop.permute.xlu0 %627
    %629 = vrot.lane.b32.xlu0 %v160, 33
    %v630 = vpop.permute.xlu0 %629
    %v631 = vsel %vm624, %v628, %v630
    %v632 = vsel %vm624, %v630, %v628
    %v634 = vlaneseq
    %v635 = vshrl.u32 %v634, 7
    %v636 = vsub.s32 0, %v635
    %v637 = vrot.slane %v616, %v636
    %v638 = vlaneseq
    %v639 = vshrl.u32 %v638, 7
    %v640 = vsub.s32 1, %v639
    %v641 = vrot.slane %v616, %v640
    %v644 = vmul.f32 %v626, %v637
    %v645 = vmul.f32 %v625, %v641
    %v646 = vadd.f32 %v596, %v644
    %v647 = vadd.f32 %v597, %v645
    %v649 = vlaneseq
    %v650 = vshrl.u32 %v649, 7
    %v651 = vsub.s32 0, %v650
    %v652 = vrot.slane %v619, %v651
    %v653 = vlaneseq
    %v654 = vshrl.u32 %v653, 7
    %v655 = vsub.s32 1, %v654
    %v656 = vrot.slane %v619, %v655
    %v659 = vmul.f32 %v632, %v652
    %v660 = vmul.f32 %v631, %v656
    %v661 = vadd.f32 %v611, %v659
    %v662 = vadd.f32 %v612, %v660
    %v663 = vmul.f32 %v512, %v304
    %s664 = sld [smem:[#allocation9 + $0xa]]
    %v665 = vstv %s664
    %v666 = vmul.f32 %v663, %v665
    %s667 = sld [smem:[#allocation9 + $0x3b]]
    %v668 = vstv %s667
    %v669 = vmul.f32 %v663, %v668
    %670 = vrot.lane.b32.xlu0 %v142, 32
    %v671 = vpop.permute.xlu0 %670
    %672 = vrot.lane.b32.xlu0 %v143, 32
    %v673 = vpop.permute.xlu0 %672
    %vm674 = vcmp.lt.s32.totalorder %v151, 32
    %v675 = vsel %vm674, %v671, %v673
    %v676 = vsel %vm674, %v673, %v671
    %677 = vrot.lane.b32.xlu0 %v159, 32
    %v678 = vpop.permute.xlu0 %677
    %679 = vrot.lane.b32.xlu0 %v160, 32
    %v680 = vpop.permute.xlu0 %679
    %v681 = vsel %vm674, %v678, %v680
    %v682 = vsel %vm674, %v680, %v678
    %v684 = vlaneseq
    %v685 = vshrl.u32 %v684, 7
    %v686 = vsub.s32 0, %v685
    %v687 = vrot.slane %v666, %v686
    %v688 = vlaneseq
    %v689 = vshrl.u32 %v688, 7
    %v690 = vsub.s32 1, %v689
    %v691 = vrot.slane %v666, %v690
    %v694 = vmul.f32 %v676, %v687
    %v695 = vmul.f32 %v675, %v691
    %v696 = vadd.f32 %v646, %v694
    %v697 = vadd.f32 %v647, %v695
    %v699 = vlaneseq
    %v700 = vshrl.u32 %v699, 7
    %v701 = vsub.s32 0, %v700
    %v702 = vrot.slane %v669, %v701
    %v703 = vlaneseq
    %v704 = vshrl.u32 %v703, 7
    %v705 = vsub.s32 1, %v704
    %v706 = vrot.slane %v669, %v705
    %v709 = vmul.f32 %v682, %v702
    %v710 = vmul.f32 %v681, %v706
    %v711 = vadd.f32 %v661, %v709
    %v712 = vadd.f32 %v662, %v710
    %v713 = vmul.f32 %v512, %v356
    %s714 = sld [smem:[#allocation9 + $0xb]]
    %v715 = vstv %s714
    %v716 = vmul.f32 %v713, %v715
    %s717 = sld [smem:[#allocation9 + $0x3c]]
    %v718 = vstv %s717
    %v719 = vmul.f32 %v713, %v718
    %720 = vrot.lane.b32.xlu0 %v142, 31
    %v721 = vpop.permute.xlu0 %720
    %722 = vrot.lane.b32.xlu0 %v143, 31
    %v723 = vpop.permute.xlu0 %722
    %vm724 = vcmp.lt.s32.totalorder %v151, 31
    %v725 = vsel %vm724, %v721, %v723
    %v726 = vsel %vm724, %v723, %v721
    %727 = vrot.lane.b32.xlu0 %v159, 31
    %v728 = vpop.permute.xlu0 %727
    %729 = vrot.lane.b32.xlu0 %v160, 31
    %v730 = vpop.permute.xlu0 %729
    %v731 = vsel %vm724, %v728, %v730
    %v732 = vsel %vm724, %v730, %v728
    %v734 = vlaneseq
    %v735 = vshrl.u32 %v734, 7
    %v736 = vsub.s32 0, %v735
    %v737 = vrot.slane %v716, %v736
    %v738 = vlaneseq
    %v739 = vshrl.u32 %v738, 7
    %v740 = vsub.s32 1, %v739
    %v741 = vrot.slane %v716, %v740
    %v744 = vmul.f32 %v726, %v737
    %v745 = vmul.f32 %v725, %v741
    %v746 = vadd.f32 %v696, %v744
    %v747 = vadd.f32 %v697, %v745
    %v749 = vlaneseq
    %v750 = vshrl.u32 %v749, 7
    %v751 = vsub.s32 0, %v750
    %v752 = vrot.slane %v719, %v751
    %v753 = vlaneseq
    %v754 = vshrl.u32 %v753, 7
    %v755 = vsub.s32 1, %v754
    %v756 = vrot.slane %v719, %v755
    %v759 = vmul.f32 %v732, %v752
    %v760 = vmul.f32 %v731, %v756
    %v761 = vadd.f32 %v711, %v759
    %v762 = vadd.f32 %v712, %v760
    %v763 = vmul.f32 %v512, %v408
    %s764 = sld [smem:[#allocation9 + $0xc]]
    %v765 = vstv %s764
    %v766 = vmul.f32 %v763, %v765
    %s767 = sld [smem:[#allocation9 + $0x3d]]
    %v768 = vstv %s767
    %v769 = vmul.f32 %v763, %v768
    %770 = vrot.lane.b32.xlu0 %v142, 30
    %v771 = vpop.permute.xlu0 %770
    %772 = vrot.lane.b32.xlu0 %v143, 30
    %v773 = vpop.permute.xlu0 %772
    %vm774 = vcmp.lt.s32.totalorder %v151, 30
    %v775 = vsel %vm774, %v771, %v773
    %v776 = vsel %vm774, %v773, %v771
    %777 = vrot.lane.b32.xlu0 %v159, 30
    %v778 = vpop.permute.xlu0 %777
    %779 = vrot.lane.b32.xlu0 %v160, 30
    %v780 = vpop.permute.xlu0 %779
    %v781 = vsel %vm774, %v778, %v780
    %v782 = vsel %vm774, %v780, %v778
    %v784 = vlaneseq
    %v785 = vshrl.u32 %v784, 7
    %v786 = vsub.s32 0, %v785
    %v787 = vrot.slane %v766, %v786
    %v788 = vlaneseq
    %v789 = vshrl.u32 %v788, 7
    %v790 = vsub.s32 1, %v789
    %v791 = vrot.slane %v766, %v790
    %v794 = vmul.f32 %v776, %v787
    %v795 = vmul.f32 %v775, %v791
    %v796 = vadd.f32 %v746, %v794
    %v797 = vadd.f32 %v747, %v795
    %v799 = vlaneseq
    %v800 = vshrl.u32 %v799, 7
    %v801 = vsub.s32 0, %v800
    %v802 = vrot.slane %v769, %v801
    %v803 = vlaneseq
    %v804 = vshrl.u32 %v803, 7
    %v805 = vsub.s32 1, %v804
    %v806 = vrot.slane %v769, %v805
    %v809 = vmul.f32 %v782, %v802
    %v810 = vmul.f32 %v781, %v806
    %v811 = vadd.f32 %v761, %v809
    %v812 = vadd.f32 %v762, %v810
    %v813 = vmul.f32 %v512, %v460
    %s814 = sld [smem:[#allocation9 + $0xd]]
    %v815 = vstv %s814
    %v816 = vmul.f32 %v813, %v815
    %s817 = sld [smem:[#allocation9 + $0x3e]]
    %v818 = vstv %s817
    %v819 = vmul.f32 %v813, %v818
    %820 = vrot.lane.b32.xlu0 %v142, 29
    %v821 = vpop.permute.xlu0 %820
    %822 = vrot.lane.b32.xlu0 %v143, 29
    %v823 = vpop.permute.xlu0 %822
    %vm824 = vcmp.lt.s32.totalorder %v151, 29
    %v825 = vsel %vm824, %v821, %v823
    %v826 = vsel %vm824, %v823, %v821
    %827 = vrot.lane.b32.xlu0 %v159, 29
    %v828 = vpop.permute.xlu0 %827
    %829 = vrot.lane.b32.xlu0 %v160, 29
    %v830 = vpop.permute.xlu0 %829
    %v831 = vsel %vm824, %v828, %v830
    %v832 = vsel %vm824, %v830, %v828
    %v834 = vlaneseq
    %v835 = vshrl.u32 %v834, 7
    %v836 = vsub.s32 0, %v835
    %v837 = vrot.slane %v816, %v836
    %v838 = vlaneseq
    %v839 = vshrl.u32 %v838, 7
    %v840 = vsub.s32 1, %v839
    %v841 = vrot.slane %v816, %v840
    %v844 = vmul.f32 %v826, %v837
    %v845 = vmul.f32 %v825, %v841
    %v846 = vadd.f32 %v796, %v844
    %v847 = vadd.f32 %v797, %v845
    %v849 = vlaneseq
    %v850 = vshrl.u32 %v849, 7
    %v851 = vsub.s32 0, %v850
    %v852 = vrot.slane %v819, %v851
    %v853 = vlaneseq
    %v854 = vshrl.u32 %v853, 7
    %v855 = vsub.s32 1, %v854
    %v856 = vrot.slane %v819, %v855
    %v859 = vmul.f32 %v832, %v852
    %v860 = vmul.f32 %v831, %v856
    %v861 = vadd.f32 %v811, %v859
    %v862 = vadd.f32 %v812, %v860
    %s863 = scalar_lea.vmem [#allocation7], 2
    %v864 = vld [vmem:[%s863] ss:$8 sm:$0x3]
    %v865 = vmul.f32 %v864, %v129
    %s866 = sld [smem:[#allocation9 + $0xe]]
    %v867 = vstv %s866
    %v868 = vmul.f32 %v865, %v867
    %s869 = sld [smem:[#allocation9 + $0x3f]]
    %v870 = vstv %s869
    %v871 = vmul.f32 %v865, %v870
    %872 = vrot.lane.b32.xlu0 %v142, 19
    %v873 = vpop.permute.xlu0 %872
    %874 = vrot.lane.b32.xlu0 %v143, 19
    %v875 = vpop.permute.xlu0 %874
    %vm876 = vcmp.lt.s32.totalorder %v151, 19
    %v877 = vsel %vm876, %v873, %v875
    %v878 = vsel %vm876, %v875, %v873
    %879 = vrot.lane.b32.xlu0 %v159, 19
    %v880 = vpop.permute.xlu0 %879
    %881 = vrot.lane.b32.xlu0 %v160, 19
    %v882 = vpop.permute.xlu0 %881
    %v883 = vsel %vm876, %v880, %v882
    %v884 = vsel %vm876, %v882, %v880
    %v886 = vlaneseq
    %v887 = vshrl.u32 %v886, 7
    %v888 = vsub.s32 0, %v887
    %v889 = vrot.slane %v868, %v888
    %v890 = vlaneseq
    %v891 = vshrl.u32 %v890, 7
    %v892 = vsub.s32 1, %v891
    %v893 = vrot.slane %v868, %v892
    %v896 = vmul.f32 %v878, %v889
    %v897 = vmul.f32 %v877, %v893
    %v898 = vadd.f32 %v846, %v896
    %v899 = vadd.f32 %v847, %v897
    %v901 = vlaneseq
    %v902 = vshrl.u32 %v901, 7
    %v903 = vsub.s32 0, %v902
    %v904 = vrot.slane %v871, %v903
    %v905 = vlaneseq
    %v906 = vshrl.u32 %v905, 7
    %v907 = vsub.s32 1, %v906
    %v908 = vrot.slane %v871, %v907
    %v911 = vmul.f32 %v884, %v904
    %v912 = vmul.f32 %v883, %v908
    %v913 = vadd.f32 %v861, %v911
    %v914 = vadd.f32 %v862, %v912
    %v915 = vmul.f32 %v864, %v200
    %s916 = sld [smem:[#allocation9 + $0xf]]
    %v917 = vstv %s916
    %v918 = vmul.f32 %v915, %v917
    %s919 = sld [smem:[#allocation9 + $0x40]]
    %v920 = vstv %s919
    %v921 = vmul.f32 %v915, %v920
    %922 = vrot.lane.b32.xlu0 %v142, 18
    %v923 = vpop.permute.xlu0 %922
    %924 = vrot.lane.b32.xlu0 %v143, 18
    %v925 = vpop.permute.xlu0 %924
    %vm926 = vcmp.lt.s32.totalorder %v151, 18
    %v927 = vsel %vm926, %v923, %v925
    %v928 = vsel %vm926, %v925, %v923
    %929 = vrot.lane.b32.xlu0 %v159, 18
    %v930 = vpop.permute.xlu0 %929
    %931 = vrot.lane.b32.xlu0 %v160, 18
    %v932 = vpop.permute.xlu0 %931
    %v933 = vsel %vm926, %v930, %v932
    %v934 = vsel %vm926, %v932, %v930
    %v936 = vlaneseq
    %v937 = vshrl.u32 %v936, 7
    %v938 = vsub.s32 0, %v937
    %v939 = vrot.slane %v918, %v938
    %v940 = vlaneseq
    %v941 = vshrl.u32 %v940, 7
    %v942 = vsub.s32 1, %v941
    %v943 = vrot.slane %v918, %v942
    %v946 = vmul.f32 %v928, %v939
    %v947 = vmul.f32 %v927, %v943
    %v948 = vadd.f32 %v898, %v946
    %v949 = vadd.f32 %v899, %v947
    %v951 = vlaneseq
    %v952 = vshrl.u32 %v951, 7
    %v953 = vsub.s32 0, %v952
    %v954 = vrot.slane %v921, %v953
    %v955 = vlaneseq
    %v956 = vshrl.u32 %v955, 7
    %v957 = vsub.s32 1, %v956
    %v958 = vrot.slane %v921, %v957
    %v961 = vmul.f32 %v934, %v954
    %v962 = vmul.f32 %v933, %v958
    %v963 = vadd.f32 %v913, %v961
    %v964 = vadd.f32 %v914, %v962
    %v965 = vmul.f32 %v864, %v252
    %s966 = sld [smem:[#allocation9 + $0x10]]
    %v967 = vstv %s966
    %v968 = vmul.f32 %v965, %v967
    %s969 = sld [smem:[#allocation9 + $0x41]]
    %v970 = vstv %s969
    %v971 = vmul.f32 %v965, %v970
    %972 = vrot.lane.b32.xlu0 %v142, 17
    %v973 = vpop.permute.xlu0 %972
    %974 = vrot.lane.b32.xlu0 %v143, 17
    %v975 = vpop.permute.xlu0 %974
    %vm976 = vcmp.lt.s32.totalorder %v151, 17
    %v977 = vsel %vm976, %v973, %v975
    %v978 = vsel %vm976, %v975, %v973
    %979 = vrot.lane.b32.xlu0 %v159, 17
    %v980 = vpop.permute.xlu0 %979
    %981 = vrot.lane.b32.xlu0 %v160, 17
    %v982 = vpop.permute.xlu0 %981
    %v983 = vsel %vm976, %v980, %v982
    %v984 = vsel %vm976, %v982, %v980
    %v986 = vlaneseq
    %v987 = vshrl.u32 %v986, 7
    %v988 = vsub.s32 0, %v987
    %v989 = vrot.slane %v968, %v988
    %v990 = vlaneseq
    %v991 = vshrl.u32 %v990, 7
    %v992 = vsub.s32 1, %v991
    %v993 = vrot.slane %v968, %v992
    %v996 = vmul.f32 %v978, %v989
    %v997 = vmul.f32 %v977, %v993
    %v998 = vadd.f32 %v948, %v996
    %v999 = vadd.f32 %v949, %v997
    %v1001 = vlaneseq
    %v1002 = vshrl.u32 %v1001, 7
    %v1003 = vsub.s32 0, %v1002
    %v1004 = vrot.slane %v971, %v1003
    %v1005 = vlaneseq
    %v1006 = vshrl.u32 %v1005, 7
    %v1007 = vsub.s32 1, %v1006
    %v1008 = vrot.slane %v971, %v1007
    %v1011 = vmul.f32 %v984, %v1004
    %v1012 = vmul.f32 %v983, %v1008
    %v1013 = vadd.f32 %v963, %v1011
    %v1014 = vadd.f32 %v964, %v1012
    %v1015 = vmul.f32 %v864, %v304
    %s1016 = sld [smem:[#allocation9 + $0x11]]
    %v1017 = vstv %s1016
    %v1018 = vmul.f32 %v1015, %v1017
    %s1019 = sld [smem:[#allocation9 + $0x42]]
    %v1020 = vstv %s1019
    %v1021 = vmul.f32 %v1015, %v1020
    %1022 = vrot.lane.b32.xlu0 %v142, 16
    %v1023 = vpop.permute.xlu0 %1022
    %1024 = vrot.lane.b32.xlu0 %v143, 16
    %v1025 = vpop.permute.xlu0 %1024
    %vm1026 = vcmp.lt.s32.totalorder %v151, 16
    %v1027 = vsel %vm1026, %v1023, %v1025
    %v1028 = vsel %vm1026, %v1025, %v1023
    %1029 = vrot.lane.b32.xlu0 %v159, 16
    %v1030 = vpop.permute.xlu0 %1029
    %1031 = vrot.lane.b32.xlu0 %v160, 16
    %v1032 = vpop.permute.xlu0 %1031
    %v1033 = vsel %vm1026, %v1030, %v1032
    %v1034 = vsel %vm1026, %v1032, %v1030
    %v1036 = vlaneseq
    %v1037 = vshrl.u32 %v1036, 7
    %v1038 = vsub.s32 0, %v1037
    %v1039 = vrot.slane %v1018, %v1038
    %v1040 = vlaneseq
    %v1041 = vshrl.u32 %v1040, 7
    %v1042 = vsub.s32 1, %v1041
    %v1043 = vrot.slane %v1018, %v1042
    %v1046 = vmul.f32 %v1028, %v1039
    %v1047 = vmul.f32 %v1027, %v1043
    %v1048 = vadd.f32 %v998, %v1046
    %v1049 = vadd.f32 %v999, %v1047
    %v1051 = vlaneseq
    %v1052 = vshrl.u32 %v1051, 7
    %v1053 = vsub.s32 0, %v1052
    %v1054 = vrot.slane %v1021, %v1053
    %v1055 = vlaneseq
    %v1056 = vshrl.u32 %v1055, 7
    %v1057 = vsub.s32 1, %v1056
    %v1058 = vrot.slane %v1021, %v1057
    %v1061 = vmul.f32 %v1034, %v1054
    %v1062 = vmul.f32 %v1033, %v1058
    %v1063 = vadd.f32 %v1013, %v1061
    %v1064 = vadd.f32 %v1014, %v1062
    %v1065 = vmul.f32 %v864, %v356
    %s1066 = sld [smem:[#allocation9 + $0x12]]
    %v1067 = vstv %s1066
    %v1068 = vmul.f32 %v1065, %v1067
    %s1069 = sld [smem:[#allocation9 + $0x43]]
    %v1070 = vstv %s1069
    %v1071 = vmul.f32 %v1065, %v1070
    %1072 = vrot.lane.b32.xlu0 %v142, 15
    %v1073 = vpop.permute.xlu0 %1072
    %1074 = vrot.lane.b32.xlu0 %v143, 15
    %v1075 = vpop.permute.xlu0 %1074
    %vm1076 = vcmp.lt.s32.totalorder %v151, 15
    %v1077 = vsel %vm1076, %v1073, %v1075
    %v1078 = vsel %vm1076, %v1075, %v1073
    %1079 = vrot.lane.b32.xlu0 %v159, 15
    %v1080 = vpop.permute.xlu0 %1079
    %1081 = vrot.lane.b32.xlu0 %v160, 15
    %v1082 = vpop.permute.xlu0 %1081
    %v1083 = vsel %vm1076, %v1080, %v1082
    %v1084 = vsel %vm1076, %v1082, %v1080
    %v1086 = vlaneseq
    %v1087 = vshrl.u32 %v1086, 7
    %v1088 = vsub.s32 0, %v1087
    %v1089 = vrot.slane %v1068, %v1088
    %v1090 = vlaneseq
    %v1091 = vshrl.u32 %v1090, 7
    %v1092 = vsub.s32 1, %v1091
    %v1093 = vrot.slane %v1068, %v1092
    %v1096 = vmul.f32 %v1078, %v1089
    %v1097 = vmul.f32 %v1077, %v1093
    %v1098 = vadd.f32 %v1048, %v1096
    %v1099 = vadd.f32 %v1049, %v1097
    %v1101 = vlaneseq
    %v1102 = vshrl.u32 %v1101, 7
    %v1103 = vsub.s32 0, %v1102
    %v1104 = vrot.slane %v1071, %v1103
    %v1105 = vlaneseq
    %v1106 = vshrl.u32 %v1105, 7
    %v1107 = vsub.s32 1, %v1106
    %v1108 = vrot.slane %v1071, %v1107
    %v1111 = vmul.f32 %v1084, %v1104
    %v1112 = vmul.f32 %v1083, %v1108
    %v1113 = vadd.f32 %v1063, %v1111
    %v1114 = vadd.f32 %v1064, %v1112
    %v1115 = vmul.f32 %v864, %v408
    %s1116 = sld [smem:[#allocation9 + $0x13]]
    %v1117 = vstv %s1116
    %v1118 = vmul.f32 %v1115, %v1117
    %s1119 = sld [smem:[#allocation9 + $0x44]]
    %v1120 = vstv %s1119
    %v1121 = vmul.f32 %v1115, %v1120
    %1122 = vrot.lane.b32.xlu0 %v142, 14
    %v1123 = vpop.permute.xlu0 %1122
    %1124 = vrot.lane.b32.xlu0 %v143, 14
    %v1125 = vpop.permute.xlu0 %1124
    %vm1126 = vcmp.lt.s32.totalorder %v151, 14
    %v1127 = vsel %vm1126, %v1123, %v1125
    %v1128 = vsel %vm1126, %v1125, %v1123
    %1129 = vrot.lane.b32.xlu0 %v159, 14
    %v1130 = vpop.permute.xlu0 %1129
    %1131 = vrot.lane.b32.xlu0 %v160, 14
    %v1132 = vpop.permute.xlu0 %1131
    %v1133 = vsel %vm1126, %v1130, %v1132
    %v1134 = vsel %vm1126, %v1132, %v1130
    %v1136 = vlaneseq
    %v1137 = vshrl.u32 %v1136, 7
    %v1138 = vsub.s32 0, %v1137
    %v1139 = vrot.slane %v1118, %v1138
    %v1140 = vlaneseq
    %v1141 = vshrl.u32 %v1140, 7
    %v1142 = vsub.s32 1, %v1141
    %v1143 = vrot.slane %v1118, %v1142
    %v1146 = vmul.f32 %v1128, %v1139
    %v1147 = vmul.f32 %v1127, %v1143
    %v1148 = vadd.f32 %v1098, %v1146
    %v1149 = vadd.f32 %v1099, %v1147
    %v1151 = vlaneseq
    %v1152 = vshrl.u32 %v1151, 7
    %v1153 = vsub.s32 0, %v1152
    %v1154 = vrot.slane %v1121, %v1153
    %v1155 = vlaneseq
    %v1156 = vshrl.u32 %v1155, 7
    %v1157 = vsub.s32 1, %v1156
    %v1158 = vrot.slane %v1121, %v1157
    %v1161 = vmul.f32 %v1134, %v1154
    %v1162 = vmul.f32 %v1133, %v1158
    %v1163 = vadd.f32 %v1113, %v1161
    %v1164 = vadd.f32 %v1114, %v1162
    %v1165 = vmul.f32 %v864, %v460
    %s1166 = sld [smem:[#allocation9 + $0x14]]
    %v1167 = vstv %s1166
    %v1168 = vmul.f32 %v1165, %v1167
    %s1169 = sld [smem:[#allocation9 + $0x45]]
    %v1170 = vstv %s1169
    %v1171 = vmul.f32 %v1165, %v1170
    %1172 = vrot.lane.b32.xlu0 %v142, 13
    %v1173 = vpop.permute.xlu0 %1172
    %1174 = vrot.lane.b32.xlu0 %v143, 13
    %v1175 = vpop.permute.xlu0 %1174
    %vm1176 = vcmp.lt.s32.totalorder %v151, 13
    %v1177 = vsel %vm1176, %v1173, %v1175
    %v1178 = vsel %vm1176, %v1175, %v1173
    %1179 = vrot.lane.b32.xlu0 %v159, 13
    %v1180 = vpop.permute.xlu0 %1179
    %1181 = vrot.lane.b32.xlu0 %v160, 13
    %v1182 = vpop.permute.xlu0 %1181
    %v1183 = vsel %vm1176, %v1180, %v1182
    %v1184 = vsel %vm1176, %v1182, %v1180
    %v1186 = vlaneseq
    %v1187 = vshrl.u32 %v1186, 7
    %v1188 = vsub.s32 0, %v1187
    %v1189 = vrot.slane %v1168, %v1188
    %v1190 = vlaneseq
    %v1191 = vshrl.u32 %v1190, 7
    %v1192 = vsub.s32 1, %v1191
    %v1193 = vrot.slane %v1168, %v1192
    %v1196 = vmul.f32 %v1178, %v1189
    %v1197 = vmul.f32 %v1177, %v1193
    %v1198 = vadd.f32 %v1148, %v1196
    %v1199 = vadd.f32 %v1149, %v1197
    %v1201 = vlaneseq
    %v1202 = vshrl.u32 %v1201, 7
    %v1203 = vsub.s32 0, %v1202
    %v1204 = vrot.slane %v1171, %v1203
    %v1205 = vlaneseq
    %v1206 = vshrl.u32 %v1205, 7
    %v1207 = vsub.s32 1, %v1206
    %v1208 = vrot.slane %v1171, %v1207
    %v1211 = vmul.f32 %v1184, %v1204
    %v1212 = vmul.f32 %v1183, %v1208
    %v1213 = vadd.f32 %v1163, %v1211
    %v1214 = vadd.f32 %v1164, %v1212
    %s1215 = scalar_lea.vmem [#allocation7], 3
    %v1216 = vld [vmem:[%s1215] ss:$8 sm:$0x3]
    %v1217 = vmul.f32 %v1216, %v129
    %s1218 = sld [smem:[#allocation9 + $0x15]]
    %v1219 = vstv %s1218
    %v1220 = vmul.f32 %v1217, %v1219
    %s1221 = sld [smem:[#allocation9 + $0x46]]
    %v1222 = vstv %s1221
    %v1223 = vmul.f32 %v1217, %v1222
    %1224 = vrot.lane.b32.xlu0 %v142, 3
    %v1225 = vpop.permute.xlu0 %1224
    %1226 = vrot.lane.b32.xlu0 %v143, 3
    %v1227 = vpop.permute.xlu0 %1226
    %vm1228 = vcmp.lt.s32.totalorder %v151, 3
    %v1229 = vsel %vm1228, %v1225, %v1227
    %v1230 = vsel %vm1228, %v1227, %v1225
    %1231 = vrot.lane.b32.xlu0 %v159, 3
    %v1232 = vpop.permute.xlu0 %1231
    %1233 = vrot.lane.b32.xlu0 %v160, 3
    %v1234 = vpop.permute.xlu0 %1233
    %v1235 = vsel %vm1228, %v1232, %v1234
    %v1236 = vsel %vm1228, %v1234, %v1232
    %v1238 = vlaneseq
    %v1239 = vshrl.u32 %v1238, 7
    %v1240 = vsub.s32 0, %v1239
    %v1241 = vrot.slane %v1220, %v1240
    %v1242 = vlaneseq
    %v1243 = vshrl.u32 %v1242, 7
    %v1244 = vsub.s32 1, %v1243
    %v1245 = vrot.slane %v1220, %v1244
    %v1248 = vmul.f32 %v1230, %v1241
    %v1249 = vmul.f32 %v1229, %v1245
    %v1250 = vadd.f32 %v1198, %v1248
    %v1251 = vadd.f32 %v1199, %v1249
    %v1253 = vlaneseq
    %v1254 = vshrl.u32 %v1253, 7
    %v1255 = vsub.s32 0, %v1254
    %v1256 = vrot.slane %v1223, %v1255
    %v1257 = vlaneseq
    %v1258 = vshrl.u32 %v1257, 7
    %v1259 = vsub.s32 1, %v1258
    %v1260 = vrot.slane %v1223, %v1259
    %v1263 = vmul.f32 %v1236, %v1256
    %v1264 = vmul.f32 %v1235, %v1260
    %v1265 = vadd.f32 %v1213, %v1263
    %v1266 = vadd.f32 %v1214, %v1264
    %v1267 = vmul.f32 %v1216, %v200
    %s1268 = sld [smem:[#allocation9 + $0x16]]
    %v1269 = vstv %s1268
    %v1270 = vmul.f32 %v1267, %v1269
    %s1271 = sld [smem:[#allocation9 + $0x47]]
    %v1272 = vstv %s1271
    %v1273 = vmul.f32 %v1267, %v1272
    %1274 = vrot.lane.b32.xlu0 %v142, 2
    %v1275 = vpop.permute.xlu0 %1274
    %1276 = vrot.lane.b32.xlu0 %v143, 2
    %v1277 = vpop.permute.xlu0 %1276
    %vm1278 = vcmp.lt.s32.totalorder %v151, 2
    %v1279 = vsel %vm1278, %v1275, %v1277
    %v1280 = vsel %vm1278, %v1277, %v1275
    %1281 = vrot.lane.b32.xlu0 %v159, 2
    %v1282 = vpop.permute.xlu0 %1281
    %1283 = vrot.lane.b32.xlu0 %v160, 2
    %v1284 = vpop.permute.xlu0 %1283
    %v1285 = vsel %vm1278, %v1282, %v1284
    %v1286 = vsel %vm1278, %v1284, %v1282
    %v1288 = vlaneseq
    %v1289 = vshrl.u32 %v1288, 7
    %v1290 = vsub.s32 0, %v1289
    %v1291 = vrot.slane %v1270, %v1290
    %v1292 = vlaneseq
    %v1293 = vshrl.u32 %v1292, 7
    %v1294 = vsub.s32 1, %v1293
    %v1295 = vrot.slane %v1270, %v1294
    %v1298 = vmul.f32 %v1280, %v1291
    %v1299 = vmul.f32 %v1279, %v1295
    %v1300 = vadd.f32 %v1250, %v1298
    %v1301 = vadd.f32 %v1251, %v1299
    %v1303 = vlaneseq
    %v1304 = vshrl.u32 %v1303, 7
    %v1305 = vsub.s32 0, %v1304
    %v1306 = vrot.slane %v1273, %v1305
    %v1307 = vlaneseq
    %v1308 = vshrl.u32 %v1307, 7
    %v1309 = vsub.s32 1, %v1308
    %v1310 = vrot.slane %v1273, %v1309
    %v1313 = vmul.f32 %v1286, %v1306
    %v1314 = vmul.f32 %v1285, %v1310
    %v1315 = vadd.f32 %v1265, %v1313
    %v1316 = vadd.f32 %v1266, %v1314
    %v1317 = vmul.f32 %v1216, %v252
    %s1318 = sld [smem:[#allocation9 + $0x17]]
    %v1319 = vstv %s1318
    %v1320 = vmul.f32 %v1317, %v1319
    %s1321 = sld [smem:[#allocation9 + $0x48]]
    %v1322 = vstv %s1321
    %v1323 = vmul.f32 %v1317, %v1322
    %1324 = vrot.lane.b32.xlu0 %v142, 1
    %v1325 = vpop.permute.xlu0 %1324
    %1326 = vrot.lane.b32.xlu0 %v143, 1
    %v1327 = vpop.permute.xlu0 %1326
    %vm1328 = vcmp.lt.s32.totalorder %v151, 1
    %v1329 = vsel %vm1328, %v1325, %v1327
    %v1330 = vsel %vm1328, %v1327, %v1325
    %1331 = vrot.lane.b32.xlu0 %v159, 1
    %v1332 = vpop.permute.xlu0 %1331
    %1333 = vrot.lane.b32.xlu0 %v160, 1
    %v1334 = vpop.permute.xlu0 %1333
    %v1335 = vsel %vm1328, %v1332, %v1334
    %v1336 = vsel %vm1328, %v1334, %v1332
    %v1338 = vlaneseq
    %v1339 = vshrl.u32 %v1338, 7
    %v1340 = vsub.s32 0, %v1339
    %v1341 = vrot.slane %v1320, %v1340
    %v1342 = vlaneseq
    %v1343 = vshrl.u32 %v1342, 7
    %v1344 = vsub.s32 1, %v1343
    %v1345 = vrot.slane %v1320, %v1344
    %v1348 = vmul.f32 %v1330, %v1341
    %v1349 = vmul.f32 %v1329, %v1345
    %v1350 = vadd.f32 %v1300, %v1348
    %v1351 = vadd.f32 %v1301, %v1349
    %v1353 = vlaneseq
    %v1354 = vshrl.u32 %v1353, 7
    %v1355 = vsub.s32 0, %v1354
    %v1356 = vrot.slane %v1323, %v1355
    %v1357 = vlaneseq
    %v1358 = vshrl.u32 %v1357, 7
    %v1359 = vsub.s32 1, %v1358
    %v1360 = vrot.slane %v1323, %v1359
    %v1363 = vmul.f32 %v1336, %v1356
    %v1364 = vmul.f32 %v1335, %v1360
    %v1365 = vadd.f32 %v1315, %v1363
    %v1366 = vadd.f32 %v1316, %v1364
    %v1367 = vmul.f32 %v1216, %v304
    %s1368 = sld [smem:[#allocation9 + $0x18]]
    %v1369 = vstv %s1368
    %v1370 = vmul.f32 %v1367, %v1369
    %s1371 = sld [smem:[#allocation9 + $0x49]]
    %v1372 = vstv %s1371
    %v1373 = vmul.f32 %v1367, %v1372
    %v1375 = vlaneseq
    %v1376 = vshrl.u32 %v1375, 7
    %v1377 = vsub.s32 0, %v1376
    %v1378 = vrot.slane %v1370, %v1377
    %v1379 = vlaneseq
    %v1380 = vshrl.u32 %v1379, 7
    %v1381 = vsub.s32 1, %v1380
    %v1382 = vrot.slane %v1370, %v1381
    %v1385 = vmul.f32 %v73, %v1378
    %v1386 = vmul.f32 %v80, %v1382
    %v1387 = vmul.f32 %v87, %v1378
    %v1388 = vmul.f32 %v94, %v1382
    %v1393 = vrot.slane %v1387, 7
    %v1394 = vsel %vm141, %v1393, %v1385
    %v1395 = vrot.slane %v1388, 7
    %v1396 = vsel %vm141, %v1395, %v1386
    %v1399 = vadd.f32 %v1350, %v1394
    %v1400 = vadd.f32 %v1351, %v1396
    %v1402 = vlaneseq
    %v1403 = vshrl.u32 %v1402, 7
    %v1404 = vsub.s32 0, %v1403
    %v1405 = vrot.slane %v1373, %v1404
    %v1406 = vlaneseq
    %v1407 = vshrl.u32 %v1406, 7
    %v1408 = vsub.s32 1, %v1407
    %v1409 = vrot.slane %v1373, %v1408
    %v1412 = vmul.f32 %v123, %v1405
    %v1413 = vmul.f32 %v124, %v1409
    %v1414 = vmul.f32 %v125, %v1405
    %v1415 = vmul.f32 %v126, %v1409
    %v1420 = vrot.slane %v1414, 7
    %v1421 = vsel %vm141, %v1420, %v1412
    %v1422 = vrot.slane %v1415, 7
    %v1423 = vsel %vm141, %v1422, %v1413
    %v1426 = vadd.f32 %v1365, %v1421
    %v1427 = vadd.f32 %v1366, %v1423
    %v1428 = vmul.f32 %v1216, %v356
    %s1429 = sld [smem:[#allocation9 + $0x19]]
    %v1430 = vstv %s1429
    %v1431 = vmul.f32 %v1428, %v1430
    %s1432 = sld [smem:[#allocation9 + $0x4a]]
    %v1433 = vstv %s1432
    %v1434 = vmul.f32 %v1428, %v1433
    %1435 = vrot.lane.b32.xlu0 %v142, 127
    %v1436 = vpop.permute.xlu0 %1435
    %1437 = vrot.lane.b32.xlu0 %v143, 127
    %v1438 = vpop.permute.xlu0 %1437
    %vm1439 = vcmp.lt.s32.totalorder %v151, 127
    %v1440 = vsel %vm1439, %v1436, %v1438
    %v1441 = vsel %vm1439, %v1438, %v1436
    %1442 = vrot.lane.b32.xlu0 %v159, 127
    %v1443 = vpop.permute.xlu0 %1442
    %1444 = vrot.lane.b32.xlu0 %v160, 127
    %v1445 = vpop.permute.xlu0 %1444
    %v1446 = vsel %vm1439, %v1443, %v1445
    %v1447 = vsel %vm1439, %v1445, %v1443
    %v1449 = vlaneseq
    %v1450 = vshrl.u32 %v1449, 7
    %v1451 = vsub.s32 0, %v1450
    %v1452 = vrot.slane %v1431, %v1451
    %v1453 = vlaneseq
    %v1454 = vshrl.u32 %v1453, 7
    %v1455 = vsub.s32 1, %v1454
    %v1456 = vrot.slane %v1431, %v1455
    %v1459 = vmul.f32 %v1440, %v1452
    %v1460 = vmul.f32 %v1441, %v1456
    %v1461 = vadd.f32 %v1399, %v1459
    %v1462 = vadd.f32 %v1400, %v1460
    %v1464 = vlaneseq
    %v1465 = vshrl.u32 %v1464, 7
    %v1466 = vsub.s32 0, %v1465
    %v1467 = vrot.slane %v1434, %v1466
    %v1468 = vlaneseq
    %v1469 = vshrl.u32 %v1468, 7
    %v1470 = vsub.s32 1, %v1469
    %v1471 = vrot.slane %v1434, %v1470
    %v1474 = vmul.f32 %v1446, %v1467
    %v1475 = vmul.f32 %v1447, %v1471
    %v1476 = vadd.f32 %v1426, %v1474
    %v1477 = vadd.f32 %v1427, %v1475
    %v1478 = vmul.f32 %v1216, %v408
    %s1479 = sld [smem:[#allocation9 + $0x1a]]
    %v1480 = vstv %s1479
    %v1481 = vmul.f32 %v1478, %v1480
    %s1482 = sld [smem:[#allocation9 + $0x4b]]
    %v1483 = vstv %s1482
    %v1484 = vmul.f32 %v1478, %v1483
    %1485 = vrot.lane.b32.xlu0 %v142, 126
    %v1486 = vpop.permute.xlu0 %1485
    %1487 = vrot.lane.b32.xlu0 %v143, 126
    %v1488 = vpop.permute.xlu0 %1487
    %vm1489 = vcmp.lt.s32.totalorder %v151, 126
    %v1490 = vsel %vm1489, %v1486, %v1488
    %v1491 = vsel %vm1489, %v1488, %v1486
    %1492 = vrot.lane.b32.xlu0 %v159, 126
    %v1493 = vpop.permute.xlu0 %1492
    %1494 = vrot.lane.b32.xlu0 %v160, 126
    %v1495 = vpop.permute.xlu0 %1494
    %v1496 = vsel %vm1489, %v1493, %v1495
    %v1497 = vsel %vm1489, %v1495, %v1493
    %v1499 = vlaneseq
    %v1500 = vshrl.u32 %v1499, 7
    %v1501 = vsub.s32 0, %v1500
    %v1502 = vrot.slane %v1481, %v1501
    %v1503 = vlaneseq
    %v1504 = vshrl.u32 %v1503, 7
    %v1505 = vsub.s32 1, %v1504
    %v1506 = vrot.slane %v1481, %v1505
    %v1509 = vmul.f32 %v1490, %v1502
    %v1510 = vmul.f32 %v1491, %v1506
    %v1511 = vadd.f32 %v1461, %v1509
    %v1512 = vadd.f32 %v1462, %v1510
    %v1514 = vlaneseq
    %v1515 = vshrl.u32 %v1514, 7
    %v1516 = vsub.s32 0, %v1515
    %v1517 = vrot.slane %v1484, %v1516
    %v1518 = vlaneseq
    %v1519 = vshrl.u32 %v1518, 7
    %v1520 = vsub.s32 1, %v1519
    %v1521 = vrot.slane %v1484, %v1520
    %v1524 = vmul.f32 %v1496, %v1517
    %v1525 = vmul.f32 %v1497, %v1521
    %v1526 = vadd.f32 %v1476, %v1524
    %v1527 = vadd.f32 %v1477, %v1525
    %v1528 = vmul.f32 %v1216, %v460
    %s1529 = sld [smem:[#allocation9 + $0x1b]]
    %v1530 = vstv %s1529
    %v1531 = vmul.f32 %v1528, %v1530
    %s1532 = sld [smem:[#allocation9 + $0x4c]]
    %v1533 = vstv %s1532
    %v1534 = vmul.f32 %v1528, %v1533
    %1535 = vrot.lane.b32.xlu0 %v142, 125
    %v1536 = vpop.permute.xlu0 %1535
    %1537 = vrot.lane.b32.xlu0 %v143, 125
    %v1538 = vpop.permute.xlu0 %1537
    %vm1539 = vcmp.lt.s32.totalorder %v151, 125
    %v1540 = vsel %vm1539, %v1536, %v1538
    %v1541 = vsel %vm1539, %v1538, %v1536
    %1542 = vrot.lane.b32.xlu0 %v159, 125
    %v1543 = vpop.permute.xlu0 %1542
    %1544 = vrot.lane.b32.xlu0 %v160, 125
    %v1545 = vpop.permute.xlu0 %1544
    %v1546 = vsel %vm1539, %v1543, %v1545
    %v1547 = vsel %vm1539, %v1545, %v1543
    %v1549 = vlaneseq
    %v1550 = vshrl.u32 %v1549, 7
    %v1551 = vsub.s32 0, %v1550
    %v1552 = vrot.slane %v1531, %v1551
    %v1553 = vlaneseq
    %v1554 = vshrl.u32 %v1553, 7
    %v1555 = vsub.s32 1, %v1554
    %v1556 = vrot.slane %v1531, %v1555
    %v1559 = vmul.f32 %v1540, %v1552
    %v1560 = vmul.f32 %v1541, %v1556
    %v1561 = vadd.f32 %v1511, %v1559
    %v1562 = vadd.f32 %v1512, %v1560
    %v1564 = vlaneseq
    %v1565 = vshrl.u32 %v1564, 7
    %v1566 = vsub.s32 0, %v1565
    %v1567 = vrot.slane %v1534, %v1566
    %v1568 = vlaneseq
    %v1569 = vshrl.u32 %v1568, 7
    %v1570 = vsub.s32 1, %v1569
    %v1571 = vrot.slane %v1534, %v1570
    %v1574 = vmul.f32 %v1546, %v1567
    %v1575 = vmul.f32 %v1547, %v1571
    %v1576 = vadd.f32 %v1526, %v1574
    %v1577 = vadd.f32 %v1527, %v1575
    %s1578 = scalar_lea.vmem [#allocation7], 4
    %v1579 = vld [vmem:[%s1578] ss:$8 sm:$0x3]
    %v1580 = vmul.f32 %v1579, %v129
    %s1581 = sld [smem:[#allocation9 + $0x1c]]
    %v1582 = vstv %s1581
    %v1583 = vmul.f32 %v1580, %v1582
    %s1584 = sld [smem:[#allocation9 + $0x4d]]
    %v1585 = vstv %s1584
    %v1586 = vmul.f32 %v1580, %v1585
    %1587 = vrot.lane.b32.xlu0 %v142, 115
    %v1588 = vpop.permute.xlu0 %1587
    %1589 = vrot.lane.b32.xlu0 %v143, 115
    %v1590 = vpop.permute.xlu0 %1589
    %vm1591 = vcmp.lt.s32.totalorder %v151, 115
    %v1592 = vsel %vm1591, %v1588, %v1590
    %v1593 = vsel %vm1591, %v1590, %v1588
    %1594 = vrot.lane.b32.xlu0 %v159, 115
    %v1595 = vpop.permute.xlu0 %1594
    %1596 = vrot.lane.b32.xlu0 %v160, 115
    %v1597 = vpop.permute.xlu0 %1596
    %v1598 = vsel %vm1591, %v1595, %v1597
    %v1599 = vsel %vm1591, %v1597, %v1595
    %v1601 = vlaneseq
    %v1602 = vshrl.u32 %v1601, 7
    %v1603 = vsub.s32 0, %v1602
    %v1604 = vrot.slane %v1583, %v1603
    %v1605 = vlaneseq
    %v1606 = vshrl.u32 %v1605, 7
    %v1607 = vsub.s32 1, %v1606
    %v1608 = vrot.slane %v1583, %v1607
    %v1611 = vmul.f32 %v1592, %v1604
    %v1612 = vmul.f32 %v1593, %v1608
    %v1613 = vadd.f32 %v1561, %v1611
    %v1614 = vadd.f32 %v1562, %v1612
    %v1616 = vlaneseq
    %v1617 = vshrl.u32 %v1616, 7
    %v1618 = vsub.s32 0, %v1617
    %v1619 = vrot.slane %v1586, %v1618
    %v1620 = vlaneseq
    %v1621 = vshrl.u32 %v1620, 7
    %v1622 = vsub.s32 1, %v1621
    %v1623 = vrot.slane %v1586, %v1622
    %v1626 = vmul.f32 %v1598, %v1619
    %v1627 = vmul.f32 %v1599, %v1623
    %v1628 = vadd.f32 %v1576, %v1626
    %v1629 = vadd.f32 %v1577, %v1627
    %v1630 = vmul.f32 %v1579, %v200
    %s1631 = sld [smem:[#allocation9 + $0x1d]]
    %v1632 = vstv %s1631
    %v1633 = vmul.f32 %v1630, %v1632
    %s1634 = sld [smem:[#allocation9 + $0x4e]]
    %v1635 = vstv %s1634
    %v1636 = vmul.f32 %v1630, %v1635
    %1637 = vrot.lane.b32.xlu0 %v142, 114
    %v1638 = vpop.permute.xlu0 %1637
    %1639 = vrot.lane.b32.xlu0 %v143, 114
    %v1640 = vpop.permute.xlu0 %1639
    %vm1641 = vcmp.lt.s32.totalorder %v151, 114
    %v1642 = vsel %vm1641, %v1638, %v1640
    %v1643 = vsel %vm1641, %v1640, %v1638
    %1644 = vrot.lane.b32.xlu0 %v159, 114
    %v1645 = vpop.permute.xlu0 %1644
    %1646 = vrot.lane.b32.xlu0 %v160, 114
    %v1647 = vpop.permute.xlu0 %1646
    %v1648 = vsel %vm1641, %v1645, %v1647
    %v1649 = vsel %vm1641, %v1647, %v1645
    %v1651 = vlaneseq
    %v1652 = vshrl.u32 %v1651, 7
    %v1653 = vsub.s32 0, %v1652
    %v1654 = vrot.slane %v1633, %v1653
    %v1655 = vlaneseq
    %v1656 = vshrl.u32 %v1655, 7
    %v1657 = vsub.s32 1, %v1656
    %v1658 = vrot.slane %v1633, %v1657
    %v1661 = vmul.f32 %v1642, %v1654
    %v1662 = vmul.f32 %v1643, %v1658
    %v1663 = vadd.f32 %v1613, %v1661
    %v1664 = vadd.f32 %v1614, %v1662
    %v1666 = vlaneseq
    %v1667 = vshrl.u32 %v1666, 7
    %v1668 = vsub.s32 0, %v1667
    %v1669 = vrot.slane %v1636, %v1668
    %v1670 = vlaneseq
    %v1671 = vshrl.u32 %v1670, 7
    %v1672 = vsub.s32 1, %v1671
    %v1673 = vrot.slane %v1636, %v1672
    %v1676 = vmul.f32 %v1648, %v1669
    %v1677 = vmul.f32 %v1649, %v1673
    %v1678 = vadd.f32 %v1628, %v1676
    %v1679 = vadd.f32 %v1629, %v1677
    %v1680 = vmul.f32 %v1579, %v252
    %s1681 = sld [smem:[#allocation9 + $0x1e]]
    %v1682 = vstv %s1681
    %v1683 = vmul.f32 %v1680, %v1682
    %s1684 = sld [smem:[#allocation9 + $0x4f]]
    %v1685 = vstv %s1684
    %v1686 = vmul.f32 %v1680, %v1685
    %1687 = vrot.lane.b32.xlu0 %v142, 113
    %v1688 = vpop.permute.xlu0 %1687
    %1689 = vrot.lane.b32.xlu0 %v143, 113
    %v1690 = vpop.permute.xlu0 %1689
    %vm1691 = vcmp.lt.s32.totalorder %v151, 113
    %v1692 = vsel %vm1691, %v1688, %v1690
    %v1693 = vsel %vm1691, %v1690, %v1688
    %1694 = vrot.lane.b32.xlu0 %v159, 113
    %v1695 = vpop.permute.xlu0 %1694
    %1696 = vrot.lane.b32.xlu0 %v160, 113
    %v1697 = vpop.permute.xlu0 %1696
    %v1698 = vsel %vm1691, %v1695, %v1697
    %v1699 = vsel %vm1691, %v1697, %v1695
    %v1701 = vlaneseq
    %v1702 = vshrl.u32 %v1701, 7
    %v1703 = vsub.s32 0, %v1702
    %v1704 = vrot.slane %v1683, %v1703
    %v1705 = vlaneseq
    %v1706 = vshrl.u32 %v1705, 7
    %v1707 = vsub.s32 1, %v1706
    %v1708 = vrot.slane %v1683, %v1707
    %v1711 = vmul.f32 %v1692, %v1704
    %v1712 = vmul.f32 %v1693, %v1708
    %v1713 = vadd.f32 %v1663, %v1711
    %v1714 = vadd.f32 %v1664, %v1712
    %v1716 = vlaneseq
    %v1717 = vshrl.u32 %v1716, 7
    %v1718 = vsub.s32 0, %v1717
    %v1719 = vrot.slane %v1686, %v1718
    %v1720 = vlaneseq
    %v1721 = vshrl.u32 %v1720, 7
    %v1722 = vsub.s32 1, %v1721
    %v1723 = vrot.slane %v1686, %v1722
    %v1726 = vmul.f32 %v1698, %v1719
    %v1727 = vmul.f32 %v1699, %v1723
    %v1728 = vadd.f32 %v1678, %v1726
    %v1729 = vadd.f32 %v1679, %v1727
    %v1730 = vmul.f32 %v1579, %v304
    %s1731 = sld [smem:[#allocation9 + $0x1f]]
    %v1732 = vstv %s1731
    %v1733 = vmul.f32 %v1730, %v1732
    %s1734 = sld [smem:[#allocation9 + $0x50]]
    %v1735 = vstv %s1734
    %v1736 = vmul.f32 %v1730, %v1735
    %1737 = vrot.lane.b32.xlu0 %v142, 112
    %v1738 = vpop.permute.xlu0 %1737
    %1739 = vrot.lane.b32.xlu0 %v143, 112
    %v1740 = vpop.permute.xlu0 %1739
    %vm1741 = vcmp.lt.s32.totalorder %v151, 112
    %v1742 = vsel %vm1741, %v1738, %v1740
    %v1743 = vsel %vm1741, %v1740, %v1738
    %1744 = vrot.lane.b32.xlu0 %v159, 112
    %v1745 = vpop.permute.xlu0 %1744
    %1746 = vrot.lane.b32.xlu0 %v160, 112
    %v1747 = vpop.permute.xlu0 %1746
    %v1748 = vsel %vm1741, %v1745, %v1747
    %v1749 = vsel %vm1741, %v1747, %v1745
    %v1751 = vlaneseq
    %v1752 = vshrl.u32 %v1751, 7
    %v1753 = vsub.s32 0, %v1752
    %v1754 = vrot.slane %v1733, %v1753
    %v1755 = vlaneseq
    %v1756 = vshrl.u32 %v1755, 7
    %v1757 = vsub.s32 1, %v1756
    %v1758 = vrot.slane %v1733, %v1757
    %v1761 = vmul.f32 %v1742, %v1754
    %v1762 = vmul.f32 %v1743, %v1758
    %v1763 = vadd.f32 %v1713, %v1761
    %v1764 = vadd.f32 %v1714, %v1762
    %v1766 = vlaneseq
    %v1767 = vshrl.u32 %v1766, 7
    %v1768 = vsub.s32 0, %v1767
    %v1769 = vrot.slane %v1736, %v1768
    %v1770 = vlaneseq
    %v1771 = vshrl.u32 %v1770, 7
    %v1772 = vsub.s32 1, %v1771
    %v1773 = vrot.slane %v1736, %v1772
    %v1776 = vmul.f32 %v1748, %v1769
    %v1777 = vmul.f32 %v1749, %v1773
    %v1778 = vadd.f32 %v1728, %v1776
    %v1779 = vadd.f32 %v1729, %v1777
    %v1780 = vmul.f32 %v1579, %v356
    %s1781 = sld [smem:[#allocation9 + $0x20]]
    %v1782 = vstv %s1781
    %v1783 = vmul.f32 %v1780, %v1782
    %s1784 = sld [smem:[#allocation9 + $0x51]]
    %v1785 = vstv %s1784
    %v1786 = vmul.f32 %v1780, %v1785
    %1787 = vrot.lane.b32.xlu0 %v142, 111
    %v1788 = vpop.permute.xlu0 %1787
    %1789 = vrot.lane.b32.xlu0 %v143, 111
    %v1790 = vpop.permute.xlu0 %1789
    %vm1791 = vcmp.lt.s32.totalorder %v151, 111
    %v1792 = vsel %vm1791, %v1788, %v1790
    %v1793 = vsel %vm1791, %v1790, %v1788
    %1794 = vrot.lane.b32.xlu0 %v159, 111
    %v1795 = vpop.permute.xlu0 %1794
    %1796 = vrot.lane.b32.xlu0 %v160, 111
    %v1797 = vpop.permute.xlu0 %1796
    %v1798 = vsel %vm1791, %v1795, %v1797
    %v1799 = vsel %vm1791, %v1797, %v1795
    %v1801 = vlaneseq
    %v1802 = vshrl.u32 %v1801, 7
    %v1803 = vsub.s32 0, %v1802
    %v1804 = vrot.slane %v1783, %v1803
    %v1805 = vlaneseq
    %v1806 = vshrl.u32 %v1805, 7
    %v1807 = vsub.s32 1, %v1806
    %v1808 = vrot.slane %v1783, %v1807
    %v1811 = vmul.f32 %v1792, %v1804
    %v1812 = vmul.f32 %v1793, %v1808
    %v1813 = vadd.f32 %v1763, %v1811
    %v1814 = vadd.f32 %v1764, %v1812
    %v1816 = vlaneseq
    %v1817 = vshrl.u32 %v1816, 7
    %v1818 = vsub.s32 0, %v1817
    %v1819 = vrot.slane %v1786, %v1818
    %v1820 = vlaneseq
    %v1821 = vshrl.u32 %v1820, 7
    %v1822 = vsub.s32 1, %v1821
    %v1823 = vrot.slane %v1786, %v1822
    %v1826 = vmul.f32 %v1798, %v1819
    %v1827 = vmul.f32 %v1799, %v1823
    %v1828 = vadd.f32 %v1778, %v1826
    %v1829 = vadd.f32 %v1779, %v1827
    %v1830 = vmul.f32 %v1579, %v408
    %s1831 = sld [smem:[#allocation9 + $0x21]]
    %v1832 = vstv %s1831
    %v1833 = vmul.f32 %v1830, %v1832
    %s1834 = sld [smem:[#allocation9 + $0x52]]
    %v1835 = vstv %s1834
    %v1836 = vmul.f32 %v1830, %v1835
    %1837 = vrot.lane.b32.xlu0 %v142, 110
    %v1838 = vpop.permute.xlu0 %1837
    %1839 = vrot.lane.b32.xlu0 %v143, 110
    %v1840 = vpop.permute.xlu0 %1839
    %vm1841 = vcmp.lt.s32.totalorder %v151, 110
    %v1842 = vsel %vm1841, %v1838, %v1840
    %v1843 = vsel %vm1841, %v1840, %v1838
    %1844 = vrot.lane.b32.xlu0 %v159, 110
    %v1845 = vpop.permute.xlu0 %1844
    %1846 = vrot.lane.b32.xlu0 %v160, 110
    %v1847 = vpop.permute.xlu0 %1846
    %v1848 = vsel %vm1841, %v1845, %v1847
    %v1849 = vsel %vm1841, %v1847, %v1845
    %v1851 = vlaneseq
    %v1852 = vshrl.u32 %v1851, 7
    %v1853 = vsub.s32 0, %v1852
    %v1854 = vrot.slane %v1833, %v1853
    %v1855 = vlaneseq
    %v1856 = vshrl.u32 %v1855, 7
    %v1857 = vsub.s32 1, %v1856
    %v1858 = vrot.slane %v1833, %v1857
    %v1861 = vmul.f32 %v1842, %v1854
    %v1862 = vmul.f32 %v1843, %v1858
    %v1863 = vadd.f32 %v1813, %v1861
    %v1864 = vadd.f32 %v1814, %v1862
    %v1866 = vlaneseq
    %v1867 = vshrl.u32 %v1866, 7
    %v1868 = vsub.s32 0, %v1867
    %v1869 = vrot.slane %v1836, %v1868
    %v1870 = vlaneseq
    %v1871 = vshrl.u32 %v1870, 7
    %v1872 = vsub.s32 1, %v1871
    %v1873 = vrot.slane %v1836, %v1872
    %v1876 = vmul.f32 %v1848, %v1869
    %v1877 = vmul.f32 %v1849, %v1873
    %v1878 = vadd.f32 %v1828, %v1876
    %v1879 = vadd.f32 %v1829, %v1877
    %v1880 = vmul.f32 %v1579, %v460
    %s1881 = sld [smem:[#allocation9 + $0x22]]
    %v1882 = vstv %s1881
    %v1883 = vmul.f32 %v1880, %v1882
    %s1884 = sld [smem:[#allocation9 + $0x53]]
    %v1885 = vstv %s1884
    %v1886 = vmul.f32 %v1880, %v1885
    %1887 = vrot.lane.b32.xlu0 %v142, 109
    %v1888 = vpop.permute.xlu0 %1887
    %1889 = vrot.lane.b32.xlu0 %v143, 109
    %v1890 = vpop.permute.xlu0 %1889
    %vm1891 = vcmp.lt.s32.totalorder %v151, 109
    %v1892 = vsel %vm1891, %v1888, %v1890
    %v1893 = vsel %vm1891, %v1890, %v1888
    %1894 = vrot.lane.b32.xlu0 %v159, 109
    %v1895 = vpop.permute.xlu0 %1894
    %1896 = vrot.lane.b32.xlu0 %v160, 109
    %v1897 = vpop.permute.xlu0 %1896
    %v1898 = vsel %vm1891, %v1895, %v1897
    %v1899 = vsel %vm1891, %v1897, %v1895
    %v1901 = vlaneseq
    %v1902 = vshrl.u32 %v1901, 7
    %v1903 = vsub.s32 0, %v1902
    %v1904 = vrot.slane %v1883, %v1903
    %v1905 = vlaneseq
    %v1906 = vshrl.u32 %v1905, 7
    %v1907 = vsub.s32 1, %v1906
    %v1908 = vrot.slane %v1883, %v1907
    %v1911 = vmul.f32 %v1892, %v1904
    %v1912 = vmul.f32 %v1893, %v1908
    %v1913 = vadd.f32 %v1863, %v1911
    %v1914 = vadd.f32 %v1864, %v1912
    %v1916 = vlaneseq
    %v1917 = vshrl.u32 %v1916, 7
    %v1918 = vsub.s32 0, %v1917
    %v1919 = vrot.slane %v1886, %v1918
    %v1920 = vlaneseq
    %v1921 = vshrl.u32 %v1920, 7
    %v1922 = vsub.s32 1, %v1921
    %v1923 = vrot.slane %v1886, %v1922
    %v1926 = vmul.f32 %v1898, %v1919
    %v1927 = vmul.f32 %v1899, %v1923
    %v1928 = vadd.f32 %v1878, %v1926
    %v1929 = vadd.f32 %v1879, %v1927
    %s1930 = scalar_lea.vmem [#allocation7], 5
    %v1931 = vld [vmem:[%s1930] ss:$8 sm:$0x3]
    %v1932 = vmul.f32 %v1931, %v129
    %s1933 = sld [smem:[#allocation9 + $0x23]]
    %v1934 = vstv %s1933
    %v1935 = vmul.f32 %v1932, %v1934
    %s1936 = sld [smem:[#allocation9 + $0x54]]
    %v1937 = vstv %s1936
    %v1938 = vmul.f32 %v1932, %v1937
    %1939 = vrot.lane.b32.xlu0 %v142, 99
    %v1940 = vpop.permute.xlu0 %1939
    %1941 = vrot.lane.b32.xlu0 %v143, 99
    %v1942 = vpop.permute.xlu0 %1941
    %vm1943 = vcmp.lt.s32.totalorder %v151, 99
    %v1944 = vsel %vm1943, %v1940, %v1942
    %v1945 = vsel %vm1943, %v1942, %v1940
    %1946 = vrot.lane.b32.xlu0 %v159, 99
    %v1947 = vpop.permute.xlu0 %1946
    %1948 = vrot.lane.b32.xlu0 %v160, 99
    %v1949 = vpop.permute.xlu0 %1948
    %v1950 = vsel %vm1943, %v1947, %v1949
    %v1951 = vsel %vm1943, %v1949, %v1947
    %v1953 = vlaneseq
    %v1954 = vshrl.u32 %v1953, 7
    %v1955 = vsub.s32 0, %v1954
    %v1956 = vrot.slane %v1935, %v1955
    %v1957 = vlaneseq
    %v1958 = vshrl.u32 %v1957, 7
    %v1959 = vsub.s32 1, %v1958
    %v1960 = vrot.slane %v1935, %v1959
    %v1963 = vmul.f32 %v1944, %v1956
    %v1964 = vmul.f32 %v1945, %v1960
    %v1965 = vadd.f32 %v1913, %v1963
    %v1966 = vadd.f32 %v1914, %v1964
    %v1968 = vlaneseq
    %v1969 = vshrl.u32 %v1968, 7
    %v1970 = vsub.s32 0, %v1969
    %v1971 = vrot.slane %v1938, %v1970
    %v1972 = vlaneseq
    %v1973 = vshrl.u32 %v1972, 7
    %v1974 = vsub.s32 1, %v1973
    %v1975 = vrot.slane %v1938, %v1974
    %v1978 = vmul.f32 %v1950, %v1971
    %v1979 = vmul.f32 %v1951, %v1975
    %v1980 = vadd.f32 %v1928, %v1978
    %v1981 = vadd.f32 %v1929, %v1979
    %v1982 = vmul.f32 %v1931, %v200
    %s1983 = sld [smem:[#allocation9 + $0x24]]
    %v1984 = vstv %s1983
    %v1985 = vmul.f32 %v1982, %v1984
    %s1986 = sld [smem:[#allocation9 + $0x55]]
    %v1987 = vstv %s1986
    %v1988 = vmul.f32 %v1982, %v1987
    %1989 = vrot.lane.b32.xlu0 %v142, 98
    %v1990 = vpop.permute.xlu0 %1989
    %1991 = vrot.lane.b32.xlu0 %v143, 98
    %v1992 = vpop.permute.xlu0 %1991
    %vm1993 = vcmp.lt.s32.totalorder %v151, 98
    %v1994 = vsel %vm1993, %v1990, %v1992
    %v1995 = vsel %vm1993, %v1992, %v1990
    %1996 = vrot.lane.b32.xlu0 %v159, 98
    %v1997 = vpop.permute.xlu0 %1996
    %1998 = vrot.lane.b32.xlu0 %v160, 98
    %v1999 = vpop.permute.xlu0 %1998
    %v2000 = vsel %vm1993, %v1997, %v1999
    %v2001 = vsel %vm1993, %v1999, %v1997
    %v2003 = vlaneseq
    %v2004 = vshrl.u32 %v2003, 7
    %v2005 = vsub.s32 0, %v2004
    %v2006 = vrot.slane %v1985, %v2005
    %v2007 = vlaneseq
    %v2008 = vshrl.u32 %v2007, 7
    %v2009 = vsub.s32 1, %v2008
    %v2010 = vrot.slane %v1985, %v2009
    %v2013 = vmul.f32 %v1994, %v2006
    %v2014 = vmul.f32 %v1995, %v2010
    %v2015 = vadd.f32 %v1965, %v2013
    %v2016 = vadd.f32 %v1966, %v2014
    %v2018 = vlaneseq
    %v2019 = vshrl.u32 %v2018, 7
    %v2020 = vsub.s32 0, %v2019
    %v2021 = vrot.slane %v1988, %v2020
    %v2022 = vlaneseq
    %v2023 = vshrl.u32 %v2022, 7
    %v2024 = vsub.s32 1, %v2023
    %v2025 = vrot.slane %v1988, %v2024
    %v2028 = vmul.f32 %v2000, %v2021
    %v2029 = vmul.f32 %v2001, %v2025
    %v2030 = vadd.f32 %v1980, %v2028
    %v2031 = vadd.f32 %v1981, %v2029
    %v2032 = vmul.f32 %v1931, %v252
    %s2033 = sld [smem:[#allocation9 + $0x25]]
    %v2034 = vstv %s2033
    %v2035 = vmul.f32 %v2032, %v2034
    %s2036 = sld [smem:[#allocation9 + $0x56]]
    %v2037 = vstv %s2036
    %v2038 = vmul.f32 %v2032, %v2037
    %2039 = vrot.lane.b32.xlu0 %v142, 97
    %v2040 = vpop.permute.xlu0 %2039
    %2041 = vrot.lane.b32.xlu0 %v143, 97
    %v2042 = vpop.permute.xlu0 %2041
    %vm2043 = vcmp.lt.s32.totalorder %v151, 97
    %v2044 = vsel %vm2043, %v2040, %v2042
    %v2045 = vsel %vm2043, %v2042, %v2040
    %2046 = vrot.lane.b32.xlu0 %v159, 97
    %v2047 = vpop.permute.xlu0 %2046
    %2048 = vrot.lane.b32.xlu0 %v160, 97
    %v2049 = vpop.permute.xlu0 %2048
    %v2050 = vsel %vm2043, %v2047, %v2049
    %v2051 = vsel %vm2043, %v2049, %v2047
    %v2053 = vlaneseq
    %v2054 = vshrl.u32 %v2053, 7
    %v2055 = vsub.s32 0, %v2054
    %v2056 = vrot.slane %v2035, %v2055
    %v2057 = vlaneseq
    %v2058 = vshrl.u32 %v2057, 7
    %v2059 = vsub.s32 1, %v2058
    %v2060 = vrot.slane %v2035, %v2059
    %v2063 = vmul.f32 %v2044, %v2056
    %v2064 = vmul.f32 %v2045, %v2060
    %v2065 = vadd.f32 %v2015, %v2063
    %v2066 = vadd.f32 %v2016, %v2064
    %v2068 = vlaneseq
    %v2069 = vshrl.u32 %v2068, 7
    %v2070 = vsub.s32 0, %v2069
    %v2071 = vrot.slane %v2038, %v2070
    %v2072 = vlaneseq
    %v2073 = vshrl.u32 %v2072, 7
    %v2074 = vsub.s32 1, %v2073
    %v2075 = vrot.slane %v2038, %v2074
    %v2078 = vmul.f32 %v2050, %v2071
    %v2079 = vmul.f32 %v2051, %v2075
    %v2080 = vadd.f32 %v2030, %v2078
    %v2081 = vadd.f32 %v2031, %v2079
    %v2082 = vmul.f32 %v1931, %v304
    %s2083 = sld [smem:[#allocation9 + $0x26]]
    %v2084 = vstv %s2083
    %v2085 = vmul.f32 %v2082, %v2084
    %s2086 = sld [smem:[#allocation9 + $0x57]]
    %v2087 = vstv %s2086
    %v2088 = vmul.f32 %v2082, %v2087
    %2089 = vrot.lane.b32.xlu0 %v142, 96
    %v2090 = vpop.permute.xlu0 %2089
    %2091 = vrot.lane.b32.xlu0 %v143, 96
    %v2092 = vpop.permute.xlu0 %2091
    %vm2093 = vcmp.lt.s32.totalorder %v151, 96
    %v2094 = vsel %vm2093, %v2090, %v2092
    %v2095 = vsel %vm2093, %v2092, %v2090
    %2096 = vrot.lane.b32.xlu0 %v159, 96
    %v2097 = vpop.permute.xlu0 %2096
    %2098 = vrot.lane.b32.xlu0 %v160, 96
    %v2099 = vpop.permute.xlu0 %2098
    %v2100 = vsel %vm2093, %v2097, %v2099
    %v2101 = vsel %vm2093, %v2099, %v2097
    %v2103 = vlaneseq
    %v2104 = vshrl.u32 %v2103, 7
    %v2105 = vsub.s32 0, %v2104
    %v2106 = vrot.slane %v2085, %v2105
    %v2107 = vlaneseq
    %v2108 = vshrl.u32 %v2107, 7
    %v2109 = vsub.s32 1, %v2108
    %v2110 = vrot.slane %v2085, %v2109
    %v2113 = vmul.f32 %v2094, %v2106
    %v2114 = vmul.f32 %v2095, %v2110
    %v2115 = vadd.f32 %v2065, %v2113
    %v2116 = vadd.f32 %v2066, %v2114
    %v2118 = vlaneseq
    %v2119 = vshrl.u32 %v2118, 7
    %v2120 = vsub.s32 0, %v2119
    %v2121 = vrot.slane %v2088, %v2120
    %v2122 = vlaneseq
    %v2123 = vshrl.u32 %v2122, 7
    %v2124 = vsub.s32 1, %v2123
    %v2125 = vrot.slane %v2088, %v2124
    %v2128 = vmul.f32 %v2100, %v2121
    %v2129 = vmul.f32 %v2101, %v2125
    %v2130 = vadd.f32 %v2080, %v2128
    %v2131 = vadd.f32 %v2081, %v2129
    %v2132 = vmul.f32 %v1931, %v356
    %s2133 = sld [smem:[#allocation9 + $0x27]]
    %v2134 = vstv %s2133
    %v2135 = vmul.f32 %v2132, %v2134
    %s2136 = sld [smem:[#allocation9 + $0x58]]
    %v2137 = vstv %s2136
    %v2138 = vmul.f32 %v2132, %v2137
    %2139 = vrot.lane.b32.xlu0 %v142, 95
    %v2140 = vpop.permute.xlu0 %2139
    %2141 = vrot.lane.b32.xlu0 %v143, 95
    %v2142 = vpop.permute.xlu0 %2141
    %vm2143 = vcmp.lt.s32.totalorder %v151, 95
    %v2144 = vsel %vm2143, %v2140, %v2142
    %v2145 = vsel %vm2143, %v2142, %v2140
    %2146 = vrot.lane.b32.xlu0 %v159, 95
    %v2147 = vpop.permute.xlu0 %2146
    %2148 = vrot.lane.b32.xlu0 %v160, 95
    %v2149 = vpop.permute.xlu0 %2148
    %v2150 = vsel %vm2143, %v2147, %v2149
    %v2151 = vsel %vm2143, %v2149, %v2147
    %v2153 = vlaneseq
    %v2154 = vshrl.u32 %v2153, 7
    %v2155 = vsub.s32 0, %v2154
    %v2156 = vrot.slane %v2135, %v2155
    %v2157 = vlaneseq
    %v2158 = vshrl.u32 %v2157, 7
    %v2159 = vsub.s32 1, %v2158
    %v2160 = vrot.slane %v2135, %v2159
    %v2163 = vmul.f32 %v2144, %v2156
    %v2164 = vmul.f32 %v2145, %v2160
    %v2165 = vadd.f32 %v2115, %v2163
    %v2166 = vadd.f32 %v2116, %v2164
    %v2168 = vlaneseq
    %v2169 = vshrl.u32 %v2168, 7
    %v2170 = vsub.s32 0, %v2169
    %v2171 = vrot.slane %v2138, %v2170
    %v2172 = vlaneseq
    %v2173 = vshrl.u32 %v2172, 7
    %v2174 = vsub.s32 1, %v2173
    %v2175 = vrot.slane %v2138, %v2174
    %v2178 = vmul.f32 %v2150, %v2171
    %v2179 = vmul.f32 %v2151, %v2175
    %v2180 = vadd.f32 %v2130, %v2178
    %v2181 = vadd.f32 %v2131, %v2179
    %v2182 = vmul.f32 %v1931, %v408
    %s2183 = sld [smem:[#allocation9 + $0x28]]
    %v2184 = vstv %s2183
    %v2185 = vmul.f32 %v2182, %v2184
    %s2186 = sld [smem:[#allocation9 + $0x59]]
    %v2187 = vstv %s2186
    %v2188 = vmul.f32 %v2182, %v2187
    %2189 = vrot.lane.b32.xlu0 %v142, 94
    %v2190 = vpop.permute.xlu0 %2189
    %2191 = vrot.lane.b32.xlu0 %v143, 94
    %v2192 = vpop.permute.xlu0 %2191
    %vm2193 = vcmp.lt.s32.totalorder %v151, 94
    %v2194 = vsel %vm2193, %v2190, %v2192
    %v2195 = vsel %vm2193, %v2192, %v2190
    %2196 = vrot.lane.b32.xlu0 %v159, 94
    %v2197 = vpop.permute.xlu0 %2196
    %2198 = vrot.lane.b32.xlu0 %v160, 94
    %v2199 = vpop.permute.xlu0 %2198
    %v2200 = vsel %vm2193, %v2197, %v2199
    %v2201 = vsel %vm2193, %v2199, %v2197
    %v2203 = vlaneseq
    %v2204 = vshrl.u32 %v2203, 7
    %v2205 = vsub.s32 0, %v2204
    %v2206 = vrot.slane %v2185, %v2205
    %v2207 = vlaneseq
    %v2208 = vshrl.u32 %v2207, 7
    %v2209 = vsub.s32 1, %v2208
    %v2210 = vrot.slane %v2185, %v2209
    %v2213 = vmul.f32 %v2194, %v2206
    %v2214 = vmul.f32 %v2195, %v2210
    %v2215 = vadd.f32 %v2165, %v2213
    %v2216 = vadd.f32 %v2166, %v2214
    %v2218 = vlaneseq
    %v2219 = vshrl.u32 %v2218, 7
    %v2220 = vsub.s32 0, %v2219
    %v2221 = vrot.slane %v2188, %v2220
    %v2222 = vlaneseq
    %v2223 = vshrl.u32 %v2222, 7
    %v2224 = vsub.s32 1, %v2223
    %v2225 = vrot.slane %v2188, %v2224
    %v2228 = vmul.f32 %v2200, %v2221
    %v2229 = vmul.f32 %v2201, %v2225
    %v2230 = vadd.f32 %v2180, %v2228
    %v2231 = vadd.f32 %v2181, %v2229
    %v2232 = vmul.f32 %v1931, %v460
    %s2233 = sld [smem:[#allocation9 + $0x29]]
    %v2234 = vstv %s2233
    %v2235 = vmul.f32 %v2232, %v2234
    %s2236 = sld [smem:[#allocation9 + $0x5a]]
    %v2237 = vstv %s2236
    %v2238 = vmul.f32 %v2232, %v2237
    %2239 = vrot.lane.b32.xlu0 %v142, 93
    %v2240 = vpop.permute.xlu0 %2239
    %2241 = vrot.lane.b32.xlu0 %v143, 93
    %v2242 = vpop.permute.xlu0 %2241
    %vm2243 = vcmp.lt.s32.totalorder %v151, 93
    %v2244 = vsel %vm2243, %v2240, %v2242
    %v2245 = vsel %vm2243, %v2242, %v2240
    %2246 = vrot.lane.b32.xlu0 %v159, 93
    %v2247 = vpop.permute.xlu0 %2246
    %2248 = vrot.lane.b32.xlu0 %v160, 93
    %v2249 = vpop.permute.xlu0 %2248
    %v2250 = vsel %vm2243, %v2247, %v2249
    %v2251 = vsel %vm2243, %v2249, %v2247
    %v2253 = vlaneseq
    %v2254 = vshrl.u32 %v2253, 7
    %v2255 = vsub.s32 0, %v2254
    %v2256 = vrot.slane %v2235, %v2255
    %v2257 = vlaneseq
    %v2258 = vshrl.u32 %v2257, 7
    %v2259 = vsub.s32 1, %v2258
    %v2260 = vrot.slane %v2235, %v2259
    %v2263 = vmul.f32 %v2244, %v2256
    %v2264 = vmul.f32 %v2245, %v2260
    %v2265 = vadd.f32 %v2215, %v2263
    %v2266 = vadd.f32 %v2216, %v2264
    %v2268 = vlaneseq
    %v2269 = vshrl.u32 %v2268, 7
    %v2270 = vsub.s32 0, %v2269
    %v2271 = vrot.slane %v2238, %v2270
    %v2272 = vlaneseq
    %v2273 = vshrl.u32 %v2272, 7
    %v2274 = vsub.s32 1, %v2273
    %v2275 = vrot.slane %v2238, %v2274
    %v2278 = vmul.f32 %v2250, %v2271
    %v2279 = vmul.f32 %v2251, %v2275
    %v2280 = vadd.f32 %v2230, %v2278
    %v2281 = vadd.f32 %v2231, %v2279
    %s2282 = scalar_lea.vmem [#allocation7], 6
    %v2283 = vld [vmem:[%s2282] ss:$8 sm:$0x3]
    %v2284 = vmul.f32 %v2283, %v129
    %s2285 = sld [smem:[#allocation9 + $0x2a]]
    %v2286 = vstv %s2285
    %v2287 = vmul.f32 %v2284, %v2286
    %s2288 = sld [smem:[#allocation9 + $0x5b]]
    %v2289 = vstv %s2288
    %v2290 = vmul.f32 %v2284, %v2289
    %2291 = vrot.lane.b32.xlu0 %v142, 83
    %v2292 = vpop.permute.xlu0 %2291
    %2293 = vrot.lane.b32.xlu0 %v143, 83
    %v2294 = vpop.permute.xlu0 %2293
    %vm2295 = vcmp.lt.s32.totalorder %v151, 83
    %v2296 = vsel %vm2295, %v2292, %v2294
    %v2297 = vsel %vm2295, %v2294, %v2292
    %2298 = vrot.lane.b32.xlu0 %v159, 83
    %v2299 = vpop.permute.xlu0 %2298
    %2300 = vrot.lane.b32.xlu0 %v160, 83
    %v2301 = vpop.permute.xlu0 %2300
    %v2302 = vsel %vm2295, %v2299, %v2301
    %v2303 = vsel %vm2295, %v2301, %v2299
    %v2305 = vlaneseq
    %v2306 = vshrl.u32 %v2305, 7
    %v2307 = vsub.s32 0, %v2306
    %v2308 = vrot.slane %v2287, %v2307
    %v2309 = vlaneseq
    %v2310 = vshrl.u32 %v2309, 7
    %v2311 = vsub.s32 1, %v2310
    %v2312 = vrot.slane %v2287, %v2311
    %v2315 = vmul.f32 %v2296, %v2308
    %v2316 = vmul.f32 %v2297, %v2312
    %v2317 = vadd.f32 %v2265, %v2315
    %v2318 = vadd.f32 %v2266, %v2316
    %v2320 = vlaneseq
    %v2321 = vshrl.u32 %v2320, 7
    %v2322 = vsub.s32 0, %v2321
    %v2323 = vrot.slane %v2290, %v2322
    %v2324 = vlaneseq
    %v2325 = vshrl.u32 %v2324, 7
    %v2326 = vsub.s32 1, %v2325
    %v2327 = vrot.slane %v2290, %v2326
    %v2330 = vmul.f32 %v2302, %v2323
    %v2331 = vmul.f32 %v2303, %v2327
    %v2332 = vadd.f32 %v2280, %v2330
    %v2333 = vadd.f32 %v2281, %v2331
    %v2334 = vmul.f32 %v2283, %v200
    %s2335 = sld [smem:[#allocation9 + $0x2b]]
    %v2336 = vstv %s2335
    %v2337 = vmul.f32 %v2334, %v2336
    %s2338 = sld [smem:[#allocation9 + $0x5c]]
    %v2339 = vstv %s2338
    %v2340 = vmul.f32 %v2334, %v2339
    %2341 = vrot.lane.b32.xlu0 %v142, 82
    %v2342 = vpop.permute.xlu0 %2341
    %2343 = vrot.lane.b32.xlu0 %v143, 82
    %v2344 = vpop.permute.xlu0 %2343
    %vm2345 = vcmp.lt.s32.totalorder %v151, 82
    %v2346 = vsel %vm2345, %v2342, %v2344
    %v2347 = vsel %vm2345, %v2344, %v2342
    %2348 = vrot.lane.b32.xlu0 %v159, 82
    %v2349 = vpop.permute.xlu0 %2348
    %2350 = vrot.lane.b32.xlu0 %v160, 82
    %v2351 = vpop.permute.xlu0 %2350
    %v2352 = vsel %vm2345, %v2349, %v2351
    %v2353 = vsel %vm2345, %v2351, %v2349
    %v2355 = vlaneseq
    %v2356 = vshrl.u32 %v2355, 7
    %v2357 = vsub.s32 0, %v2356
    %v2358 = vrot.slane %v2337, %v2357
    %v2359 = vlaneseq
    %v2360 = vshrl.u32 %v2359, 7
    %v2361 = vsub.s32 1, %v2360
    %v2362 = vrot.slane %v2337, %v2361
    %v2365 = vmul.f32 %v2346, %v2358
    %v2366 = vmul.f32 %v2347, %v2362
    %v2367 = vadd.f32 %v2317, %v2365
    %v2368 = vadd.f32 %v2318, %v2366
    %v2370 = vlaneseq
    %v2371 = vshrl.u32 %v2370, 7
    %v2372 = vsub.s32 0, %v2371
    %v2373 = vrot.slane %v2340, %v2372
    %v2374 = vlaneseq
    %v2375 = vshrl.u32 %v2374, 7
    %v2376 = vsub.s32 1, %v2375
    %v2377 = vrot.slane %v2340, %v2376
    %v2380 = vmul.f32 %v2352, %v2373
    %v2381 = vmul.f32 %v2353, %v2377
    %v2382 = vadd.f32 %v2332, %v2380
    %v2383 = vadd.f32 %v2333, %v2381
    %v2384 = vmul.f32 %v2283, %v252
    %s2385 = sld [smem:[#allocation9 + $0x2c]]
    %v2386 = vstv %s2385
    %v2387 = vmul.f32 %v2384, %v2386
    %s2388 = sld [smem:[#allocation9 + $0x5d]]
    %v2389 = vstv %s2388
    %v2390 = vmul.f32 %v2384, %v2389
    %2391 = vrot.lane.b32.xlu0 %v142, 81
    %v2392 = vpop.permute.xlu0 %2391
    %2393 = vrot.lane.b32.xlu0 %v143, 81
    %v2394 = vpop.permute.xlu0 %2393
    %vm2395 = vcmp.lt.s32.totalorder %v151, 81
    %v2396 = vsel %vm2395, %v2392, %v2394
    %v2397 = vsel %vm2395, %v2394, %v2392
    %2398 = vrot.lane.b32.xlu0 %v159, 81
    %v2399 = vpop.permute.xlu0 %2398
    %2400 = vrot.lane.b32.xlu0 %v160, 81
    %v2401 = vpop.permute.xlu0 %2400
    %v2402 = vsel %vm2395, %v2399, %v2401
    %v2403 = vsel %vm2395, %v2401, %v2399
    %v2405 = vlaneseq
    %v2406 = vshrl.u32 %v2405, 7
    %v2407 = vsub.s32 0, %v2406
    %v2408 = vrot.slane %v2387, %v2407
    %v2409 = vlaneseq
    %v2410 = vshrl.u32 %v2409, 7
    %v2411 = vsub.s32 1, %v2410
    %v2412 = vrot.slane %v2387, %v2411
    %v2415 = vmul.f32 %v2396, %v2408
    %v2416 = vmul.f32 %v2397, %v2412
    %v2417 = vadd.f32 %v2367, %v2415
    %v2418 = vadd.f32 %v2368, %v2416
    %v2420 = vlaneseq
    %v2421 = vshrl.u32 %v2420, 7
    %v2422 = vsub.s32 0, %v2421
    %v2423 = vrot.slane %v2390, %v2422
    %v2424 = vlaneseq
    %v2425 = vshrl.u32 %v2424, 7
    %v2426 = vsub.s32 1, %v2425
    %v2427 = vrot.slane %v2390, %v2426
    %v2430 = vmul.f32 %v2402, %v2423
    %v2431 = vmul.f32 %v2403, %v2427
    %v2432 = vadd.f32 %v2382, %v2430
    %v2433 = vadd.f32 %v2383, %v2431
    %v2434 = vmul.f32 %v2283, %v304
    %s2435 = sld [smem:[#allocation9 + $0x2d]]
    %v2436 = vstv %s2435
    %v2437 = vmul.f32 %v2434, %v2436
    %s2438 = sld [smem:[#allocation9 + $0x5e]]
    %v2439 = vstv %s2438
    %v2440 = vmul.f32 %v2434, %v2439
    %2441 = vrot.lane.b32.xlu0 %v142, 80
    %v2442 = vpop.permute.xlu0 %2441
    %2443 = vrot.lane.b32.xlu0 %v143, 80
    %v2444 = vpop.permute.xlu0 %2443
    %vm2445 = vcmp.lt.s32.totalorder %v151, 80
    %v2446 = vsel %vm2445, %v2442, %v2444
    %v2447 = vsel %vm2445, %v2444, %v2442
    %2448 = vrot.lane.b32.xlu0 %v159, 80
    %v2449 = vpop.permute.xlu0 %2448
    %2450 = vrot.lane.b32.xlu0 %v160, 80
    %v2451 = vpop.permute.xlu0 %2450
    %v2452 = vsel %vm2445, %v2449, %v2451
    %v2453 = vsel %vm2445, %v2451, %v2449
    %v2455 = vlaneseq
    %v2456 = vshrl.u32 %v2455, 7
    %v2457 = vsub.s32 0, %v2456
    %v2458 = vrot.slane %v2437, %v2457
    %v2459 = vlaneseq
    %v2460 = vshrl.u32 %v2459, 7
    %v2461 = vsub.s32 1, %v2460
    %v2462 = vrot.slane %v2437, %v2461
    %v2465 = vmul.f32 %v2446, %v2458
    %v2466 = vmul.f32 %v2447, %v2462
    %v2467 = vadd.f32 %v2417, %v2465
    %v2468 = vadd.f32 %v2418, %v2466
    %v2470 = vlaneseq
    %v2471 = vshrl.u32 %v2470, 7
    %v2472 = vsub.s32 0, %v2471
    %v2473 = vrot.slane %v2440, %v2472
    %v2474 = vlaneseq
    %v2475 = vshrl.u32 %v2474, 7
    %v2476 = vsub.s32 1, %v2475
    %v2477 = vrot.slane %v2440, %v2476
    %v2480 = vmul.f32 %v2452, %v2473
    %v2481 = vmul.f32 %v2453, %v2477
    %v2482 = vadd.f32 %v2432, %v2480
    %v2483 = vadd.f32 %v2433, %v2481
    %v2484 = vmul.f32 %v2283, %v356
    %s2485 = sld [smem:[#allocation9 + $0x2e]]
    %v2486 = vstv %s2485
    %v2487 = vmul.f32 %v2484, %v2486
    %s2488 = sld [smem:[#allocation9 + $0x5f]]
    %v2489 = vstv %s2488
    %v2490 = vmul.f32 %v2484, %v2489
    %2491 = vrot.lane.b32.xlu0 %v142, 79
    %v2492 = vpop.permute.xlu0 %2491
    %2493 = vrot.lane.b32.xlu0 %v143, 79
    %v2494 = vpop.permute.xlu0 %2493
    %vm2495 = vcmp.lt.s32.totalorder %v151, 79
    %v2496 = vsel %vm2495, %v2492, %v2494
    %v2497 = vsel %vm2495, %v2494, %v2492
    %2498 = vrot.lane.b32.xlu0 %v159, 79
    %v2499 = vpop.permute.xlu0 %2498
    %2500 = vrot.lane.b32.xlu0 %v160, 79
    %v2501 = vpop.permute.xlu0 %2500
    %v2502 = vsel %vm2495, %v2499, %v2501
    %v2503 = vsel %vm2495, %v2501, %v2499
    %v2505 = vlaneseq
    %v2506 = vshrl.u32 %v2505, 7
    %v2507 = vsub.s32 0, %v2506
    %v2508 = vrot.slane %v2487, %v2507
    %v2509 = vlaneseq
    %v2510 = vshrl.u32 %v2509, 7
    %v2511 = vsub.s32 1, %v2510
    %v2512 = vrot.slane %v2487, %v2511
    %v2515 = vmul.f32 %v2496, %v2508
    %v2516 = vmul.f32 %v2497, %v2512
    %v2517 = vadd.f32 %v2467, %v2515
    %v2518 = vadd.f32 %v2468, %v2516
    %v2520 = vlaneseq
    %v2521 = vshrl.u32 %v2520, 7
    %v2522 = vsub.s32 0, %v2521
    %v2523 = vrot.slane %v2490, %v2522
    %v2524 = vlaneseq
    %v2525 = vshrl.u32 %v2524, 7
    %v2526 = vsub.s32 1, %v2525
    %v2527 = vrot.slane %v2490, %v2526
    %v2530 = vmul.f32 %v2502, %v2523
    %v2531 = vmul.f32 %v2503, %v2527
    %v2532 = vadd.f32 %v2482, %v2530
    %v2533 = vadd.f32 %v2483, %v2531
    %v2534 = vmul.f32 %v2283, %v408
    %s2535 = sld [smem:[#allocation9 + $0x2f]]
    %v2536 = vstv %s2535
    %v2537 = vmul.f32 %v2534, %v2536
    %s2538 = sld [smem:[#allocation9 + $0x60]]
    %v2539 = vstv %s2538
    %v2540 = vmul.f32 %v2534, %v2539
    %2541 = vrot.lane.b32.xlu0 %v142, 78
    %v2542 = vpop.permute.xlu0 %2541
    %2543 = vrot.lane.b32.xlu0 %v143, 78
    %v2544 = vpop.permute.xlu0 %2543
    %vm2545 = vcmp.lt.s32.totalorder %v151, 78
    %v2546 = vsel %vm2545, %v2542, %v2544
    %v2547 = vsel %vm2545, %v2544, %v2542
    %2548 = vrot.lane.b32.xlu0 %v159, 78
    %v2549 = vpop.permute.xlu0 %2548
    %2550 = vrot.lane.b32.xlu0 %v160, 78
    %v2551 = vpop.permute.xlu0 %2550
    %v2552 = vsel %vm2545, %v2549, %v2551
    %v2553 = vsel %vm2545, %v2551, %v2549
    %v2555 = vlaneseq
    %v2556 = vshrl.u32 %v2555, 7
    %v2557 = vsub.s32 0, %v2556
    %v2558 = vrot.slane %v2537, %v2557
    %v2559 = vlaneseq
    %v2560 = vshrl.u32 %v2559, 7
    %v2561 = vsub.s32 1, %v2560
    %v2562 = vrot.slane %v2537, %v2561
    %v2565 = vmul.f32 %v2546, %v2558
    %v2566 = vmul.f32 %v2547, %v2562
    %v2567 = vadd.f32 %v2517, %v2565
    %v2568 = vadd.f32 %v2518, %v2566
    %v2570 = vlaneseq
    %v2571 = vshrl.u32 %v2570, 7
    %v2572 = vsub.s32 0, %v2571
    %v2573 = vrot.slane %v2540, %v2572
    %v2574 = vlaneseq
    %v2575 = vshrl.u32 %v2574, 7
    %v2576 = vsub.s32 1, %v2575
    %v2577 = vrot.slane %v2540, %v2576
    %v2580 = vmul.f32 %v2552, %v2573
    %v2581 = vmul.f32 %v2553, %v2577
    %v2582 = vadd.f32 %v2532, %v2580
    %v2583 = vadd.f32 %v2533, %v2581
    %v2584 = vmul.f32 %v2283, %v460
    %s2585 = sld [smem:[#allocation9 + $0x30]]
    %v2586 = vstv %s2585
    %v2587 = vmul.f32 %v2584, %v2586
    %s2588 = sld [smem:[#allocation9 + $0x61]]
    %v2589 = vstv %s2588
    %v2590 = vmul.f32 %v2584, %v2589
    %2591 = vrot.lane.b32.xlu0 %v142, 77
    %v2592 = vpop.permute.xlu0 %2591
    %2593 = vrot.lane.b32.xlu0 %v143, 77
    %v2594 = vpop.permute.xlu0 %2593
    %vm2595 = vcmp.lt.s32.totalorder %v151, 77
    %v2596 = vsel %vm2595, %v2592, %v2594
    %v2597 = vsel %vm2595, %v2594, %v2592
    %2598 = vrot.lane.b32.xlu0 %v159, 77
    %v2599 = vpop.permute.xlu0 %2598
    %2600 = vrot.lane.b32.xlu0 %v160, 77
    %v2601 = vpop.permute.xlu0 %2600
    %v2602 = vsel %vm2595, %v2599, %v2601
    %v2603 = vsel %vm2595, %v2601, %v2599
    %v2605 = vlaneseq
    %v2606 = vshrl.u32 %v2605, 7
    %v2607 = vsub.s32 0, %v2606
    %v2608 = vrot.slane %v2587, %v2607
    %v2609 = vlaneseq
    %v2610 = vshrl.u32 %v2609, 7
    %v2611 = vsub.s32 1, %v2610
    %v2612 = vrot.slane %v2587, %v2611
    %v2615 = vmul.f32 %v2596, %v2608
    %v2616 = vmul.f32 %v2597, %v2612
    %v2617 = vadd.f32 %v2567, %v2615
    %v2618 = vadd.f32 %v2568, %v2616
    %v2620 = vlaneseq
    %v2621 = vshrl.u32 %v2620, 7
    %v2622 = vsub.s32 0, %v2621
    %v2623 = vrot.slane %v2590, %v2622
    %v2624 = vlaneseq
    %v2625 = vshrl.u32 %v2624, 7
    %v2626 = vsub.s32 1, %v2625
    %v2627 = vrot.slane %v2590, %v2626
    %v2630 = vmul.f32 %v2602, %v2623
    %v2631 = vmul.f32 %v2603, %v2627
    %v2632 = vadd.f32 %v2582, %v2630
    %v2633 = vadd.f32 %v2583, %v2631
    %v2634 = vadd.f32 %v2617, %v2632
    %v2635 = vadd.f32 %v2618, %v2633
    %s2636 = sld [smem:[#allocation2]]
    %v2637 = vstv %s2636
    %v2638 = vadd.f32 %v2634, %v2637
    %v2639 = vadd.f32 %v2635, %v2637
    %v2640 = vxor.u32 %v2638, 2147483648
    %v2641 = vxor.u32 %v2639, 2147483648
    %v2642 = vmul.f32 %v2640, 1.442695
    %v2643 = vpow.pop %v2642
    %v2644 = vmul.f32 %v2641, 1.442695
    %v2645 = vpow.pop %v2644
    %v2646 = vadd.f32 %v2643, 1.0
    %v2647 = vadd.f32 %v2645, 1.0
    %v2648 = vrcp.pop %v2646
    %v2649 = vmul.f32 1.0, %v2648
    %v2650 = vrcp.pop %v2647
    %v2651 = vmul.f32 1.0, %v2650
    %v2654 = vcombine.low %v2649, %v2651
    %v2656 = vunpack.c.l.s4 1983009808
    %v2657 = vunpack.c.0.s8 %v2656
    %v2658 = vlaneseq
    %v2659 = vshrl.u32 %v2658, 7
    %v2660 = vsub.s32 %v2657, %v2659
    %v2661 = vrot.slane %v2654, %v2660
    %2663 = vst [vmem:[#allocation10] sm:$0xf] %v2661
    // Predicated region
    $region30: #{tpu_custom_call.1} parent=1 // pred_check
      _
    $region31: #{tpu_custom_call.1} parent=1 // pred_check_branch
      %2665 = sbr.rel (0) target = $region33
    $region32: #{tpu_custom_call.1} parent=1 // pred_region
      %s2667 = ssub.s32 64, 64
      %2668 = vsyncadd [#allocation5], %s2667
      %s2670 = sshll.u32 [#allocation10], 4
      %s2671 = int_to_ptr.vmem [resolvable:$true] %s2670
      %2673 = dma.vmem_to_hbm [thread:$0]  %s2671, 64, %s4, [#allocation5]
    $region33: #{tpu_custom_call.1} parent=1 // pred_fallthru
      _
    // Predicated region
    $region34: #{tpu_custom_call.1} parent=1 // pred_check
      _
    $region35: #{tpu_custom_call.1} parent=1 // pred_check_branch
      %2675 = sbr.rel (0) target = $region37
    $region36: #{tpu_custom_call.1} parent=1 // pred_region
      %2676 = dma.done [#allocation5], 64
    $region37: #{tpu_custom_call.1} parent=1 // pred_fallthru
      _
    %2677 = vsyncpa [#allocation4], 1
    %2678 = vsyncpa [#allocation8], 1
    %2679 = vsyncpa [#allocation5], 1
    %2680 = vsyncpa [#allocation6], 1

</llo_original>
